<compile_context>
chip_gen: v6e
topology: v6e:2x2x1
jax: 0.10.0
libtpu: 0.0.40
codegen_flags: <defaults>
</compile_context>

<pallas_src>
import functools
import math

import jax
import jax.numpy as jnp
from jax.experimental import pallas as pl
from jax.experimental.pallas import tpu as pltpu

DOT_DTYPE = jnp.bfloat16   # MXU-native operand dtype (f32 accumulation everywhere)


# ---------------------------------------------------------------------------
# Kernel 1: fused encoder (bidirectional LSTM) + decoder (unidirectional LSTM)
# ---------------------------------------------------------------------------
def _recurrent_kernel(x_ref, wihf_ref, whhf_ref, bf_ref,
                      wihb_ref, whhb_ref, bb_ref,
                      wihd_ref, whhd_ref, bd_ref,
                      out_ref, xpf_sc, xpb_sc, encf_sc, encb_sc):
    # x_ref:    (S*Bp, E)   time-major input, batch padded to Bp, flattened 2-D
    # wih*_ref: (E|2H, 4H)  fused gate input weights (bf16)
    # whh*_ref: (H, 4H)     fused gate recurrent weights (bf16)
    # b*_ref:   (1, 4H)     fused gate bias (f32)
    # out_ref:  (S, Bp, H)  decoder hidden-state sequence (time-major)
    # xp*_sc:   (S*Bp, 4H)  hoisted encoder input projections
    # enc*_sc:  (S, Bp, H)  per-direction encoder outputs
    S, Bp, H = out_ref.shape

    # ---- hoisted encoder input projections: one large MXU matmul per direction
    xb = x_ref[...].astype(DOT_DTYPE)
    xpf_sc[...] = jnp.dot(xb, wihf_ref[...],
                          preferred_element_type=jnp.float32) + bf_ref[...]
    xpb_sc[...] = jnp.dot(xb, wihb_ref[...],
                          preferred_element_type=jnp.float32) + bb_ref[...]

    whh_f = whhf_ref[...]
    whh_b = whhb_ref[...]

    def lstm_cell(x_proj, h, c, whh):
        # x_proj already holds x @ W_ih + b; fused gate order: i, f, g, o.
        g = x_proj + jnp.dot(h.astype(DOT_DTYPE), whh,
                             preferred_element_type=jnp.float32)
        i = jax.nn.sigmoid(g[:, 0:H])
        f = jax.nn.sigmoid(g[:, H:2 * H])
        gg = jnp.tanh(g[:, 2 * H:3 * H])
        o = jax.nn.sigmoid(g[:, 3 * H:4 * H])
        c_new = f * c + i * gg
        h_new = o * jnp.tanh(c_new)
        return h_new, c_new

    zeros = jnp.zeros((Bp, H), jnp.float32)

    # ---- encoder recurrence: forward + backward direction in one unrolled loop
    def enc_step(t, carry):
        hf, cf, hb, cb = carry
        rf = pl.multiple_of(t * Bp, Bp)
        hf, cf = lstm_cell(xpf_sc[pl.ds(rf, Bp), :], hf, cf, whh_f)
        encf_sc[t] = hf
        tr = S - 1 - t
        rb = pl.multiple_of(tr * Bp, Bp)
        hb, cb = lstm_cell(xpb_sc[pl.ds(rb, Bp), :], hb, cb, whh_b)
        encb_sc[tr] = hb
        return hf, cf, hb, cb

    jax.lax.fori_loop(0, S, enc_step, (zeros, zeros, zeros, zeros), unroll=True)

    # ---- decoder recurrence; concat(fwd, bwd) never materialized:
    #      x @ W_ih = fwd @ W_ih[:H] + bwd @ W_ih[H:]
    wihd = wihd_ref[...]
    w_top = wihd[0:H, :]
    w_bot = wihd[H:2 * H, :]
    whh_d = whhd_ref[...]
    b_d = bd_ref[...]

    def dec_step(t, carry):
        hd, cd = carry
        xf = encf_sc[t].astype(DOT_DTYPE)
        xbk = encb_sc[t].astype(DOT_DTYPE)
        x_proj = (jnp.dot(xf, w_top, preferred_element_type=jnp.float32)
                  + jnp.dot(xbk, w_bot, preferred_element_type=jnp.float32)
                  + b_d)
        hd, cd = lstm_cell(x_proj, hd, cd, whh_d)
        out_ref[t] = hd
        return hd, cd

    jax.lax.fori_loop(0, S, dec_step, (zeros, zeros), unroll=True)


def recurrent_call(x2, params, S, Bp, H):
    return pl.pallas_call(
        _recurrent_kernel,
        out_shape=jax.ShapeDtypeStruct((S, Bp, H), jnp.float32),
        in_specs=[pl.BlockSpec(memory_space=pltpu.MemorySpace.VMEM)] * 10,
        out_specs=pl.BlockSpec(memory_space=pltpu.MemorySpace.VMEM),
        scratch_shapes=[
            pltpu.VMEM((S * Bp, 4 * H), jnp.float32),
            pltpu.VMEM((S * Bp, 4 * H), jnp.float32),
            pltpu.VMEM((S, Bp, H), jnp.float32),
            pltpu.VMEM((S, Bp, H), jnp.float32),
        ],
    )(x2,
      params["wih_f"], params["whh_f"], params["b_f"],
      params["wih_b"], params["whh_b"], params["b_b"],
      params["wih_d"], params["whh_d"], params["b_d"])


# ---------------------------------------------------------------------------
# Kernel 2: multi-head attention + projection + residual + LayerNormalization
# ---------------------------------------------------------------------------
def _attn_kernel(x_ref, wq_ref, wk_ref, wv_ref, pw_ref, pb_ref, g_ref, be_ref,
                 out_ref, *, n_heads, d_k, d_v):
    # x_ref: (S, D) one batch element; wq/wk: (D, nH*dk); wv: (D, nH*dv)
    # pw_ref: (nH*dv, D); pb/g/be: (1, D); out_ref: (S, D)
    S, D = x_ref.shape
    eps = 1e-3
    scale = 1.0 / math.sqrt(d_k)

    x = x_ref[...]
    xb = x.astype(DOT_DTYPE)
    # all heads' Q / K / V with one matmul each (heads stacked on the lane axis)
    q_all = jnp.dot(xb, wq_ref[...], preferred_element_type=jnp.float32)
    k_all = jnp.dot(xb, wk_ref[...], preferred_element_type=jnp.float32)
    v_all = jnp.dot(xb, wv_ref[...], preferred_element_type=jnp.float32)
    pw = pw_ref[...]

    proj = jnp.zeros((S, D), jnp.float32)
    for h in range(n_heads):
        q = q_all[:, h * d_k:(h + 1) * d_k].astype(DOT_DTYPE)
        k = k_all[:, h * d_k:(h + 1) * d_k].astype(DOT_DTYPE)
        v = v_all[:, h * d_v:(h + 1) * d_v].astype(DOT_DTYPE)
        logits = jax.lax.dot_general(q, k, (((1,), (1,)), ((), ())),
                                     preferred_element_type=jnp.float32) * scale
        m = jnp.max(logits, axis=-1, keepdims=True)
        e = jnp.exp(logits - m)
        p = e * pl.reciprocal(jnp.sum(e, axis=-1, keepdims=True), approx=True)
        head = jnp.dot(p.astype(DOT_DTYPE), v, preferred_element_type=jnp.float32)
        # accumulate straight into the output projection (no concat / relayout)
        proj = proj + jnp.dot(head.astype(DOT_DTYPE),
                              pw[h * d_v:(h + 1) * d_v, :],
                              preferred_element_type=jnp.float32)

    z = x + proj + pb_ref[...]                      # residual + projection bias
    # torch custom LayerNormalization: unbiased std, eps added to the std
    mean = jnp.mean(z, axis=-1, keepdims=True)
    var = jnp.sum((z - mean) ** 2, axis=-1, keepdims=True) * (1.0 / (D - 1))
    inv = pl.reciprocal(jnp.sqrt(var) + eps, approx=True)
    out_ref[...] = g_ref[...] * ((z - mean) * inv) + be_ref[...]


def attention_call(x, wq, wk, wv, pw, pb, gamma, beta, *, n_heads, d_k, d_v):
    B, S, D = x.shape
    kernel = functools.partial(_attn_kernel, n_heads=n_heads, d_k=d_k, d_v=d_v)
    const = lambda b: (0, 0)
    return pl.pallas_call(
        kernel,
        out_shape=jax.ShapeDtypeStruct((B, S, D), jnp.float32),
        grid=(B,),
        in_specs=[
            pl.BlockSpec((None, S, D), lambda b: (b, 0, 0)),
            pl.BlockSpec(wq.shape, const),
            pl.BlockSpec(wk.shape, const),
            pl.BlockSpec(wv.shape, const),
            pl.BlockSpec(pw.shape, const),
            pl.BlockSpec(pb.shape, const),
            pl.BlockSpec(gamma.shape, const),
            pl.BlockSpec(beta.shape, const),
        ],
        out_specs=pl.BlockSpec((None, S, D), lambda b: (b, 0, 0)),
        compiler_params=pltpu.CompilerParams(dimension_semantics=("parallel",)),
    )(x, wq, wk, wv, pw, pb, gamma, beta)


# ---------------------------------------------------------------------------
# Kernel 3: all LinearModel layers fused into one kernel (x @ W + b, chained)
# ---------------------------------------------------------------------------
def _mlp_kernel(*refs, n_layers):
    x_ref = refs[0]
    out_ref = refs[-1]
    h = x_ref[...]
    for i in range(n_layers):
        w = refs[1 + 2 * i][...]
        b = refs[2 + 2 * i][...]
        h = jnp.dot(h.astype(DOT_DTYPE), w, preferred_element_type=jnp.float32) + b
    out_ref[...] = h


def linear_model_call(x, layers):
    B = x.shape[0]
    out_dim = layers[-1][0].shape[1]
    flat = []
    for w, b in layers:
        flat.extend((w, b))
    kernel = functools.partial(_mlp_kernel, n_layers=len(layers))
    return pl.pallas_call(
        kernel,
        out_shape=jax.ShapeDtypeStruct((B, out_dim), jnp.float32),
        in_specs=[pl.BlockSpec(memory_space=pltpu.MemorySpace.VMEM)] * (1 + len(flat)),
        out_specs=pl.BlockSpec(memory_space=pltpu.MemorySpace.VMEM),
    )(x, *flat)


# ---------------------------------------------------------------------------
# Parameter construction (deterministic, shapes follow the PyTorch module;
# matmul weights stored in bf16, biases / norm params in f32).
# ---------------------------------------------------------------------------
def init_params(key, embedding_size, hidden_dim, num_output,
                key_dim=64, val_dim=64, num_heads=3):
    H = hidden_dim // 2          # LSTM hidden size per direction
    d_model = hidden_dim // 2    # attention model dim (decoder output size)
    keys = iter(jax.random.split(key, 64))

    def w(shape, scale=0.1, dtype=jnp.float32):
        return (scale * jax.random.normal(next(keys), shape, jnp.float32)).astype(dtype)

    p = {}
    # encoder bidirectional LSTM (rnn_layers=1), fused gates (order i, f, g, o)
    p["wih_f"] = w((embedding_size, 4 * H), dtype=DOT_DTYPE)
    p["whh_f"] = w((H, 4 * H), dtype=DOT_DTYPE)
    p["b_f"] = w((1, 4 * H))
    p["wih_b"] = w((embedding_size, 4 * H), dtype=DOT_DTYPE)
    p["whh_b"] = w((H, 4 * H), dtype=DOT_DTYPE)
    p["b_b"] = w((1, 4 * H))
    # decoder unidirectional LSTM (input = hidden_dim = 2H)
    p["wih_d"] = w((hidden_dim, 4 * H), dtype=DOT_DTYPE)
    p["whh_d"] = w((H, 4 * H), dtype=DOT_DTYPE)
    p["b_d"] = w((1, 4 * H))
    # multi-head attention, heads stacked along the output axis
    p["wq"] = w((d_model, num_heads * key_dim), dtype=DOT_DTYPE)
    p["wk"] = w((d_model, num_heads * key_dim), dtype=DOT_DTYPE)
    p["wv"] = w((d_model, num_heads * val_dim), dtype=DOT_DTYPE)
    p["proj_w"] = w((num_heads * val_dim, d_model), dtype=DOT_DTYPE)
    p["proj_b"] = w((1, d_model))
    p["gamma"] = jnp.ones((1, d_model), jnp.float32)
    p["beta"] = jnp.zeros((1, d_model), jnp.float32)
    p["attn_dims"] = (num_heads, key_dim, val_dim)
    # LinearModel: replicate the while-loop layer-size construction
    sizes = []
    in_sz = d_model * num_output
    tmp = in_sz // 16
    while True:
        if tmp <= num_output:
            sizes.append((in_sz, num_output))
            break
        sizes.append((in_sz, tmp))
        in_sz = tmp
        tmp = tmp // 16
    p["linear_layers"] = [(w((i, o), dtype=DOT_DTYPE), w((1, o))) for i, o in sizes]
    return p


# ---------------------------------------------------------------------------
# Full forward pass (mirrors LMRBiLSTMAttnCRF.forward; dropout = identity).
# ---------------------------------------------------------------------------
def lmr_bilstm_attn_crf_forward(batch, z, params):
    del z  # unused in the reference forward
    B, S, E = batch.shape
    H = params["whh_f"].shape[0]
    Bp = ((B + 7) // 8) * 8                      # pad batch to a sublane multiple

    # (B, S, E) -> time-major (S, Bp, E) -> 2-D (S*Bp, E)   [layout-only ops]
    x_tm = jnp.transpose(batch, (1, 0, 2))
    if Bp != B:
        x_tm = jnp.pad(x_tm, ((0, 0), (0, Bp - B), (0, 0)))
    x2 = x_tm.reshape(S * Bp, E)

    # fused encoder + decoder LSTMs -> (S, Bp, H) time-major
    dec_tm = recurrent_call(x2, params, S, Bp, H)
    dec_bf = jnp.transpose(dec_tm, (1, 0, 2))[:B]          # (B, S, H)

    # multi-head self-attention + projection + residual + layer norm
    n_heads, d_k, d_v = params["attn_dims"]
    attn_out = attention_call(dec_bf, params["wq"], params["wk"], params["wv"],
                              params["proj_w"], params["proj_b"],
                              params["gamma"], params["beta"],
                              n_heads=n_heads, d_k=d_k, d_v=d_v)

    # flatten (B, S, H) -> (B, S*H), then all LinearModel layers in one kernel
    flat = attn_out.reshape(B, S * H)
    return linear_model_call(flat, params["linear_layers"])


if __name__ == "__main__":
    B, S = 2, 8
    embedding_size = 32
    hidden_dim = 32
    num_output = S  # the reference reshape requires seq_len == num_output

    key = jax.random.PRNGKey(0)
    kp, kx, kz = jax.random.split(key, 3)
    params = init_params(kp, embedding_size, hidden_dim, num_output)

    batch = jax.random.normal(kx, (B, S, embedding_size), dtype=jnp.float32)
    z = jax.random.normal(kz, (B, S), dtype=jnp.float32)  # unused, mirrors signature

    fwd = jax.jit(lambda b_, z_: lmr_bilstm_attn_crf_forward(b_, z_, params))
    out = fwd(batch, z)
    jax.block_until_ready(out)
    assert out.shape == (B, num_output), out.shape
    print("KERNEL_OK")
</pallas_src>

<mosaic_0001>
module attributes {stable_mosaic.version = 11 : i64} {
  func.func @_recurrent_kernel(%arg0: memref<64x32xf32, #tpu.memory_space<vmem>>, %arg1: memref<32x64xbf16, #tpu.memory_space<vmem>>, %arg2: memref<16x64xbf16, #tpu.memory_space<vmem>>, %arg3: memref<1x64xf32, #tpu.memory_space<vmem>>, %arg4: memref<32x64xbf16, #tpu.memory_space<vmem>>, %arg5: memref<16x64xbf16, #tpu.memory_space<vmem>>, %arg6: memref<1x64xf32, #tpu.memory_space<vmem>>, %arg7: memref<32x64xbf16, #tpu.memory_space<vmem>>, %arg8: memref<16x64xbf16, #tpu.memory_space<vmem>>, %arg9: memref<1x64xf32, #tpu.memory_space<vmem>>, %arg10: memref<8x8x16xf32, #tpu.memory_space<vmem>>, %arg11: memref<64x64xf32, #tpu.memory_space<vmem>>, %arg12: memref<64x64xf32, #tpu.memory_space<vmem>>, %arg13: memref<8x8x16xf32, #tpu.memory_space<vmem>>, %arg14: memref<8x8x16xf32, #tpu.memory_space<vmem>>) attributes {dimension_semantics = [], scalar_prefetch = 0 : i64, scratch_operands = 4 : i64, tpu.core_type = #tpu.core_type<tc>} {
    %c0 = arith.constant 0 : index
    %c0_0 = arith.constant 0 : index
    %0 = vector.load %arg0[%c0, %c0_0] : memref<64x32xf32, #tpu.memory_space<vmem>>, vector<64x32xf32>
    %1 = arith.truncf %0 : vector<64x32xf32> to vector<64x32xbf16>
    %c0_1 = arith.constant 0 : index
    %c0_2 = arith.constant 0 : index
    %2 = vector.load %arg1[%c0_1, %c0_2] : memref<32x64xbf16, #tpu.memory_space<vmem>>, vector<32x64xbf16>
    %cst = arith.constant dense<0.000000e+00> : vector<64x64xf32>
    %3 = tpu.matmul %1, %2, %cst {dimension_numbers = #tpu.dot_dimension_numbers<[1], [0], [0], [1], [0, 0, 1, 1], [], []>} : vector<64x32xbf16>, vector<32x64xbf16>, vector<64x64xf32> -> vector<64x64xf32>
    %c0_3 = arith.constant 0 : index
    %c0_4 = arith.constant 0 : index
    %4 = vector.load %arg3[%c0_3, %c0_4] : memref<1x64xf32, #tpu.memory_space<vmem>>, vector<1x64xf32>
    %5 = vector.broadcast %4 : vector<1x64xf32> to vector<64x64xf32>
    %6 = arith.addf %3, %5 : vector<64x64xf32>
    %c0_5 = arith.constant 0 : index
    %c0_6 = arith.constant 0 : index
    %7 = vector.load %arg11[%c0_5, %c0_6] : memref<64x64xf32, #tpu.memory_space<vmem>>, vector<64x64xf32>
    tpu.vector_store %arg11[%c0_5, %c0_6], %6 {strides = array<i32>} : memref<64x64xf32, #tpu.memory_space<vmem>>, vector<64x64xf32>,
    %c0_7 = arith.constant 0 : index
    %c0_8 = arith.constant 0 : index
    %8 = vector.load %arg4[%c0_7, %c0_8] : memref<32x64xbf16, #tpu.memory_space<vmem>>, vector<32x64xbf16>
    %cst_9 = arith.constant dense<0.000000e+00> : vector<64x64xf32>
    %9 = tpu.matmul %1, %8, %cst_9 {dimension_numbers = #tpu.dot_dimension_numbers<[1], [0], [0], [1], [0, 0, 1, 1], [], []>} : vector<64x32xbf16>, vector<32x64xbf16>, vector<64x64xf32> -> vector<64x64xf32>
    %c0_10 = arith.constant 0 : index
    %c0_11 = arith.constant 0 : index
    %10 = vector.load %arg6[%c0_10, %c0_11] : memref<1x64xf32, #tpu.memory_space<vmem>>, vector<1x64xf32>
    %11 = vector.broadcast %10 : vector<1x64xf32> to vector<64x64xf32>
    %12 = arith.addf %9, %11 : vector<64x64xf32>
    %c0_12 = arith.constant 0 : index
    %c0_13 = arith.constant 0 : index
    %13 = vector.load %arg12[%c0_12, %c0_13] : memref<64x64xf32, #tpu.memory_space<vmem>>, vector<64x64xf32>
    tpu.vector_store %arg12[%c0_12, %c0_13], %12 {strides = array<i32>} : memref<64x64xf32, #tpu.memory_space<vmem>>, vector<64x64xf32>,
    %c0_14 = arith.constant 0 : index
    %c0_15 = arith.constant 0 : index
    %14 = vector.load %arg2[%c0_14, %c0_15] : memref<16x64xbf16, #tpu.memory_space<vmem>>, vector<16x64xbf16>
    %c0_16 = arith.constant 0 : index
    %c0_17 = arith.constant 0 : index
    %15 = vector.load %arg5[%c0_16, %c0_17] : memref<16x64xbf16, #tpu.memory_space<vmem>>, vector<16x64xbf16>
    %cst_18 = arith.constant 0.000000e+00 : f32
    %16 = vector.broadcast %cst_18 : f32 to vector<8x16xf32>
    %c0_i32 = arith.constant 0 : i32
    %c8_i32 = arith.constant 8 : i32
    %17 = arith.muli %c0_i32, %c8_i32 : i32
    %18 = tpu.assume_multiple %17, 8 : i32
    %19 = arith.index_cast %18 : i32 to index
    %c0_19 = arith.constant 0 : index
    %20 = vector.load %arg11[%19, %c0_19] : memref<64x64xf32, #tpu.memory_space<vmem>>, vector<8x64xf32>
    %21 = arith.truncf %16 : vector<8x16xf32> to vector<8x16xbf16>
    %cst_20 = arith.constant dense<0.000000e+00> : vector<8x64xf32>
    %22 = tpu.matmul %21, %14, %cst_20 {dimension_numbers = #tpu.dot_dimension_numbers<[1], [0], [0], [1], [0, 0, 1, 1], [], []>} : vector<8x16xbf16>, vector<16x64xbf16>, vector<8x64xf32> -> vector<8x64xf32>
    %23 = arith.addf %20, %22 : vector<8x64xf32>
    %24 = vector.extract_strided_slice %23 {offsets = [0, 0], sizes = [8, 16], strides = [1, 1]} : vector<8x64xf32> to vector<8x16xf32>
    %25 = arith.negf %24 : vector<8x16xf32>
    %26 = math.exp %25 : vector<8x16xf32>
    %cst_21 = arith.constant 1.000000e+00 : f32
    %27 = vector.broadcast %cst_21 : f32 to vector<8x16xf32>
    %28 = arith.addf %27, %26 : vector<8x16xf32>
    %29 = arith.divf %27, %28 : vector<8x16xf32>
    %30 = vector.extract_strided_slice %23 {offsets = [0, 16], sizes = [8, 16], strides = [1, 1]} : vector<8x64xf32> to vector<8x16xf32>
    %31 = arith.negf %30 : vector<8x16xf32>
    %32 = math.exp %31 : vector<8x16xf32>
    %cst_22 = arith.constant 1.000000e+00 : f32
    %33 = vector.broadcast %cst_22 : f32 to vector<8x16xf32>
    %34 = arith.addf %33, %32 : vector<8x16xf32>
    %35 = arith.divf %33, %34 : vector<8x16xf32>
    %36 = vector.extract_strided_slice %23 {offsets = [0, 32], sizes = [8, 16], strides = [1, 1]} : vector<8x64xf32> to vector<8x16xf32>
    %37 = math.tanh %36 : vector<8x16xf32>
    %38 = vector.extract_strided_slice %23 {offsets = [0, 48], sizes = [8, 16], strides = [1, 1]} : vector<8x64xf32> to vector<8x16xf32>
    %39 = arith.negf %38 : vector<8x16xf32>
    %40 = math.exp %39 : vector<8x16xf32>
    %cst_23 = arith.constant 1.000000e+00 : f32
    %41 = vector.broadcast %cst_23 : f32 to vector<8x16xf32>
    %42 = arith.addf %41, %40 : vector<8x16xf32>
    %43 = arith.divf %41, %42 : vector<8x16xf32>
    %44 = arith.mulf %35, %16 : vector<8x16xf32>
    %45 = arith.mulf %29, %37 : vector<8x16xf32>
    %46 = arith.addf %44, %45 : vector<8x16xf32>
    %47 = math.tanh %46 : vector<8x16xf32>
    %48 = arith.mulf %43, %47 : vector<8x16xf32>
    %49 = arith.index_cast %c0_i32 : i32 to index
    %c0_24 = arith.constant 0 : index
    %c0_25 = arith.constant 0 : index
    %50 = vector.load %arg13[%49, %c0_24, %c0_25] : memref<8x8x16xf32, #tpu.memory_space<vmem>>, vector<1x8x16xf32>
    %51 = vector.shape_cast %50 : vector<1x8x16xf32> to vector<8x16xf32>
    %52 = vector.shape_cast %48 : vector<8x16xf32> to vector<1x8x16xf32>
    tpu.vector_store %arg13[%49, %c0_24, %c0_25], %52 {strides = array<i32>} : memref<8x8x16xf32, #tpu.memory_space<vmem>>, vector<1x8x16xf32>,
    %c7_i32 = arith.constant 7 : i32
    %53 = arith.subi %c7_i32, %c0_i32 : i32
    %c8_i32_26 = arith.constant 8 : i32
    %54 = arith.muli %53, %c8_i32_26 : i32
    %55 = tpu.assume_multiple %54, 8 : i32
    %56 = arith.index_cast %55 : i32 to index
    %c0_27 = arith.constant 0 : index
    %57 = vector.load %arg12[%56, %c0_27] : memref<64x64xf32, #tpu.memory_space<vmem>>, vector<8x64xf32>
    %58 = arith.truncf %16 : vector<8x16xf32> to vector<8x16xbf16>
    %cst_28 = arith.constant dense<0.000000e+00> : vector<8x64xf32>
    %59 = tpu.matmul %58, %15, %cst_28 {dimension_numbers = #tpu.dot_dimension_numbers<[1], [0], [0], [1], [0, 0, 1, 1], [], []>} : vector<8x16xbf16>, vector<16x64xbf16>, vector<8x64xf32> -> vector<8x64xf32>
    %60 = arith.addf %57, %59 : vector<8x64xf32>
    %61 = vector.extract_strided_slice %60 {offsets = [0, 0], sizes = [8, 16], strides = [1, 1]} : vector<8x64xf32> to vector<8x16xf32>
    %62 = arith.negf %61 : vector<8x16xf32>
    %63 = math.exp %62 : vector<8x16xf32>
    %cst_29 = arith.constant 1.000000e+00 : f32
    %64 = vector.broadcast %cst_29 : f32 to vector<8x16xf32>
    %65 = arith.addf %64, %63 : vector<8x16xf32>
    %66 = arith.divf %64, %65 : vector<8x16xf32>
    %67 = vector.extract_strided_slice %60 {offsets = [0, 16], sizes = [8, 16], strides = [1, 1]} : vector<8x64xf32> to vector<8x16xf32>
    %68 = arith.negf %67 : vector<8x16xf32>
    %69 = math.exp %68 : vector<8x16xf32>
    %cst_30 = arith.constant 1.000000e+00 : f32
    %70 = vector.broadcast %cst_30 : f32 to vector<8x16xf32>
    %71 = arith.addf %70, %69 : vector<8x16xf32>
    %72 = arith.divf %70, %71 : vector<8x16xf32>
    %73 = vector.extract_strided_slice %60 {offsets = [0, 32], sizes = [8, 16], strides = [1, 1]} : vector<8x64xf32> to vector<8x16xf32>
    %74 = math.tanh %73 : vector<8x16xf32>
    %75 = vector.extract_strided_slice %60 {offsets = [0, 48], sizes = [8, 16], strides = [1, 1]} : vector<8x64xf32> to vector<8x16xf32>
    %76 = arith.negf %75 : vector<8x16xf32>
    %77 = math.exp %76 : vector<8x16xf32>
    %cst_31 = arith.constant 1.000000e+00 : f32
    %78 = vector.broadcast %cst_31 : f32 to vector<8x16xf32>
    %79 = arith.addf %78, %77 : vector<8x16xf32>
    %80 = arith.divf %78, %79 : vector<8x16xf32>
    %81 = arith.mulf %72, %16 : vector<8x16xf32>
    %82 = arith.mulf %66, %74 : vector<8x16xf32>
    %83 = arith.addf %81, %82 : vector<8x16xf32>
    %84 = math.tanh %83 : vector<8x16xf32>
    %85 = arith.mulf %80, %84 : vector<8x16xf32>
    %86 = arith.index_cast %53 : i32 to index
    %c0_32 = arith.constant 0 : index
    %c0_33 = arith.constant 0 : index
    %87 = vector.load %arg14[%86, %c0_32, %c0_33] : memref<8x8x16xf32, #tpu.memory_space<vmem>>, vector<1x8x16xf32>
    %88 = vector.shape_cast %87 : vector<1x8x16xf32> to vector<8x16xf32>
    %89 = vector.shape_cast %85 : vector<8x16xf32> to vector<1x8x16xf32>
    tpu.vector_store %arg14[%86, %c0_32, %c0_33], %89 {strides = array<i32>} : memref<8x8x16xf32, #tpu.memory_space<vmem>>, vector<1x8x16xf32>,
    %c1_i32 = arith.constant 1 : i32
    %c8_i32_34 = arith.constant 8 : i32
    %90 = arith.muli %c1_i32, %c8_i32_34 : i32
    %91 = tpu.assume_multiple %90, 8 : i32
    %92 = arith.index_cast %91 : i32 to index
    %c0_35 = arith.constant 0 : index
    %93 = vector.load %arg11[%92, %c0_35] : memref<64x64xf32, #tpu.memory_space<vmem>>, vector<8x64xf32>
    %94 = arith.truncf %48 : vector<8x16xf32> to vector<8x16xbf16>
    %cst_36 = arith.constant dense<0.000000e+00> : vector<8x64xf32>
    %95 = tpu.matmul %94, %14, %cst_36 {dimension_numbers = #tpu.dot_dimension_numbers<[1], [0], [0], [1], [0, 0, 1, 1], [], []>} : vector<8x16xbf16>, vector<16x64xbf16>, vector<8x64xf32> -> vector<8x64xf32>
    %96 = arith.addf %93, %95 : vector<8x64xf32>
    %97 = vector.extract_strided_slice %96 {offsets = [0, 0], sizes = [8, 16], strides = [1, 1]} : vector<8x64xf32> to vector<8x16xf32>
    %98 = arith.negf %97 : vector<8x16xf32>
    %99 = math.exp %98 : vector<8x16xf32>
    %cst_37 = arith.constant 1.000000e+00 : f32
    %100 = vector.broadcast %cst_37 : f32 to vector<8x16xf32>
    %101 = arith.addf %100, %99 : vector<8x16xf32>
    %102 = arith.divf %100, %101 : vector<8x16xf32>
    %103 = vector.extract_strided_slice %96 {offsets = [0, 16], sizes = [8, 16], strides = [1, 1]} : vector<8x64xf32> to vector<8x16xf32>
    %104 = arith.negf %103 : vector<8x16xf32>
    %105 = math.exp %104 : vector<8x16xf32>
    %cst_38 = arith.constant 1.000000e+00 : f32
    %106 = vector.broadcast %cst_38 : f32 to vector<8x16xf32>
    %107 = arith.addf %106, %105 : vector<8x16xf32>
    %108 = arith.divf %106, %107 : vector<8x16xf32>
    %109 = vector.extract_strided_slice %96 {offsets = [0, 32], sizes = [8, 16], strides = [1, 1]} : vector<8x64xf32> to vector<8x16xf32>
    %110 = math.tanh %109 : vector<8x16xf32>
    %111 = vector.extract_strided_slice %96 {offsets = [0, 48], sizes = [8, 16], strides = [1, 1]} : vector<8x64xf32> to vector<8x16xf32>
    %112 = arith.negf %111 : vector<8x16xf32>
    %113 = math.exp %112 : vector<8x16xf32>
    %cst_39 = arith.constant 1.000000e+00 : f32
    %114 = vector.broadcast %cst_39 : f32 to vector<8x16xf32>
    %115 = arith.addf %114, %113 : vector<8x16xf32>
    %116 = arith.divf %114, %115 : vector<8x16xf32>
    %117 = arith.mulf %108, %46 : vector<8x16xf32>
    %118 = arith.mulf %102, %110 : vector<8x16xf32>
    %119 = arith.addf %117, %118 : vector<8x16xf32>
    %120 = math.tanh %119 : vector<8x16xf32>
    %121 = arith.mulf %116, %120 : vector<8x16xf32>
    %122 = arith.index_cast %c1_i32 : i32 to index
    %c0_40 = arith.constant 0 : index
    %c0_41 = arith.constant 0 : index
    %123 = vector.load %arg13[%122, %c0_40, %c0_41] : memref<8x8x16xf32, #tpu.memory_space<vmem>>, vector<1x8x16xf32>
    %124 = vector.shape_cast %123 : vector<1x8x16xf32> to vector<8x16xf32>
    %125 = vector.shape_cast %121 : vector<8x16xf32> to vector<1x8x16xf32>
    tpu.vector_store %arg13[%122, %c0_40, %c0_41], %125 {strides = array<i32>} : memref<8x8x16xf32, #tpu.memory_space<vmem>>, vector<1x8x16xf32>,
    %c7_i32_42 = arith.constant 7 : i32
    %126 = arith.subi %c7_i32_42, %c1_i32 : i32
    %c8_i32_43 = arith.constant 8 : i32
    %127 = arith.muli %126, %c8_i32_43 : i32
    %128 = tpu.assume_multiple %127, 8 : i32
    %129 = arith.index_cast %128 : i32 to index
    %c0_44 = arith.constant 0 : index
    %130 = vector.load %arg12[%129, %c0_44] : memref<64x64xf32, #tpu.memory_space<vmem>>, vector<8x64xf32>
    %131 = arith.truncf %85 : vector<8x16xf32> to vector<8x16xbf16>
    %cst_45 = arith.constant dense<0.000000e+00> : vector<8x64xf32>
    %132 = tpu.matmul %131, %15, %cst_45 {dimension_numbers = #tpu.dot_dimension_numbers<[1], [0], [0], [1], [0, 0, 1, 1], [], []>} : vector<8x16xbf16>, vector<16x64xbf16>, vector<8x64xf32> -> vector<8x64xf32>
    %133 = arith.addf %130, %132 : vector<8x64xf32>
    %134 = vector.extract_strided_slice %133 {offsets = [0, 0], sizes = [8, 16], strides = [1, 1]} : vector<8x64xf32> to vector<8x16xf32>
    %135 = arith.negf %134 : vector<8x16xf32>
    %136 = math.exp %135 : vector<8x16xf32>
    %cst_46 = arith.constant 1.000000e+00 : f32
    %137 = vector.broadcast %cst_46 : f32 to vector<8x16xf32>
    %138 = arith.addf %137, %136 : vector<8x16xf32>
    %139 = arith.divf %137, %138 : vector<8x16xf32>
    %140 = vector.extract_strided_slice %133 {offsets = [0, 16], sizes = [8, 16], strides = [1, 1]} : vector<8x64xf32> to vector<8x16xf32>
    %141 = arith.negf %140 : vector<8x16xf32>
    %142 = math.exp %141 : vector<8x16xf32>
    %cst_47 = arith.constant 1.000000e+00 : f32
    %143 = vector.broadcast %cst_47 : f32 to vector<8x16xf32>
    %144 = arith.addf %143, %142 : vector<8x16xf32>
    %145 = arith.divf %143, %144 : vector<8x16xf32>
    %146 = vector.extract_strided_slice %133 {offsets = [0, 32], sizes = [8, 16], strides = [1, 1]} : vector<8x64xf32> to vector<8x16xf32>
    %147 = math.tanh %146 : vector<8x16xf32>
    %148 = vector.extract_strided_slice %133 {offsets = [0, 48], sizes = [8, 16], strides = [1, 1]} : vector<8x64xf32> to vector<8x16xf32>
    %149 = arith.negf %148 : vector<8x16xf32>
    %150 = math.exp %149 : vector<8x16xf32>
    %cst_48 = arith.constant 1.000000e+00 : f32
    %151 = vector.broadcast %cst_48 : f32 to vector<8x16xf32>
    %152 = arith.addf %151, %150 : vector<8x16xf32>
    %153 = arith.divf %151, %152 : vector<8x16xf32>
    %154 = arith.mulf %145, %83 : vector<8x16xf32>
    %155 = arith.mulf %139, %147 : vector<8x16xf32>
    %156 = arith.addf %154, %155 : vector<8x16xf32>
    %157 = math.tanh %156 : vector<8x16xf32>
    %158 = arith.mulf %153, %157 : vector<8x16xf32>
    %159 = arith.index_cast %126 : i32 to index
    %c0_49 = arith.constant 0 : index
    %c0_50 = arith.constant 0 : index
    %160 = vector.load %arg14[%159, %c0_49, %c0_50] : memref<8x8x16xf32, #tpu.memory_space<vmem>>, vector<1x8x16xf32>
    %161 = vector.shape_cast %160 : vector<1x8x16xf32> to vector<8x16xf32>
    %162 = vector.shape_cast %158 : vector<8x16xf32> to vector<1x8x16xf32>
    tpu.vector_store %arg14[%159, %c0_49, %c0_50], %162 {strides = array<i32>} : memref<8x8x16xf32, #tpu.memory_space<vmem>>, vector<1x8x16xf32>,
    %c2_i32 = arith.constant 2 : i32
    %c8_i32_51 = arith.constant 8 : i32
    %163 = arith.muli %c2_i32, %c8_i32_51 : i32
    %164 = tpu.assume_multiple %163, 8 : i32
    %165 = arith.index_cast %164 : i32 to index
    %c0_52 = arith.constant 0 : index
    %166 = vector.load %arg11[%165, %c0_52] : memref<64x64xf32, #tpu.memory_space<vmem>>, vector<8x64xf32>
    %167 = arith.truncf %121 : vector<8x16xf32> to vector<8x16xbf16>
    %cst_53 = arith.constant dense<0.000000e+00> : vector<8x64xf32>
    %168 = tpu.matmul %167, %14, %cst_53 {dimension_numbers = #tpu.dot_dimension_numbers<[1], [0], [0], [1], [0, 0, 1, 1], [], []>} : vector<8x16xbf16>, vector<16x64xbf16>, vector<8x64xf32> -> vector<8x64xf32>
    %169 = arith.addf %166, %168 : vector<8x64xf32>
    %170 = vector.extract_strided_slice %169 {offsets = [0, 0], sizes = [8, 16], strides = [1, 1]} : vector<8x64xf32> to vector<8x16xf32>
    %171 = arith.negf %170 : vector<8x16xf32>
    %172 = math.exp %171 : vector<8x16xf32>
    %cst_54 = arith.constant 1.000000e+00 : f32
    %173 = vector.broadcast %cst_54 : f32 to vector<8x16xf32>
    %174 = arith.addf %173, %172 : vector<8x16xf32>
    %175 = arith.divf %173, %174 : vector<8x16xf32>
    %176 = vector.extract_strided_slice %169 {offsets = [0, 16], sizes = [8, 16], strides = [1, 1]} : vector<8x64xf32> to vector<8x16xf32>
    %177 = arith.negf %176 : vector<8x16xf32>
    %178 = math.exp %177 : vector<8x16xf32>
    %cst_55 = arith.constant 1.000000e+00 : f32
    %179 = vector.broadcast %cst_55 : f32 to vector<8x16xf32>
    %180 = arith.addf %179, %178 : vector<8x16xf32>
    %181 = arith.divf %179, %180 : vector<8x16xf32>
    %182 = vector.extract_strided_slice %169 {offsets = [0, 32], sizes = [8, 16], strides = [1, 1]} : vector<8x64xf32> to vector<8x16xf32>
    %183 = math.tanh %182 : vector<8x16xf32>
    %184 = vector.extract_strided_slice %169 {offsets = [0, 48], sizes = [8, 16], strides = [1, 1]} : vector<8x64xf32> to vector<8x16xf32>
    %185 = arith.negf %184 : vector<8x16xf32>
    %186 = math.exp %185 : vector<8x16xf32>
    %cst_56 = arith.constant 1.000000e+00 : f32
    %187 = vector.broadcast %cst_56 : f32 to vector<8x16xf32>
    %188 = arith.addf %187, %186 : vector<8x16xf32>
    %189 = arith.divf %187, %188 : vector<8x16xf32>
    %190 = arith.mulf %181, %119 : vector<8x16xf32>
    %191 = arith.mulf %175, %183 : vector<8x16xf32>
    %192 = arith.addf %190, %191 : vector<8x16xf32>
    %193 = math.tanh %192 : vector<8x16xf32>
    %194 = arith.mulf %189, %193 : vector<8x16xf32>
    %195 = arith.index_cast %c2_i32 : i32 to index
    %c0_57 = arith.constant 0 : index
    %c0_58 = arith.constant 0 : index
    %196 = vector.load %arg13[%195, %c0_57, %c0_58] : memref<8x8x16xf32, #tpu.memory_space<vmem>>, vector<1x8x16xf32>
    %197 = vector.shape_cast %196 : vector<1x8x16xf32> to vector<8x16xf32>
    %198 = vector.shape_cast %194 : vector<8x16xf32> to vector<1x8x16xf32>
    tpu.vector_store %arg13[%195, %c0_57, %c0_58], %198 {strides = array<i32>} : memref<8x8x16xf32, #tpu.memory_space<vmem>>, vector<1x8x16xf32>,
    %c7_i32_59 = arith.constant 7 : i32
    %199 = arith.subi %c7_i32_59, %c2_i32 : i32
    %c8_i32_60 = arith.constant 8 : i32
    %200 = arith.muli %199, %c8_i32_60 : i32
    %201 = tpu.assume_multiple %200, 8 : i32
    %202 = arith.index_cast %201 : i32 to index
    %c0_61 = arith.constant 0 : index
    %203 = vector.load %arg12[%202, %c0_61] : memref<64x64xf32, #tpu.memory_space<vmem>>, vector<8x64xf32>
    %204 = arith.truncf %158 : vector<8x16xf32> to vector<8x16xbf16>
    %cst_62 = arith.constant dense<0.000000e+00> : vector<8x64xf32>
    %205 = tpu.matmul %204, %15, %cst_62 {dimension_numbers = #tpu.dot_dimension_numbers<[1], [0], [0], [1], [0, 0, 1, 1], [], []>} : vector<8x16xbf16>, vector<16x64xbf16>, vector<8x64xf32> -> vector<8x64xf32>
    %206 = arith.addf %203, %205 : vector<8x64xf32>
    %207 = vector.extract_strided_slice %206 {offsets = [0, 0], sizes = [8, 16], strides = [1, 1]} : vector<8x64xf32> to vector<8x16xf32>
    %208 = arith.negf %207 : vector<8x16xf32>
    %209 = math.exp %208 : vector<8x16xf32>
    %cst_63 = arith.constant 1.000000e+00 : f32
    %210 = vector.broadcast %cst_63 : f32 to vector<8x16xf32>
    %211 = arith.addf %210, %209 : vector<8x16xf32>
    %212 = arith.divf %210, %211 : vector<8x16xf32>
    %213 = vector.extract_strided_slice %206 {offsets = [0, 16], sizes = [8, 16], strides = [1, 1]} : vector<8x64xf32> to vector<8x16xf32>
    %214 = arith.negf %213 : vector<8x16xf32>
    %215 = math.exp %214 : vector<8x16xf32>
    %cst_64 = arith.constant 1.000000e+00 : f32
    %216 = vector.broadcast %cst_64 : f32 to vector<8x16xf32>
    %217 = arith.addf %216, %215 : vector<8x16xf32>
    %218 = arith.divf %216, %217 : vector<8x16xf32>
    %219 = vector.extract_strided_slice %206 {offsets = [0, 32], sizes = [8, 16], strides = [1, 1]} : vector<8x64xf32> to vector<8x16xf32>
    %220 = math.tanh %219 : vector<8x16xf32>
    %221 = vector.extract_strided_slice %206 {offsets = [0, 48], sizes = [8, 16], strides = [1, 1]} : vector<8x64xf32> to vector<8x16xf32>
    %222 = arith.negf %221 : vector<8x16xf32>
    %223 = math.exp %222 : vector<8x16xf32>
    %cst_65 = arith.constant 1.000000e+00 : f32
    %224 = vector.broadcast %cst_65 : f32 to vector<8x16xf32>
    %225 = arith.addf %224, %223 : vector<8x16xf32>
    %226 = arith.divf %224, %225 : vector<8x16xf32>
    %227 = arith.mulf %218, %156 : vector<8x16xf32>
    %228 = arith.mulf %212, %220 : vector<8x16xf32>
    %229 = arith.addf %227, %228 : vector<8x16xf32>
    %230 = math.tanh %229 : vector<8x16xf32>
    %231 = arith.mulf %226, %230 : vector<8x16xf32>
    %232 = arith.index_cast %199 : i32 to index
    %c0_66 = arith.constant 0 : index
    %c0_67 = arith.constant 0 : index
    %233 = vector.load %arg14[%232, %c0_66, %c0_67] : memref<8x8x16xf32, #tpu.memory_space<vmem>>, vector<1x8x16xf32>
    %234 = vector.shape_cast %233 : vector<1x8x16xf32> to vector<8x16xf32>
    %235 = vector.shape_cast %231 : vector<8x16xf32> to vector<1x8x16xf32>
    tpu.vector_store %arg14[%232, %c0_66, %c0_67], %235 {strides = array<i32>} : memref<8x8x16xf32, #tpu.memory_space<vmem>>, vector<1x8x16xf32>,
    %c3_i32 = arith.constant 3 : i32
    %c8_i32_68 = arith.constant 8 : i32
    %236 = arith.muli %c3_i32, %c8_i32_68 : i32
    %237 = tpu.assume_multiple %236, 8 : i32
    %238 = arith.index_cast %237 : i32 to index
    %c0_69 = arith.constant 0 : index
    %239 = vector.load %arg11[%238, %c0_69] : memref<64x64xf32, #tpu.memory_space<vmem>>, vector<8x64xf32>
    %240 = arith.truncf %194 : vector<8x16xf32> to vector<8x16xbf16>
    %cst_70 = arith.constant dense<0.000000e+00> : vector<8x64xf32>
    %241 = tpu.matmul %240, %14, %cst_70 {dimension_numbers = #tpu.dot_dimension_numbers<[1], [0], [0], [1], [0, 0, 1, 1], [], []>} : vector<8x16xbf16>, vector<16x64xbf16>, vector<8x64xf32> -> vector<8x64xf32>
    %242 = arith.addf %239, %241 : vector<8x64xf32>
    %243 = vector.extract_strided_slice %242 {offsets = [0, 0], sizes = [8, 16], strides = [1, 1]} : vector<8x64xf32> to vector<8x16xf32>
    %244 = arith.negf %243 : vector<8x16xf32>
    %245 = math.exp %244 : vector<8x16xf32>
    %cst_71 = arith.constant 1.000000e+00 : f32
    %246 = vector.broadcast %cst_71 : f32 to vector<8x16xf32>
    %247 = arith.addf %246, %245 : vector<8x16xf32>
    %248 = arith.divf %246, %247 : vector<8x16xf32>
    %249 = vector.extract_strided_slice %242 {offsets = [0, 16], sizes = [8, 16], strides = [1, 1]} : vector<8x64xf32> to vector<8x16xf32>
    %250 = arith.negf %249 : vector<8x16xf32>
    %251 = math.exp %250 : vector<8x16xf32>
    %cst_72 = arith.constant 1.000000e+00 : f32
    %252 = vector.broadcast %cst_72 : f32 to vector<8x16xf32>
    %253 = arith.addf %252, %251 : vector<8x16xf32>
    %254 = arith.divf %252, %253 : vector<8x16xf32>
    %255 = vector.extract_strided_slice %242 {offsets = [0, 32], sizes = [8, 16], strides = [1, 1]} : vector<8x64xf32> to vector<8x16xf32>
    %256 = math.tanh %255 : vector<8x16xf32>
    %257 = vector.extract_strided_slice %242 {offsets = [0, 48], sizes = [8, 16], strides = [1, 1]} : vector<8x64xf32> to vector<8x16xf32>
    %258 = arith.negf %257 : vector<8x16xf32>
    %259 = math.exp %258 : vector<8x16xf32>
    %cst_73 = arith.constant 1.000000e+00 : f32
    %260 = vector.broadcast %cst_73 : f32 to vector<8x16xf32>
    %261 = arith.addf %260, %259 : vector<8x16xf32>
    %262 = arith.divf %260, %261 : vector<8x16xf32>
    %263 = arith.mulf %254, %192 : vector<8x16xf32>
    %264 = arith.mulf %248, %256 : vector<8x16xf32>
    %265 = arith.addf %263, %264 : vector<8x16xf32>
    %266 = math.tanh %265 : vector<8x16xf32>
    %267 = arith.mulf %262, %266 : vector<8x16xf32>
    %268 = arith.index_cast %c3_i32 : i32 to index
    %c0_74 = arith.constant 0 : index
    %c0_75 = arith.constant 0 : index
    %269 = vector.load %arg13[%268, %c0_74, %c0_75] : memref<8x8x16xf32, #tpu.memory_space<vmem>>, vector<1x8x16xf32>
    %270 = vector.shape_cast %269 : vector<1x8x16xf32> to vector<8x16xf32>
    %271 = vector.shape_cast %267 : vector<8x16xf32> to vector<1x8x16xf32>
    tpu.vector_store %arg13[%268, %c0_74, %c0_75], %271 {strides = array<i32>} : memref<8x8x16xf32, #tpu.memory_space<vmem>>, vector<1x8x16xf32>,
    %c7_i32_76 = arith.constant 7 : i32
    %272 = arith.subi %c7_i32_76, %c3_i32 : i32
    %c8_i32_77 = arith.constant 8 : i32
    %273 = arith.muli %272, %c8_i32_77 : i32
    %274 = tpu.assume_multiple %273, 8 : i32
    %275 = arith.index_cast %274 : i32 to index
    %c0_78 = arith.constant 0 : index
    %276 = vector.load %arg12[%275, %c0_78] : memref<64x64xf32, #tpu.memory_space<vmem>>, vector<8x64xf32>
    %277 = arith.truncf %231 : vector<8x16xf32> to vector<8x16xbf16>
    %cst_79 = arith.constant dense<0.000000e+00> : vector<8x64xf32>
    %278 = tpu.matmul %277, %15, %cst_79 {dimension_numbers = #tpu.dot_dimension_numbers<[1], [0], [0], [1], [0, 0, 1, 1], [], []>} : vector<8x16xbf16>, vector<16x64xbf16>, vector<8x64xf32> -> vector<8x64xf32>
    %279 = arith.addf %276, %278 : vector<8x64xf32>
    %280 = vector.extract_strided_slice %279 {offsets = [0, 0], sizes = [8, 16], strides = [1, 1]} : vector<8x64xf32> to vector<8x16xf32>
    %281 = arith.negf %280 : vector<8x16xf32>
    %282 = math.exp %281 : vector<8x16xf32>
    %cst_80 = arith.constant 1.000000e+00 : f32
    %283 = vector.broadcast %cst_80 : f32 to vector<8x16xf32>
    %284 = arith.addf %283, %282 : vector<8x16xf32>
    %285 = arith.divf %283, %284 : vector<8x16xf32>
    %286 = vector.extract_strided_slice %279 {offsets = [0, 16], sizes = [8, 16], strides = [1, 1]} : vector<8x64xf32> to vector<8x16xf32>
    %287 = arith.negf %286 : vector<8x16xf32>
    %288 = math.exp %287 : vector<8x16xf32>
    %cst_81 = arith.constant 1.000000e+00 : f32
    %289 = vector.broadcast %cst_81 : f32 to vector<8x16xf32>
    %290 = arith.addf %289, %288 : vector<8x16xf32>
    %291 = arith.divf %289, %290 : vector<8x16xf32>
    %292 = vector.extract_strided_slice %279 {offsets = [0, 32], sizes = [8, 16], strides = [1, 1]} : vector<8x64xf32> to vector<8x16xf32>
    %293 = math.tanh %292 : vector<8x16xf32>
    %294 = vector.extract_strided_slice %279 {offsets = [0, 48], sizes = [8, 16], strides = [1, 1]} : vector<8x64xf32> to vector<8x16xf32>
    %295 = arith.negf %294 : vector<8x16xf32>
    %296 = math.exp %295 : vector<8x16xf32>
    %cst_82 = arith.constant 1.000000e+00 : f32
    %297 = vector.broadcast %cst_82 : f32 to vector<8x16xf32>
    %298 = arith.addf %297, %296 : vector<8x16xf32>
    %299 = arith.divf %297, %298 : vector<8x16xf32>
    %300 = arith.mulf %291, %229 : vector<8x16xf32>
    %301 = arith.mulf %285, %293 : vector<8x16xf32>
    %302 = arith.addf %300, %301 : vector<8x16xf32>
    %303 = math.tanh %302 : vector<8x16xf32>
    %304 = arith.mulf %299, %303 : vector<8x16xf32>
    %305 = arith.index_cast %272 : i32 to index
    %c0_83 = arith.constant 0 : index
    %c0_84 = arith.constant 0 : index
    %306 = vector.load %arg14[%305, %c0_83, %c0_84] : memref<8x8x16xf32, #tpu.memory_space<vmem>>, vector<1x8x16xf32>
    %307 = vector.shape_cast %306 : vector<1x8x16xf32> to vector<8x16xf32>
    %308 = vector.shape_cast %304 : vector<8x16xf32> to vector<1x8x16xf32>
    tpu.vector_store %arg14[%305, %c0_83, %c0_84], %308 {strides = array<i32>} : memref<8x8x16xf32, #tpu.memory_space<vmem>>, vector<1x8x16xf32>,
    %c4_i32 = arith.constant 4 : i32
    %c8_i32_85 = arith.constant 8 : i32
    %309 = arith.muli %c4_i32, %c8_i32_85 : i32
    %310 = tpu.assume_multiple %309, 8 : i32
    %311 = arith.index_cast %310 : i32 to index
    %c0_86 = arith.constant 0 : index
    %312 = vector.load %arg11[%311, %c0_86] : memref<64x64xf32, #tpu.memory_space<vmem>>, vector<8x64xf32>
    %313 = arith.truncf %267 : vector<8x16xf32> to vector<8x16xbf16>
    %cst_87 = arith.constant dense<0.000000e+00> : vector<8x64xf32>
    %314 = tpu.matmul %313, %14, %cst_87 {dimension_numbers = #tpu.dot_dimension_numbers<[1], [0], [0], [1], [0, 0, 1, 1], [], []>} : vector<8x16xbf16>, vector<16x64xbf16>, vector<8x64xf32> -> vector<8x64xf32>
    %315 = arith.addf %312, %314 : vector<8x64xf32>
    %316 = vector.extract_strided_slice %315 {offsets = [0, 0], sizes = [8, 16], strides = [1, 1]} : vector<8x64xf32> to vector<8x16xf32>
    %317 = arith.negf %316 : vector<8x16xf32>
    %318 = math.exp %317 : vector<8x16xf32>
    %cst_88 = arith.constant 1.000000e+00 : f32
    %319 = vector.broadcast %cst_88 : f32 to vector<8x16xf32>
    %320 = arith.addf %319, %318 : vector<8x16xf32>
    %321 = arith.divf %319, %320 : vector<8x16xf32>
    %322 = vector.extract_strided_slice %315 {offsets = [0, 16], sizes = [8, 16], strides = [1, 1]} : vector<8x64xf32> to vector<8x16xf32>
    %323 = arith.negf %322 : vector<8x16xf32>
    %324 = math.exp %323 : vector<8x16xf32>
    %cst_89 = arith.constant 1.000000e+00 : f32
    %325 = vector.broadcast %cst_89 : f32 to vector<8x16xf32>
    %326 = arith.addf %325, %324 : vector<8x16xf32>
    %327 = arith.divf %325, %326 : vector<8x16xf32>
    %328 = vector.extract_strided_slice %315 {offsets = [0, 32], sizes = [8, 16], strides = [1, 1]} : vector<8x64xf32> to vector<8x16xf32>
    %329 = math.tanh %328 : vector<8x16xf32>
    %330 = vector.extract_strided_slice %315 {offsets = [0, 48], sizes = [8, 16], strides = [1, 1]} : vector<8x64xf32> to vector<8x16xf32>
    %331 = arith.negf %330 : vector<8x16xf32>
    %332 = math.exp %331 : vector<8x16xf32>
    %cst_90 = arith.constant 1.000000e+00 : f32
    %333 = vector.broadcast %cst_90 : f32 to vector<8x16xf32>
    %334 = arith.addf %333, %332 : vector<8x16xf32>
    %335 = arith.divf %333, %334 : vector<8x16xf32>
    %336 = arith.mulf %327, %265 : vector<8x16xf32>
    %337 = arith.mulf %321, %329 : vector<8x16xf32>
    %338 = arith.addf %336, %337 : vector<8x16xf32>
    %339 = math.tanh %338 : vector<8x16xf32>
    %340 = arith.mulf %335, %339 : vector<8x16xf32>
    %341 = arith.index_cast %c4_i32 : i32 to index
    %c0_91 = arith.constant 0 : index
    %c0_92 = arith.constant 0 : index
    %342 = vector.load %arg13[%341, %c0_91, %c0_92] : memref<8x8x16xf32, #tpu.memory_space<vmem>>, vector<1x8x16xf32>
    %343 = vector.shape_cast %342 : vector<1x8x16xf32> to vector<8x16xf32>
    %344 = vector.shape_cast %340 : vector<8x16xf32> to vector<1x8x16xf32>
    tpu.vector_store %arg13[%341, %c0_91, %c0_92], %344 {strides = array<i32>} : memref<8x8x16xf32, #tpu.memory_space<vmem>>, vector<1x8x16xf32>,
    %c7_i32_93 = arith.constant 7 : i32
    %345 = arith.subi %c7_i32_93, %c4_i32 : i32
    %c8_i32_94 = arith.constant 8 : i32
    %346 = arith.muli %345, %c8_i32_94 : i32
    %347 = tpu.assume_multiple %346, 8 : i32
    %348 = arith.index_cast %347 : i32 to index
    %c0_95 = arith.constant 0 : index
    %349 = vector.load %arg12[%348, %c0_95] : memref<64x64xf32, #tpu.memory_space<vmem>>, vector<8x64xf32>
    %350 = arith.truncf %304 : vector<8x16xf32> to vector<8x16xbf16>
    %cst_96 = arith.constant dense<0.000000e+00> : vector<8x64xf32>
    %351 = tpu.matmul %350, %15, %cst_96 {dimension_numbers = #tpu.dot_dimension_numbers<[1], [0], [0], [1], [0, 0, 1, 1], [], []>} : vector<8x16xbf16>, vector<16x64xbf16>, vector<8x64xf32> -> vector<8x64xf32>
    %352 = arith.addf %349, %351 : vector<8x64xf32>
    %353 = vector.extract_strided_slice %352 {offsets = [0, 0], sizes = [8, 16], strides = [1, 1]} : vector<8x64xf32> to vector<8x16xf32>
    %354 = arith.negf %353 : vector<8x16xf32>
    %355 = math.exp %354 : vector<8x16xf32>
    %cst_97 = arith.constant 1.000000e+00 : f32
    %356 = vector.broadcast %cst_97 : f32 to vector<8x16xf32>
    %357 = arith.addf %356, %355 : vector<8x16xf32>
    %358 = arith.divf %356, %357 : vector<8x16xf32>
    %359 = vector.extract_strided_slice %352 {offsets = [0, 16], sizes = [8, 16], strides = [1, 1]} : vector<8x64xf32> to vector<8x16xf32>
    %360 = arith.negf %359 : vector<8x16xf32>
    %361 = math.exp %360 : vector<8x16xf32>
    %cst_98 = arith.constant 1.000000e+00 : f32
    %362 = vector.broadcast %cst_98 : f32 to vector<8x16xf32>
    %363 = arith.addf %362, %361 : vector<8x16xf32>
    %364 = arith.divf %362, %363 : vector<8x16xf32>
    %365 = vector.extract_strided_slice %352 {offsets = [0, 32], sizes = [8, 16], strides = [1, 1]} : vector<8x64xf32> to vector<8x16xf32>
    %366 = math.tanh %365 : vector<8x16xf32>
    %367 = vector.extract_strided_slice %352 {offsets = [0, 48], sizes = [8, 16], strides = [1, 1]} : vector<8x64xf32> to vector<8x16xf32>
    %368 = arith.negf %367 : vector<8x16xf32>
    %369 = math.exp %368 : vector<8x16xf32>
    %cst_99 = arith.constant 1.000000e+00 : f32
    %370 = vector.broadcast %cst_99 : f32 to vector<8x16xf32>
    %371 = arith.addf %370, %369 : vector<8x16xf32>
    %372 = arith.divf %370, %371 : vector<8x16xf32>
    %373 = arith.mulf %364, %302 : vector<8x16xf32>
    %374 = arith.mulf %358, %366 : vector<8x16xf32>
    %375 = arith.addf %373, %374 : vector<8x16xf32>
    %376 = math.tanh %375 : vector<8x16xf32>
    %377 = arith.mulf %372, %376 : vector<8x16xf32>
    %378 = arith.index_cast %345 : i32 to index
    %c0_100 = arith.constant 0 : index
    %c0_101 = arith.constant 0 : index
    %379 = vector.load %arg14[%378, %c0_100, %c0_101] : memref<8x8x16xf32, #tpu.memory_space<vmem>>, vector<1x8x16xf32>
    %380 = vector.shape_cast %379 : vector<1x8x16xf32> to vector<8x16xf32>
    %381 = vector.shape_cast %377 : vector<8x16xf32> to vector<1x8x16xf32>
    tpu.vector_store %arg14[%378, %c0_100, %c0_101], %381 {strides = array<i32>} : memref<8x8x16xf32, #tpu.memory_space<vmem>>, vector<1x8x16xf32>,
    %c5_i32 = arith.constant 5 : i32
    %c8_i32_102 = arith.constant 8 : i32
    %382 = arith.muli %c5_i32, %c8_i32_102 : i32
    %383 = tpu.assume_multiple %382, 8 : i32
    %384 = arith.index_cast %383 : i32 to index
    %c0_103 = arith.constant 0 : index
    %385 = vector.load %arg11[%384, %c0_103] : memref<64x64xf32, #tpu.memory_space<vmem>>, vector<8x64xf32>
    %386 = arith.truncf %340 : vector<8x16xf32> to vector<8x16xbf16>
    %cst_104 = arith.constant dense<0.000000e+00> : vector<8x64xf32>
    %387 = tpu.matmul %386, %14, %cst_104 {dimension_numbers = #tpu.dot_dimension_numbers<[1], [0], [0], [1], [0, 0, 1, 1], [], []>} : vector<8x16xbf16>, vector<16x64xbf16>, vector<8x64xf32> -> vector<8x64xf32>
    %388 = arith.addf %385, %387 : vector<8x64xf32>
    %389 = vector.extract_strided_slice %388 {offsets = [0, 0], sizes = [8, 16], strides = [1, 1]} : vector<8x64xf32> to vector<8x16xf32>
    %390 = arith.negf %389 : vector<8x16xf32>
    %391 = math.exp %390 : vector<8x16xf32>
    %cst_105 = arith.constant 1.000000e+00 : f32
    %392 = vector.broadcast %cst_105 : f32 to vector<8x16xf32>
    %393 = arith.addf %392, %391 : vector<8x16xf32>
    %394 = arith.divf %392, %393 : vector<8x16xf32>
    %395 = vector.extract_strided_slice %388 {offsets = [0, 16], sizes = [8, 16], strides = [1, 1]} : vector<8x64xf32> to vector<8x16xf32>
    %396 = arith.negf %395 : vector<8x16xf32>
    %397 = math.exp %396 : vector<8x16xf32>
    %cst_106 = arith.constant 1.000000e+00 : f32
    %398 = vector.broadcast %cst_106 : f32 to vector<8x16xf32>
    %399 = arith.addf %398, %397 : vector<8x16xf32>
    %400 = arith.divf %398, %399 : vector<8x16xf32>
    %401 = vector.extract_strided_slice %388 {offsets = [0, 32], sizes = [8, 16], strides = [1, 1]} : vector<8x64xf32> to vector<8x16xf32>
    %402 = math.tanh %401 : vector<8x16xf32>
    %403 = vector.extract_strided_slice %388 {offsets = [0, 48], sizes = [8, 16], strides = [1, 1]} : vector<8x64xf32> to vector<8x16xf32>
    %404 = arith.negf %403 : vector<8x16xf32>
    %405 = math.exp %404 : vector<8x16xf32>
    %cst_107 = arith.constant 1.000000e+00 : f32
    %406 = vector.broadcast %cst_107 : f32 to vector<8x16xf32>
    %407 = arith.addf %406, %405 : vector<8x16xf32>
    %408 = arith.divf %406, %407 : vector<8x16xf32>
    %409 = arith.mulf %400, %338 : vector<8x16xf32>
    %410 = arith.mulf %394, %402 : vector<8x16xf32>
    %411 = arith.addf %409, %410 : vector<8x16xf32>
    %412 = math.tanh %411 : vector<8x16xf32>
    %413 = arith.mulf %408, %412 : vector<8x16xf32>
    %414 = arith.index_cast %c5_i32 : i32 to index
    %c0_108 = arith.constant 0 : index
    %c0_109 = arith.constant 0 : index
    %415 = vector.load %arg13[%414, %c0_108, %c0_109] : memref<8x8x16xf32, #tpu.memory_space<vmem>>, vector<1x8x16xf32>
    %416 = vector.shape_cast %415 : vector<1x8x16xf32> to vector<8x16xf32>
    %417 = vector.shape_cast %413 : vector<8x16xf32> to vector<1x8x16xf32>
    tpu.vector_store %arg13[%414, %c0_108, %c0_109], %417 {strides = array<i32>} : memref<8x8x16xf32, #tpu.memory_space<vmem>>, vector<1x8x16xf32>,
    %c7_i32_110 = arith.constant 7 : i32
    %418 = arith.subi %c7_i32_110, %c5_i32 : i32
    %c8_i32_111 = arith.constant 8 : i32
    %419 = arith.muli %418, %c8_i32_111 : i32
    %420 = tpu.assume_multiple %419, 8 : i32
    %421 = arith.index_cast %420 : i32 to index
    %c0_112 = arith.constant 0 : index
    %422 = vector.load %arg12[%421, %c0_112] : memref<64x64xf32, #tpu.memory_space<vmem>>, vector<8x64xf32>
    %423 = arith.truncf %377 : vector<8x16xf32> to vector<8x16xbf16>
    %cst_113 = arith.constant dense<0.000000e+00> : vector<8x64xf32>
    %424 = tpu.matmul %423, %15, %cst_113 {dimension_numbers = #tpu.dot_dimension_numbers<[1], [0], [0], [1], [0, 0, 1, 1], [], []>} : vector<8x16xbf16>, vector<16x64xbf16>, vector<8x64xf32> -> vector<8x64xf32>
    %425 = arith.addf %422, %424 : vector<8x64xf32>
    %426 = vector.extract_strided_slice %425 {offsets = [0, 0], sizes = [8, 16], strides = [1, 1]} : vector<8x64xf32> to vector<8x16xf32>
    %427 = arith.negf %426 : vector<8x16xf32>
    %428 = math.exp %427 : vector<8x16xf32>
    %cst_114 = arith.constant 1.000000e+00 : f32
    %429 = vector.broadcast %cst_114 : f32 to vector<8x16xf32>
    %430 = arith.addf %429, %428 : vector<8x16xf32>
    %431 = arith.divf %429, %430 : vector<8x16xf32>
    %432 = vector.extract_strided_slice %425 {offsets = [0, 16], sizes = [8, 16], strides = [1, 1]} : vector<8x64xf32> to vector<8x16xf32>
    %433 = arith.negf %432 : vector<8x16xf32>
    %434 = math.exp %433 : vector<8x16xf32>
    %cst_115 = arith.constant 1.000000e+00 : f32
    %435 = vector.broadcast %cst_115 : f32 to vector<8x16xf32>
    %436 = arith.addf %435, %434 : vector<8x16xf32>
    %437 = arith.divf %435, %436 : vector<8x16xf32>
    %438 = vector.extract_strided_slice %425 {offsets = [0, 32], sizes = [8, 16], strides = [1, 1]} : vector<8x64xf32> to vector<8x16xf32>
    %439 = math.tanh %438 : vector<8x16xf32>
    %440 = vector.extract_strided_slice %425 {offsets = [0, 48], sizes = [8, 16], strides = [1, 1]} : vector<8x64xf32> to vector<8x16xf32>
    %441 = arith.negf %440 : vector<8x16xf32>
    %442 = math.exp %441 : vector<8x16xf32>
    %cst_116 = arith.constant 1.000000e+00 : f32
    %443 = vector.broadcast %cst_116 : f32 to vector<8x16xf32>
    %444 = arith.addf %443, %442 : vector<8x16xf32>
    %445 = arith.divf %443, %444 : vector<8x16xf32>
    %446 = arith.mulf %437, %375 : vector<8x16xf32>
    %447 = arith.mulf %431, %439 : vector<8x16xf32>
    %448 = arith.addf %446, %447 : vector<8x16xf32>
    %449 = math.tanh %448 : vector<8x16xf32>
    %450 = arith.mulf %445, %449 : vector<8x16xf32>
    %451 = arith.index_cast %418 : i32 to index
    %c0_117 = arith.constant 0 : index
    %c0_118 = arith.constant 0 : index
    %452 = vector.load %arg14[%451, %c0_117, %c0_118] : memref<8x8x16xf32, #tpu.memory_space<vmem>>, vector<1x8x16xf32>
    %453 = vector.shape_cast %452 : vector<1x8x16xf32> to vector<8x16xf32>
    %454 = vector.shape_cast %450 : vector<8x16xf32> to vector<1x8x16xf32>
    tpu.vector_store %arg14[%451, %c0_117, %c0_118], %454 {strides = array<i32>} : memref<8x8x16xf32, #tpu.memory_space<vmem>>, vector<1x8x16xf32>,
    %c6_i32 = arith.constant 6 : i32
    %c8_i32_119 = arith.constant 8 : i32
    %455 = arith.muli %c6_i32, %c8_i32_119 : i32
    %456 = tpu.assume_multiple %455, 8 : i32
    %457 = arith.index_cast %456 : i32 to index
    %c0_120 = arith.constant 0 : index
    %458 = vector.load %arg11[%457, %c0_120] : memref<64x64xf32, #tpu.memory_space<vmem>>, vector<8x64xf32>
    %459 = arith.truncf %413 : vector<8x16xf32> to vector<8x16xbf16>
    %cst_121 = arith.constant dense<0.000000e+00> : vector<8x64xf32>
    %460 = tpu.matmul %459, %14, %cst_121 {dimension_numbers = #tpu.dot_dimension_numbers<[1], [0], [0], [1], [0, 0, 1, 1], [], []>} : vector<8x16xbf16>, vector<16x64xbf16>, vector<8x64xf32> -> vector<8x64xf32>
    %461 = arith.addf %458, %460 : vector<8x64xf32>
    %462 = vector.extract_strided_slice %461 {offsets = [0, 0], sizes = [8, 16], strides = [1, 1]} : vector<8x64xf32> to vector<8x16xf32>
    %463 = arith.negf %462 : vector<8x16xf32>
    %464 = math.exp %463 : vector<8x16xf32>
    %cst_122 = arith.constant 1.000000e+00 : f32
    %465 = vector.broadcast %cst_122 : f32 to vector<8x16xf32>
    %466 = arith.addf %465, %464 : vector<8x16xf32>
    %467 = arith.divf %465, %466 : vector<8x16xf32>
    %468 = vector.extract_strided_slice %461 {offsets = [0, 16], sizes = [8, 16], strides = [1, 1]} : vector<8x64xf32> to vector<8x16xf32>
    %469 = arith.negf %468 : vector<8x16xf32>
    %470 = math.exp %469 : vector<8x16xf32>
    %cst_123 = arith.constant 1.000000e+00 : f32
    %471 = vector.broadcast %cst_123 : f32 to vector<8x16xf32>
    %472 = arith.addf %471, %470 : vector<8x16xf32>
    %473 = arith.divf %471, %472 : vector<8x16xf32>
    %474 = vector.extract_strided_slice %461 {offsets = [0, 32], sizes = [8, 16], strides = [1, 1]} : vector<8x64xf32> to vector<8x16xf32>
    %475 = math.tanh %474 : vector<8x16xf32>
    %476 = vector.extract_strided_slice %461 {offsets = [0, 48], sizes = [8, 16], strides = [1, 1]} : vector<8x64xf32> to vector<8x16xf32>
    %477 = arith.negf %476 : vector<8x16xf32>
    %478 = math.exp %477 : vector<8x16xf32>
    %cst_124 = arith.constant 1.000000e+00 : f32
    %479 = vector.broadcast %cst_124 : f32 to vector<8x16xf32>
    %480 = arith.addf %479, %478 : vector<8x16xf32>
    %481 = arith.divf %479, %480 : vector<8x16xf32>
    %482 = arith.mulf %473, %411 : vector<8x16xf32>
    %483 = arith.mulf %467, %475 : vector<8x16xf32>
    %484 = arith.addf %482, %483 : vector<8x16xf32>
    %485 = math.tanh %484 : vector<8x16xf32>
    %486 = arith.mulf %481, %485 : vector<8x16xf32>
    %487 = arith.index_cast %c6_i32 : i32 to index
    %c0_125 = arith.constant 0 : index
    %c0_126 = arith.constant 0 : index
    %488 = vector.load %arg13[%487, %c0_125, %c0_126] : memref<8x8x16xf32, #tpu.memory_space<vmem>>, vector<1x8x16xf32>
    %489 = vector.shape_cast %488 : vector<1x8x16xf32> to vector<8x16xf32>
    %490 = vector.shape_cast %486 : vector<8x16xf32> to vector<1x8x16xf32>
    tpu.vector_store %arg13[%487, %c0_125, %c0_126], %490 {strides = array<i32>} : memref<8x8x16xf32, #tpu.memory_space<vmem>>, vector<1x8x16xf32>,
    %c7_i32_127 = arith.constant 7 : i32
    %491 = arith.subi %c7_i32_127, %c6_i32 : i32
    %c8_i32_128 = arith.constant 8 : i32
    %492 = arith.muli %491, %c8_i32_128 : i32
    %493 = tpu.assume_multiple %492, 8 : i32
    %494 = arith.index_cast %493 : i32 to index
    %c0_129 = arith.constant 0 : index
    %495 = vector.load %arg12[%494, %c0_129] : memref<64x64xf32, #tpu.memory_space<vmem>>, vector<8x64xf32>
    %496 = arith.truncf %450 : vector<8x16xf32> to vector<8x16xbf16>
    %cst_130 = arith.constant dense<0.000000e+00> : vector<8x64xf32>
    %497 = tpu.matmul %496, %15, %cst_130 {dimension_numbers = #tpu.dot_dimension_numbers<[1], [0], [0], [1], [0, 0, 1, 1], [], []>} : vector<8x16xbf16>, vector<16x64xbf16>, vector<8x64xf32> -> vector<8x64xf32>
    %498 = arith.addf %495, %497 : vector<8x64xf32>
    %499 = vector.extract_strided_slice %498 {offsets = [0, 0], sizes = [8, 16], strides = [1, 1]} : vector<8x64xf32> to vector<8x16xf32>
    %500 = arith.negf %499 : vector<8x16xf32>
    %501 = math.exp %500 : vector<8x16xf32>
    %cst_131 = arith.constant 1.000000e+00 : f32
    %502 = vector.broadcast %cst_131 : f32 to vector<8x16xf32>
    %503 = arith.addf %502, %501 : vector<8x16xf32>
    %504 = arith.divf %502, %503 : vector<8x16xf32>
    %505 = vector.extract_strided_slice %498 {offsets = [0, 16], sizes = [8, 16], strides = [1, 1]} : vector<8x64xf32> to vector<8x16xf32>
    %506 = arith.negf %505 : vector<8x16xf32>
    %507 = math.exp %506 : vector<8x16xf32>
    %cst_132 = arith.constant 1.000000e+00 : f32
    %508 = vector.broadcast %cst_132 : f32 to vector<8x16xf32>
    %509 = arith.addf %508, %507 : vector<8x16xf32>
    %510 = arith.divf %508, %509 : vector<8x16xf32>
    %511 = vector.extract_strided_slice %498 {offsets = [0, 32], sizes = [8, 16], strides = [1, 1]} : vector<8x64xf32> to vector<8x16xf32>
    %512 = math.tanh %511 : vector<8x16xf32>
    %513 = vector.extract_strided_slice %498 {offsets = [0, 48], sizes = [8, 16], strides = [1, 1]} : vector<8x64xf32> to vector<8x16xf32>
    %514 = arith.negf %513 : vector<8x16xf32>
    %515 = math.exp %514 : vector<8x16xf32>
    %cst_133 = arith.constant 1.000000e+00 : f32
    %516 = vector.broadcast %cst_133 : f32 to vector<8x16xf32>
    %517 = arith.addf %516, %515 : vector<8x16xf32>
    %518 = arith.divf %516, %517 : vector<8x16xf32>
    %519 = arith.mulf %510, %448 : vector<8x16xf32>
    %520 = arith.mulf %504, %512 : vector<8x16xf32>
    %521 = arith.addf %519, %520 : vector<8x16xf32>
    %522 = math.tanh %521 : vector<8x16xf32>
    %523 = arith.mulf %518, %522 : vector<8x16xf32>
    %524 = arith.index_cast %491 : i32 to index
    %c0_134 = arith.constant 0 : index
    %c0_135 = arith.constant 0 : index
    %525 = vector.load %arg14[%524, %c0_134, %c0_135] : memref<8x8x16xf32, #tpu.memory_space<vmem>>, vector<1x8x16xf32>
    %526 = vector.shape_cast %525 : vector<1x8x16xf32> to vector<8x16xf32>
    %527 = vector.shape_cast %523 : vector<8x16xf32> to vector<1x8x16xf32>
    tpu.vector_store %arg14[%524, %c0_134, %c0_135], %527 {strides = array<i32>} : memref<8x8x16xf32, #tpu.memory_space<vmem>>, vector<1x8x16xf32>,
    %c7_i32_136 = arith.constant 7 : i32
    %c8_i32_137 = arith.constant 8 : i32
    %528 = arith.muli %c7_i32_136, %c8_i32_137 : i32
    %529 = tpu.assume_multiple %528, 8 : i32
    %530 = arith.index_cast %529 : i32 to index
    %c0_138 = arith.constant 0 : index
    %531 = vector.load %arg11[%530, %c0_138] : memref<64x64xf32, #tpu.memory_space<vmem>>, vector<8x64xf32>
    %532 = arith.truncf %486 : vector<8x16xf32> to vector<8x16xbf16>
    %cst_139 = arith.constant dense<0.000000e+00> : vector<8x64xf32>
    %533 = tpu.matmul %532, %14, %cst_139 {dimension_numbers = #tpu.dot_dimension_numbers<[1], [0], [0], [1], [0, 0, 1, 1], [], []>} : vector<8x16xbf16>, vector<16x64xbf16>, vector<8x64xf32> -> vector<8x64xf32>
    %534 = arith.addf %531, %533 : vector<8x64xf32>
    %535 = vector.extract_strided_slice %534 {offsets = [0, 0], sizes = [8, 16], strides = [1, 1]} : vector<8x64xf32> to vector<8x16xf32>
    %536 = arith.negf %535 : vector<8x16xf32>
    %537 = math.exp %536 : vector<8x16xf32>
    %cst_140 = arith.constant 1.000000e+00 : f32
    %538 = vector.broadcast %cst_140 : f32 to vector<8x16xf32>
    %539 = arith.addf %538, %537 : vector<8x16xf32>
    %540 = arith.divf %538, %539 : vector<8x16xf32>
    %541 = vector.extract_strided_slice %534 {offsets = [0, 16], sizes = [8, 16], strides = [1, 1]} : vector<8x64xf32> to vector<8x16xf32>
    %542 = arith.negf %541 : vector<8x16xf32>
    %543 = math.exp %542 : vector<8x16xf32>
    %cst_141 = arith.constant 1.000000e+00 : f32
    %544 = vector.broadcast %cst_141 : f32 to vector<8x16xf32>
    %545 = arith.addf %544, %543 : vector<8x16xf32>
    %546 = arith.divf %544, %545 : vector<8x16xf32>
    %547 = vector.extract_strided_slice %534 {offsets = [0, 32], sizes = [8, 16], strides = [1, 1]} : vector<8x64xf32> to vector<8x16xf32>
    %548 = math.tanh %547 : vector<8x16xf32>
    %549 = vector.extract_strided_slice %534 {offsets = [0, 48], sizes = [8, 16], strides = [1, 1]} : vector<8x64xf32> to vector<8x16xf32>
    %550 = arith.negf %549 : vector<8x16xf32>
    %551 = math.exp %550 : vector<8x16xf32>
    %cst_142 = arith.constant 1.000000e+00 : f32
    %552 = vector.broadcast %cst_142 : f32 to vector<8x16xf32>
    %553 = arith.addf %552, %551 : vector<8x16xf32>
    %554 = arith.divf %552, %553 : vector<8x16xf32>
    %555 = arith.mulf %546, %484 : vector<8x16xf32>
    %556 = arith.mulf %540, %548 : vector<8x16xf32>
    %557 = arith.addf %555, %556 : vector<8x16xf32>
    %558 = math.tanh %557 : vector<8x16xf32>
    %559 = arith.mulf %554, %558 : vector<8x16xf32>
    %560 = arith.index_cast %c7_i32_136 : i32 to index
    %c0_143 = arith.constant 0 : index
    %c0_144 = arith.constant 0 : index
    %561 = vector.load %arg13[%560, %c0_143, %c0_144] : memref<8x8x16xf32, #tpu.memory_space<vmem>>, vector<1x8x16xf32>
    %562 = vector.shape_cast %561 : vector<1x8x16xf32> to vector<8x16xf32>
    %563 = vector.shape_cast %559 : vector<8x16xf32> to vector<1x8x16xf32>
    tpu.vector_store %arg13[%560, %c0_143, %c0_144], %563 {strides = array<i32>} : memref<8x8x16xf32, #tpu.memory_space<vmem>>, vector<1x8x16xf32>,
    %c7_i32_145 = arith.constant 7 : i32
    %564 = arith.subi %c7_i32_145, %c7_i32_136 : i32
    %c8_i32_146 = arith.constant 8 : i32
    %565 = arith.muli %564, %c8_i32_146 : i32
    %566 = tpu.assume_multiple %565, 8 : i32
    %567 = arith.index_cast %566 : i32 to index
    %c0_147 = arith.constant 0 : index
    %568 = vector.load %arg12[%567, %c0_147] : memref<64x64xf32, #tpu.memory_space<vmem>>, vector<8x64xf32>
    %569 = arith.truncf %523 : vector<8x16xf32> to vector<8x16xbf16>
    %cst_148 = arith.constant dense<0.000000e+00> : vector<8x64xf32>
    %570 = tpu.matmul %569, %15, %cst_148 {dimension_numbers = #tpu.dot_dimension_numbers<[1], [0], [0], [1], [0, 0, 1, 1], [], []>} : vector<8x16xbf16>, vector<16x64xbf16>, vector<8x64xf32> -> vector<8x64xf32>
    %571 = arith.addf %568, %570 : vector<8x64xf32>
    %572 = vector.extract_strided_slice %571 {offsets = [0, 0], sizes = [8, 16], strides = [1, 1]} : vector<8x64xf32> to vector<8x16xf32>
    %573 = arith.negf %572 : vector<8x16xf32>
    %574 = math.exp %573 : vector<8x16xf32>
    %cst_149 = arith.constant 1.000000e+00 : f32
    %575 = vector.broadcast %cst_149 : f32 to vector<8x16xf32>
    %576 = arith.addf %575, %574 : vector<8x16xf32>
    %577 = arith.divf %575, %576 : vector<8x16xf32>
    %578 = vector.extract_strided_slice %571 {offsets = [0, 16], sizes = [8, 16], strides = [1, 1]} : vector<8x64xf32> to vector<8x16xf32>
    %579 = arith.negf %578 : vector<8x16xf32>
    %580 = math.exp %579 : vector<8x16xf32>
    %cst_150 = arith.constant 1.000000e+00 : f32
    %581 = vector.broadcast %cst_150 : f32 to vector<8x16xf32>
    %582 = arith.addf %581, %580 : vector<8x16xf32>
    %583 = arith.divf %581, %582 : vector<8x16xf32>
    %584 = vector.extract_strided_slice %571 {offsets = [0, 32], sizes = [8, 16], strides = [1, 1]} : vector<8x64xf32> to vector<8x16xf32>
    %585 = math.tanh %584 : vector<8x16xf32>
    %586 = vector.extract_strided_slice %571 {offsets = [0, 48], sizes = [8, 16], strides = [1, 1]} : vector<8x64xf32> to vector<8x16xf32>
    %587 = arith.negf %586 : vector<8x16xf32>
    %588 = math.exp %587 : vector<8x16xf32>
    %cst_151 = arith.constant 1.000000e+00 : f32
    %589 = vector.broadcast %cst_151 : f32 to vector<8x16xf32>
    %590 = arith.addf %589, %588 : vector<8x16xf32>
    %591 = arith.divf %589, %590 : vector<8x16xf32>
    %592 = arith.mulf %583, %521 : vector<8x16xf32>
    %593 = arith.mulf %577, %585 : vector<8x16xf32>
    %594 = arith.addf %592, %593 : vector<8x16xf32>
    %595 = math.tanh %594 : vector<8x16xf32>
    %596 = arith.mulf %591, %595 : vector<8x16xf32>
    %597 = arith.index_cast %564 : i32 to index
    %c0_152 = arith.constant 0 : index
    %c0_153 = arith.constant 0 : index
    %598 = vector.load %arg14[%597, %c0_152, %c0_153] : memref<8x8x16xf32, #tpu.memory_space<vmem>>, vector<1x8x16xf32>
    %599 = vector.shape_cast %598 : vector<1x8x16xf32> to vector<8x16xf32>
    %600 = vector.shape_cast %596 : vector<8x16xf32> to vector<1x8x16xf32>
    tpu.vector_store %arg14[%597, %c0_152, %c0_153], %600 {strides = array<i32>} : memref<8x8x16xf32, #tpu.memory_space<vmem>>, vector<1x8x16xf32>,
    %c8_i32_154 = arith.constant 8 : i32
    %c0_155 = arith.constant 0 : index
    %c0_156 = arith.constant 0 : index
    %601 = vector.load %arg7[%c0_155, %c0_156] : memref<32x64xbf16, #tpu.memory_space<vmem>>, vector<32x64xbf16>
    %602 = vector.extract_strided_slice %601 {offsets = [0, 0], sizes = [16, 64], strides = [1, 1]} : vector<32x64xbf16> to vector<16x64xbf16>
    %603 = vector.extract_strided_slice %601 {offsets = [16, 0], sizes = [16, 64], strides = [1, 1]} : vector<32x64xbf16> to vector<16x64xbf16>
    %c0_157 = arith.constant 0 : index
    %c0_158 = arith.constant 0 : index
    %604 = vector.load %arg8[%c0_157, %c0_158] : memref<16x64xbf16, #tpu.memory_space<vmem>>, vector<16x64xbf16>
    %c0_159 = arith.constant 0 : index
    %c0_160 = arith.constant 0 : index
    %605 = vector.load %arg9[%c0_159, %c0_160] : memref<1x64xf32, #tpu.memory_space<vmem>>, vector<1x64xf32>
    %c0_i32_161 = arith.constant 0 : i32
    %606 = arith.index_cast %c0_i32_161 : i32 to index
    %c0_162 = arith.constant 0 : index
    %c0_163 = arith.constant 0 : index
    %607 = vector.load %arg13[%606, %c0_162, %c0_163] : memref<8x8x16xf32, #tpu.memory_space<vmem>>, vector<1x8x16xf32>
    %608 = vector.shape_cast %607 : vector<1x8x16xf32> to vector<8x16xf32>
    %609 = arith.truncf %608 : vector<8x16xf32> to vector<8x16xbf16>
    %610 = arith.index_cast %c0_i32_161 : i32 to index
    %c0_164 = arith.constant 0 : index
    %c0_165 = arith.constant 0 : index
    %611 = vector.load %arg14[%610, %c0_164, %c0_165] : memref<8x8x16xf32, #tpu.memory_space<vmem>>, vector<1x8x16xf32>
    %612 = vector.shape_cast %611 : vector<1x8x16xf32> to vector<8x16xf32>
    %613 = arith.truncf %612 : vector<8x16xf32> to vector<8x16xbf16>
    %cst_166 = arith.constant dense<0.000000e+00> : vector<8x64xf32>
    %614 = tpu.matmul %609, %602, %cst_166 {dimension_numbers = #tpu.dot_dimension_numbers<[1], [0], [0], [1], [0, 0, 1, 1], [], []>} : vector<8x16xbf16>, vector<16x64xbf16>, vector<8x64xf32> -> vector<8x64xf32>
    %cst_167 = arith.constant dense<0.000000e+00> : vector<8x64xf32>
    %615 = tpu.matmul %613, %603, %cst_167 {dimension_numbers = #tpu.dot_dimension_numbers<[1], [0], [0], [1], [0, 0, 1, 1], [], []>} : vector<8x16xbf16>, vector<16x64xbf16>, vector<8x64xf32> -> vector<8x64xf32>
    %616 = arith.addf %614, %615 : vector<8x64xf32>
    %617 = vector.broadcast %605 : vector<1x64xf32> to vector<8x64xf32>
    %618 = arith.addf %616, %617 : vector<8x64xf32>
    %619 = arith.truncf %16 : vector<8x16xf32> to vector<8x16xbf16>
    %cst_168 = arith.constant dense<0.000000e+00> : vector<8x64xf32>
    %620 = tpu.matmul %619, %604, %cst_168 {dimension_numbers = #tpu.dot_dimension_numbers<[1], [0], [0], [1], [0, 0, 1, 1], [], []>} : vector<8x16xbf16>, vector<16x64xbf16>, vector<8x64xf32> -> vector<8x64xf32>
    %621 = arith.addf %618, %620 : vector<8x64xf32>
    %622 = vector.extract_strided_slice %621 {offsets = [0, 0], sizes = [8, 16], strides = [1, 1]} : vector<8x64xf32> to vector<8x16xf32>
    %623 = arith.negf %622 : vector<8x16xf32>
    %624 = math.exp %623 : vector<8x16xf32>
    %cst_169 = arith.constant 1.000000e+00 : f32
    %625 = vector.broadcast %cst_169 : f32 to vector<8x16xf32>
    %626 = arith.addf %625, %624 : vector<8x16xf32>
    %627 = arith.divf %625, %626 : vector<8x16xf32>
    %628 = vector.extract_strided_slice %621 {offsets = [0, 16], sizes = [8, 16], strides = [1, 1]} : vector<8x64xf32> to vector<8x16xf32>
    %629 = arith.negf %628 : vector<8x16xf32>
    %630 = math.exp %629 : vector<8x16xf32>
    %cst_170 = arith.constant 1.000000e+00 : f32
    %631 = vector.broadcast %cst_170 : f32 to vector<8x16xf32>
    %632 = arith.addf %631, %630 : vector<8x16xf32>
    %633 = arith.divf %631, %632 : vector<8x16xf32>
    %634 = vector.extract_strided_slice %621 {offsets = [0, 32], sizes = [8, 16], strides = [1, 1]} : vector<8x64xf32> to vector<8x16xf32>
    %635 = math.tanh %634 : vector<8x16xf32>
    %636 = vector.extract_strided_slice %621 {offsets = [0, 48], sizes = [8, 16], strides = [1, 1]} : vector<8x64xf32> to vector<8x16xf32>
    %637 = arith.negf %636 : vector<8x16xf32>
    %638 = math.exp %637 : vector<8x16xf32>
    %cst_171 = arith.constant 1.000000e+00 : f32
    %639 = vector.broadcast %cst_171 : f32 to vector<8x16xf32>
    %640 = arith.addf %639, %638 : vector<8x16xf32>
    %641 = arith.divf %639, %640 : vector<8x16xf32>
    %642 = arith.mulf %633, %16 : vector<8x16xf32>
    %643 = arith.mulf %627, %635 : vector<8x16xf32>
    %644 = arith.addf %642, %643 : vector<8x16xf32>
    %645 = math.tanh %644 : vector<8x16xf32>
    %646 = arith.mulf %641, %645 : vector<8x16xf32>
    %647 = arith.index_cast %c0_i32_161 : i32 to index
    %c0_172 = arith.constant 0 : index
    %c0_173 = arith.constant 0 : index
    %648 = vector.load %arg10[%647, %c0_172, %c0_173] : memref<8x8x16xf32, #tpu.memory_space<vmem>>, vector<1x8x16xf32>
    %649 = vector.shape_cast %648 : vector<1x8x16xf32> to vector<8x16xf32>
    %650 = vector.shape_cast %646 : vector<8x16xf32> to vector<1x8x16xf32>
    tpu.vector_store %arg10[%647, %c0_172, %c0_173], %650 {strides = array<i32>} : memref<8x8x16xf32, #tpu.memory_space<vmem>>, vector<1x8x16xf32>,
    %c1_i32_174 = arith.constant 1 : i32
    %651 = arith.index_cast %c1_i32_174 : i32 to index
    %c0_175 = arith.constant 0 : index
    %c0_176 = arith.constant 0 : index
    %652 = vector.load %arg13[%651, %c0_175, %c0_176] : memref<8x8x16xf32, #tpu.memory_space<vmem>>, vector<1x8x16xf32>
    %653 = vector.shape_cast %652 : vector<1x8x16xf32> to vector<8x16xf32>
    %654 = arith.truncf %653 : vector<8x16xf32> to vector<8x16xbf16>
    %655 = arith.index_cast %c1_i32_174 : i32 to index
    %c0_177 = arith.constant 0 : index
    %c0_178 = arith.constant 0 : index
    %656 = vector.load %arg14[%655, %c0_177, %c0_178] : memref<8x8x16xf32, #tpu.memory_space<vmem>>, vector<1x8x16xf32>
    %657 = vector.shape_cast %656 : vector<1x8x16xf32> to vector<8x16xf32>
    %658 = arith.truncf %657 : vector<8x16xf32> to vector<8x16xbf16>
    %cst_179 = arith.constant dense<0.000000e+00> : vector<8x64xf32>
    %659 = tpu.matmul %654, %602, %cst_179 {dimension_numbers = #tpu.dot_dimension_numbers<[1], [0], [0], [1], [0, 0, 1, 1], [], []>} : vector<8x16xbf16>, vector<16x64xbf16>, vector<8x64xf32> -> vector<8x64xf32>
    %cst_180 = arith.constant dense<0.000000e+00> : vector<8x64xf32>
    %660 = tpu.matmul %658, %603, %cst_180 {dimension_numbers = #tpu.dot_dimension_numbers<[1], [0], [0], [1], [0, 0, 1, 1], [], []>} : vector<8x16xbf16>, vector<16x64xbf16>, vector<8x64xf32> -> vector<8x64xf32>
    %661 = arith.addf %659, %660 : vector<8x64xf32>
    %662 = vector.broadcast %605 : vector<1x64xf32> to vector<8x64xf32>
    %663 = arith.addf %661, %662 : vector<8x64xf32>
    %664 = arith.truncf %646 : vector<8x16xf32> to vector<8x16xbf16>
    %cst_181 = arith.constant dense<0.000000e+00> : vector<8x64xf32>
    %665 = tpu.matmul %664, %604, %cst_181 {dimension_numbers = #tpu.dot_dimension_numbers<[1], [0], [0], [1], [0, 0, 1, 1], [], []>} : vector<8x16xbf16>, vector<16x64xbf16>, vector<8x64xf32> -> vector<8x64xf32>
    %666 = arith.addf %663, %665 : vector<8x64xf32>
    %667 = vector.extract_strided_slice %666 {offsets = [0, 0], sizes = [8, 16], strides = [1, 1]} : vector<8x64xf32> to vector<8x16xf32>
    %668 = arith.negf %667 : vector<8x16xf32>
    %669 = math.exp %668 : vector<8x16xf32>
    %cst_182 = arith.constant 1.000000e+00 : f32
    %670 = vector.broadcast %cst_182 : f32 to vector<8x16xf32>
    %671 = arith.addf %670, %669 : vector<8x16xf32>
    %672 = arith.divf %670, %671 : vector<8x16xf32>
    %673 = vector.extract_strided_slice %666 {offsets = [0, 16], sizes = [8, 16], strides = [1, 1]} : vector<8x64xf32> to vector<8x16xf32>
    %674 = arith.negf %673 : vector<8x16xf32>
    %675 = math.exp %674 : vector<8x16xf32>
    %cst_183 = arith.constant 1.000000e+00 : f32
    %676 = vector.broadcast %cst_183 : f32 to vector<8x16xf32>
    %677 = arith.addf %676, %675 : vector<8x16xf32>
    %678 = arith.divf %676, %677 : vector<8x16xf32>
    %679 = vector.extract_strided_slice %666 {offsets = [0, 32], sizes = [8, 16], strides = [1, 1]} : vector<8x64xf32> to vector<8x16xf32>
    %680 = math.tanh %679 : vector<8x16xf32>
    %681 = vector.extract_strided_slice %666 {offsets = [0, 48], sizes = [8, 16], strides = [1, 1]} : vector<8x64xf32> to vector<8x16xf32>
    %682 = arith.negf %681 : vector<8x16xf32>
    %683 = math.exp %682 : vector<8x16xf32>
    %cst_184 = arith.constant 1.000000e+00 : f32
    %684 = vector.broadcast %cst_184 : f32 to vector<8x16xf32>
    %685 = arith.addf %684, %683 : vector<8x16xf32>
    %686 = arith.divf %684, %685 : vector<8x16xf32>
    %687 = arith.mulf %678, %644 : vector<8x16xf32>
    %688 = arith.mulf %672, %680 : vector<8x16xf32>
    %689 = arith.addf %687, %688 : vector<8x16xf32>
    %690 = math.tanh %689 : vector<8x16xf32>
    %691 = arith.mulf %686, %690 : vector<8x16xf32>
    %692 = arith.index_cast %c1_i32_174 : i32 to index
    %c0_185 = arith.constant 0 : index
    %c0_186 = arith.constant 0 : index
    %693 = vector.load %arg10[%692, %c0_185, %c0_186] : memref<8x8x16xf32, #tpu.memory_space<vmem>>, vector<1x8x16xf32>
    %694 = vector.shape_cast %693 : vector<1x8x16xf32> to vector<8x16xf32>
    %695 = vector.shape_cast %691 : vector<8x16xf32> to vector<1x8x16xf32>
    tpu.vector_store %arg10[%692, %c0_185, %c0_186], %695 {strides = array<i32>} : memref<8x8x16xf32, #tpu.memory_space<vmem>>, vector<1x8x16xf32>,
    %c2_i32_187 = arith.constant 2 : i32
    %696 = arith.index_cast %c2_i32_187 : i32 to index
    %c0_188 = arith.constant 0 : index
    %c0_189 = arith.constant 0 : index
    %697 = vector.load %arg13[%696, %c0_188, %c0_189] : memref<8x8x16xf32, #tpu.memory_space<vmem>>, vector<1x8x16xf32>
    %698 = vector.shape_cast %697 : vector<1x8x16xf32> to vector<8x16xf32>
    %699 = arith.truncf %698 : vector<8x16xf32> to vector<8x16xbf16>
    %700 = arith.index_cast %c2_i32_187 : i32 to index
    %c0_190 = arith.constant 0 : index
    %c0_191 = arith.constant 0 : index
    %701 = vector.load %arg14[%700, %c0_190, %c0_191] : memref<8x8x16xf32, #tpu.memory_space<vmem>>, vector<1x8x16xf32>
    %702 = vector.shape_cast %701 : vector<1x8x16xf32> to vector<8x16xf32>
    %703 = arith.truncf %702 : vector<8x16xf32> to vector<8x16xbf16>
    %cst_192 = arith.constant dense<0.000000e+00> : vector<8x64xf32>
    %704 = tpu.matmul %699, %602, %cst_192 {dimension_numbers = #tpu.dot_dimension_numbers<[1], [0], [0], [1], [0, 0, 1, 1], [], []>} : vector<8x16xbf16>, vector<16x64xbf16>, vector<8x64xf32> -> vector<8x64xf32>
    %cst_193 = arith.constant dense<0.000000e+00> : vector<8x64xf32>
    %705 = tpu.matmul %703, %603, %cst_193 {dimension_numbers = #tpu.dot_dimension_numbers<[1], [0], [0], [1], [0, 0, 1, 1], [], []>} : vector<8x16xbf16>, vector<16x64xbf16>, vector<8x64xf32> -> vector<8x64xf32>
    %706 = arith.addf %704, %705 : vector<8x64xf32>
    %707 = vector.broadcast %605 : vector<1x64xf32> to vector<8x64xf32>
    %708 = arith.addf %706, %707 : vector<8x64xf32>
    %709 = arith.truncf %691 : vector<8x16xf32> to vector<8x16xbf16>
    %cst_194 = arith.constant dense<0.000000e+00> : vector<8x64xf32>
    %710 = tpu.matmul %709, %604, %cst_194 {dimension_numbers = #tpu.dot_dimension_numbers<[1], [0], [0], [1], [0, 0, 1, 1], [], []>} : vector<8x16xbf16>, vector<16x64xbf16>, vector<8x64xf32> -> vector<8x64xf32>
    %711 = arith.addf %708, %710 : vector<8x64xf32>
    %712 = vector.extract_strided_slice %711 {offsets = [0, 0], sizes = [8, 16], strides = [1, 1]} : vector<8x64xf32> to vector<8x16xf32>
    %713 = arith.negf %712 : vector<8x16xf32>
    %714 = math.exp %713 : vector<8x16xf32>
    %cst_195 = arith.constant 1.000000e+00 : f32
    %715 = vector.broadcast %cst_195 : f32 to vector<8x16xf32>
    %716 = arith.addf %715, %714 : vector<8x16xf32>
    %717 = arith.divf %715, %716 : vector<8x16xf32>
    %718 = vector.extract_strided_slice %711 {offsets = [0, 16], sizes = [8, 16], strides = [1, 1]} : vector<8x64xf32> to vector<8x16xf32>
    %719 = arith.negf %718 : vector<8x16xf32>
    %720 = math.exp %719 : vector<8x16xf32>
    %cst_196 = arith.constant 1.000000e+00 : f32
    %721 = vector.broadcast %cst_196 : f32 to vector<8x16xf32>
    %722 = arith.addf %721, %720 : vector<8x16xf32>
    %723 = arith.divf %721, %722 : vector<8x16xf32>
    %724 = vector.extract_strided_slice %711 {offsets = [0, 32], sizes = [8, 16], strides = [1, 1]} : vector<8x64xf32> to vector<8x16xf32>
    %725 = math.tanh %724 : vector<8x16xf32>
    %726 = vector.extract_strided_slice %711 {offsets = [0, 48], sizes = [8, 16], strides = [1, 1]} : vector<8x64xf32> to vector<8x16xf32>
    %727 = arith.negf %726 : vector<8x16xf32>
    %728 = math.exp %727 : vector<8x16xf32>
    %cst_197 = arith.constant 1.000000e+00 : f32
    %729 = vector.broadcast %cst_197 : f32 to vector<8x16xf32>
    %730 = arith.addf %729, %728 : vector<8x16xf32>
    %731 = arith.divf %729, %730 : vector<8x16xf32>
    %732 = arith.mulf %723, %689 : vector<8x16xf32>
    %733 = arith.mulf %717, %725 : vector<8x16xf32>
    %734 = arith.addf %732, %733 : vector<8x16xf32>
    %735 = math.tanh %734 : vector<8x16xf32>
    %736 = arith.mulf %731, %735 : vector<8x16xf32>
    %737 = arith.index_cast %c2_i32_187 : i32 to index
    %c0_198 = arith.constant 0 : index
    %c0_199 = arith.constant 0 : index
    %738 = vector.load %arg10[%737, %c0_198, %c0_199] : memref<8x8x16xf32, #tpu.memory_space<vmem>>, vector<1x8x16xf32>
    %739 = vector.shape_cast %738 : vector<1x8x16xf32> to vector<8x16xf32>
    %740 = vector.shape_cast %736 : vector<8x16xf32> to vector<1x8x16xf32>
    tpu.vector_store %arg10[%737, %c0_198, %c0_199], %740 {strides = array<i32>} : memref<8x8x16xf32, #tpu.memory_space<vmem>>, vector<1x8x16xf32>,
    %c3_i32_200 = arith.constant 3 : i32
    %741 = arith.index_cast %c3_i32_200 : i32 to index
    %c0_201 = arith.constant 0 : index
    %c0_202 = arith.constant 0 : index
    %742 = vector.load %arg13[%741, %c0_201, %c0_202] : memref<8x8x16xf32, #tpu.memory_space<vmem>>, vector<1x8x16xf32>
    %743 = vector.shape_cast %742 : vector<1x8x16xf32> to vector<8x16xf32>
    %744 = arith.truncf %743 : vector<8x16xf32> to vector<8x16xbf16>
    %745 = arith.index_cast %c3_i32_200 : i32 to index
    %c0_203 = arith.constant 0 : index
    %c0_204 = arith.constant 0 : index
    %746 = vector.load %arg14[%745, %c0_203, %c0_204] : memref<8x8x16xf32, #tpu.memory_space<vmem>>, vector<1x8x16xf32>
    %747 = vector.shape_cast %746 : vector<1x8x16xf32> to vector<8x16xf32>
    %748 = arith.truncf %747 : vector<8x16xf32> to vector<8x16xbf16>
    %cst_205 = arith.constant dense<0.000000e+00> : vector<8x64xf32>
    %749 = tpu.matmul %744, %602, %cst_205 {dimension_numbers = #tpu.dot_dimension_numbers<[1], [0], [0], [1], [0, 0, 1, 1], [], []>} : vector<8x16xbf16>, vector<16x64xbf16>, vector<8x64xf32> -> vector<8x64xf32>
    %cst_206 = arith.constant dense<0.000000e+00> : vector<8x64xf32>
    %750 = tpu.matmul %748, %603, %cst_206 {dimension_numbers = #tpu.dot_dimension_numbers<[1], [0], [0], [1], [0, 0, 1, 1], [], []>} : vector<8x16xbf16>, vector<16x64xbf16>, vector<8x64xf32> -> vector<8x64xf32>
    %751 = arith.addf %749, %750 : vector<8x64xf32>
    %752 = vector.broadcast %605 : vector<1x64xf32> to vector<8x64xf32>
    %753 = arith.addf %751, %752 : vector<8x64xf32>
    %754 = arith.truncf %736 : vector<8x16xf32> to vector<8x16xbf16>
    %cst_207 = arith.constant dense<0.000000e+00> : vector<8x64xf32>
    %755 = tpu.matmul %754, %604, %cst_207 {dimension_numbers = #tpu.dot_dimension_numbers<[1], [0], [0], [1], [0, 0, 1, 1], [], []>} : vector<8x16xbf16>, vector<16x64xbf16>, vector<8x64xf32> -> vector<8x64xf32>
    %756 = arith.addf %753, %755 : vector<8x64xf32>
    %757 = vector.extract_strided_slice %756 {offsets = [0, 0], sizes = [8, 16], strides = [1, 1]} : vector<8x64xf32> to vector<8x16xf32>
    %758 = arith.negf %757 : vector<8x16xf32>
    %759 = math.exp %758 : vector<8x16xf32>
    %cst_208 = arith.constant 1.000000e+00 : f32
    %760 = vector.broadcast %cst_208 : f32 to vector<8x16xf32>
    %761 = arith.addf %760, %759 : vector<8x16xf32>
    %762 = arith.divf %760, %761 : vector<8x16xf32>
    %763 = vector.extract_strided_slice %756 {offsets = [0, 16], sizes = [8, 16], strides = [1, 1]} : vector<8x64xf32> to vector<8x16xf32>
    %764 = arith.negf %763 : vector<8x16xf32>
    %765 = math.exp %764 : vector<8x16xf32>
    %cst_209 = arith.constant 1.000000e+00 : f32
    %766 = vector.broadcast %cst_209 : f32 to vector<8x16xf32>
    %767 = arith.addf %766, %765 : vector<8x16xf32>
    %768 = arith.divf %766, %767 : vector<8x16xf32>
    %769 = vector.extract_strided_slice %756 {offsets = [0, 32], sizes = [8, 16], strides = [1, 1]} : vector<8x64xf32> to vector<8x16xf32>
    %770 = math.tanh %769 : vector<8x16xf32>
    %771 = vector.extract_strided_slice %756 {offsets = [0, 48], sizes = [8, 16], strides = [1, 1]} : vector<8x64xf32> to vector<8x16xf32>
    %772 = arith.negf %771 : vector<8x16xf32>
    %773 = math.exp %772 : vector<8x16xf32>
    %cst_210 = arith.constant 1.000000e+00 : f32
    %774 = vector.broadcast %cst_210 : f32 to vector<8x16xf32>
    %775 = arith.addf %774, %773 : vector<8x16xf32>
    %776 = arith.divf %774, %775 : vector<8x16xf32>
    %777 = arith.mulf %768, %734 : vector<8x16xf32>
    %778 = arith.mulf %762, %770 : vector<8x16xf32>
    %779 = arith.addf %777, %778 : vector<8x16xf32>
    %780 = math.tanh %779 : vector<8x16xf32>
    %781 = arith.mulf %776, %780 : vector<8x16xf32>
    %782 = arith.index_cast %c3_i32_200 : i32 to index
    %c0_211 = arith.constant 0 : index
    %c0_212 = arith.constant 0 : index
    %783 = vector.load %arg10[%782, %c0_211, %c0_212] : memref<8x8x16xf32, #tpu.memory_space<vmem>>, vector<1x8x16xf32>
    %784 = vector.shape_cast %783 : vector<1x8x16xf32> to vector<8x16xf32>
    %785 = vector.shape_cast %781 : vector<8x16xf32> to vector<1x8x16xf32>
    tpu.vector_store %arg10[%782, %c0_211, %c0_212], %785 {strides = array<i32>} : memref<8x8x16xf32, #tpu.memory_space<vmem>>, vector<1x8x16xf32>,
    %c4_i32_213 = arith.constant 4 : i32
    %786 = arith.index_cast %c4_i32_213 : i32 to index
    %c0_214 = arith.constant 0 : index
    %c0_215 = arith.constant 0 : index
    %787 = vector.load %arg13[%786, %c0_214, %c0_215] : memref<8x8x16xf32, #tpu.memory_space<vmem>>, vector<1x8x16xf32>
    %788 = vector.shape_cast %787 : vector<1x8x16xf32> to vector<8x16xf32>
    %789 = arith.truncf %788 : vector<8x16xf32> to vector<8x16xbf16>
    %790 = arith.index_cast %c4_i32_213 : i32 to index
    %c0_216 = arith.constant 0 : index
    %c0_217 = arith.constant 0 : index
    %791 = vector.load %arg14[%790, %c0_216, %c0_217] : memref<8x8x16xf32, #tpu.memory_space<vmem>>, vector<1x8x16xf32>
    %792 = vector.shape_cast %791 : vector<1x8x16xf32> to vector<8x16xf32>
    %793 = arith.truncf %792 : vector<8x16xf32> to vector<8x16xbf16>
    %cst_218 = arith.constant dense<0.000000e+00> : vector<8x64xf32>
    %794 = tpu.matmul %789, %602, %cst_218 {dimension_numbers = #tpu.dot_dimension_numbers<[1], [0], [0], [1], [0, 0, 1, 1], [], []>} : vector<8x16xbf16>, vector<16x64xbf16>, vector<8x64xf32> -> vector<8x64xf32>
    %cst_219 = arith.constant dense<0.000000e+00> : vector<8x64xf32>
    %795 = tpu.matmul %793, %603, %cst_219 {dimension_numbers = #tpu.dot_dimension_numbers<[1], [0], [0], [1], [0, 0, 1, 1], [], []>} : vector<8x16xbf16>, vector<16x64xbf16>, vector<8x64xf32> -> vector<8x64xf32>
    %796 = arith.addf %794, %795 : vector<8x64xf32>
    %797 = vector.broadcast %605 : vector<1x64xf32> to vector<8x64xf32>
    %798 = arith.addf %796, %797 : vector<8x64xf32>
    %799 = arith.truncf %781 : vector<8x16xf32> to vector<8x16xbf16>
    %cst_220 = arith.constant dense<0.000000e+00> : vector<8x64xf32>
    %800 = tpu.matmul %799, %604, %cst_220 {dimension_numbers = #tpu.dot_dimension_numbers<[1], [0], [0], [1], [0, 0, 1, 1], [], []>} : vector<8x16xbf16>, vector<16x64xbf16>, vector<8x64xf32> -> vector<8x64xf32>
    %801 = arith.addf %798, %800 : vector<8x64xf32>
    %802 = vector.extract_strided_slice %801 {offsets = [0, 0], sizes = [8, 16], strides = [1, 1]} : vector<8x64xf32> to vector<8x16xf32>
    %803 = arith.negf %802 : vector<8x16xf32>
    %804 = math.exp %803 : vector<8x16xf32>
    %cst_221 = arith.constant 1.000000e+00 : f32
    %805 = vector.broadcast %cst_221 : f32 to vector<8x16xf32>
    %806 = arith.addf %805, %804 : vector<8x16xf32>
    %807 = arith.divf %805, %806 : vector<8x16xf32>
    %808 = vector.extract_strided_slice %801 {offsets = [0, 16], sizes = [8, 16], strides = [1, 1]} : vector<8x64xf32> to vector<8x16xf32>
    %809 = arith.negf %808 : vector<8x16xf32>
    %810 = math.exp %809 : vector<8x16xf32>
    %cst_222 = arith.constant 1.000000e+00 : f32
    %811 = vector.broadcast %cst_222 : f32 to vector<8x16xf32>
    %812 = arith.addf %811, %810 : vector<8x16xf32>
    %813 = arith.divf %811, %812 : vector<8x16xf32>
    %814 = vector.extract_strided_slice %801 {offsets = [0, 32], sizes = [8, 16], strides = [1, 1]} : vector<8x64xf32> to vector<8x16xf32>
    %815 = math.tanh %814 : vector<8x16xf32>
    %816 = vector.extract_strided_slice %801 {offsets = [0, 48], sizes = [8, 16], strides = [1, 1]} : vector<8x64xf32> to vector<8x16xf32>
    %817 = arith.negf %816 : vector<8x16xf32>
    %818 = math.exp %817 : vector<8x16xf32>
    %cst_223 = arith.constant 1.000000e+00 : f32
    %819 = vector.broadcast %cst_223 : f32 to vector<8x16xf32>
    %820 = arith.addf %819, %818 : vector<8x16xf32>
    %821 = arith.divf %819, %820 : vector<8x16xf32>
    %822 = arith.mulf %813, %779 : vector<8x16xf32>
    %823 = arith.mulf %807, %815 : vector<8x16xf32>
    %824 = arith.addf %822, %823 : vector<8x16xf32>
    %825 = math.tanh %824 : vector<8x16xf32>
    %826 = arith.mulf %821, %825 : vector<8x16xf32>
    %827 = arith.index_cast %c4_i32_213 : i32 to index
    %c0_224 = arith.constant 0 : index
    %c0_225 = arith.constant 0 : index
    %828 = vector.load %arg10[%827, %c0_224, %c0_225] : memref<8x8x16xf32, #tpu.memory_space<vmem>>, vector<1x8x16xf32>
    %829 = vector.shape_cast %828 : vector<1x8x16xf32> to vector<8x16xf32>
    %830 = vector.shape_cast %826 : vector<8x16xf32> to vector<1x8x16xf32>
    tpu.vector_store %arg10[%827, %c0_224, %c0_225], %830 {strides = array<i32>} : memref<8x8x16xf32, #tpu.memory_space<vmem>>, vector<1x8x16xf32>,
    %c5_i32_226 = arith.constant 5 : i32
    %831 = arith.index_cast %c5_i32_226 : i32 to index
    %c0_227 = arith.constant 0 : index
    %c0_228 = arith.constant 0 : index
    %832 = vector.load %arg13[%831, %c0_227, %c0_228] : memref<8x8x16xf32, #tpu.memory_space<vmem>>, vector<1x8x16xf32>
    %833 = vector.shape_cast %832 : vector<1x8x16xf32> to vector<8x16xf32>
    %834 = arith.truncf %833 : vector<8x16xf32> to vector<8x16xbf16>
    %835 = arith.index_cast %c5_i32_226 : i32 to index
    %c0_229 = arith.constant 0 : index
    %c0_230 = arith.constant 0 : index
    %836 = vector.load %arg14[%835, %c0_229, %c0_230] : memref<8x8x16xf32, #tpu.memory_space<vmem>>, vector<1x8x16xf32>
    %837 = vector.shape_cast %836 : vector<1x8x16xf32> to vector<8x16xf32>
    %838 = arith.truncf %837 : vector<8x16xf32> to vector<8x16xbf16>
    %cst_231 = arith.constant dense<0.000000e+00> : vector<8x64xf32>
    %839 = tpu.matmul %834, %602, %cst_231 {dimension_numbers = #tpu.dot_dimension_numbers<[1], [0], [0], [1], [0, 0, 1, 1], [], []>} : vector<8x16xbf16>, vector<16x64xbf16>, vector<8x64xf32> -> vector<8x64xf32>
    %cst_232 = arith.constant dense<0.000000e+00> : vector<8x64xf32>
    %840 = tpu.matmul %838, %603, %cst_232 {dimension_numbers = #tpu.dot_dimension_numbers<[1], [0], [0], [1], [0, 0, 1, 1], [], []>} : vector<8x16xbf16>, vector<16x64xbf16>, vector<8x64xf32> -> vector<8x64xf32>
    %841 = arith.addf %839, %840 : vector<8x64xf32>
    %842 = vector.broadcast %605 : vector<1x64xf32> to vector<8x64xf32>
    %843 = arith.addf %841, %842 : vector<8x64xf32>
    %844 = arith.truncf %826 : vector<8x16xf32> to vector<8x16xbf16>
    %cst_233 = arith.constant dense<0.000000e+00> : vector<8x64xf32>
    %845 = tpu.matmul %844, %604, %cst_233 {dimension_numbers = #tpu.dot_dimension_numbers<[1], [0], [0], [1], [0, 0, 1, 1], [], []>} : vector<8x16xbf16>, vector<16x64xbf16>, vector<8x64xf32> -> vector<8x64xf32>
    %846 = arith.addf %843, %845 : vector<8x64xf32>
    %847 = vector.extract_strided_slice %846 {offsets = [0, 0], sizes = [8, 16], strides = [1, 1]} : vector<8x64xf32> to vector<8x16xf32>
    %848 = arith.negf %847 : vector<8x16xf32>
    %849 = math.exp %848 : vector<8x16xf32>
    %cst_234 = arith.constant 1.000000e+00 : f32
    %850 = vector.broadcast %cst_234 : f32 to vector<8x16xf32>
    %851 = arith.addf %850, %849 : vector<8x16xf32>
    %852 = arith.divf %850, %851 : vector<8x16xf32>
    %853 = vector.extract_strided_slice %846 {offsets = [0, 16], sizes = [8, 16], strides = [1, 1]} : vector<8x64xf32> to vector<8x16xf32>
    %854 = arith.negf %853 : vector<8x16xf32>
    %855 = math.exp %854 : vector<8x16xf32>
    %cst_235 = arith.constant 1.000000e+00 : f32
    %856 = vector.broadcast %cst_235 : f32 to vector<8x16xf32>
    %857 = arith.addf %856, %855 : vector<8x16xf32>
    %858 = arith.divf %856, %857 : vector<8x16xf32>
    %859 = vector.extract_strided_slice %846 {offsets = [0, 32], sizes = [8, 16], strides = [1, 1]} : vector<8x64xf32> to vector<8x16xf32>
    %860 = math.tanh %859 : vector<8x16xf32>
    %861 = vector.extract_strided_slice %846 {offsets = [0, 48], sizes = [8, 16], strides = [1, 1]} : vector<8x64xf32> to vector<8x16xf32>
    %862 = arith.negf %861 : vector<8x16xf32>
    %863 = math.exp %862 : vector<8x16xf32>
    %cst_236 = arith.constant 1.000000e+00 : f32
    %864 = vector.broadcast %cst_236 : f32 to vector<8x16xf32>
    %865 = arith.addf %864, %863 : vector<8x16xf32>
    %866 = arith.divf %864, %865 : vector<8x16xf32>
    %867 = arith.mulf %858, %824 : vector<8x16xf32>
    %868 = arith.mulf %852, %860 : vector<8x16xf32>
    %869 = arith.addf %867, %868 : vector<8x16xf32>
    %870 = math.tanh %869 : vector<8x16xf32>
    %871 = arith.mulf %866, %870 : vector<8x16xf32>
    %872 = arith.index_cast %c5_i32_226 : i32 to index
    %c0_237 = arith.constant 0 : index
    %c0_238 = arith.constant 0 : index
    %873 = vector.load %arg10[%872, %c0_237, %c0_238] : memref<8x8x16xf32, #tpu.memory_space<vmem>>, vector<1x8x16xf32>
    %874 = vector.shape_cast %873 : vector<1x8x16xf32> to vector<8x16xf32>
    %875 = vector.shape_cast %871 : vector<8x16xf32> to vector<1x8x16xf32>
    tpu.vector_store %arg10[%872, %c0_237, %c0_238], %875 {strides = array<i32>} : memref<8x8x16xf32, #tpu.memory_space<vmem>>, vector<1x8x16xf32>,
    %c6_i32_239 = arith.constant 6 : i32
    %876 = arith.index_cast %c6_i32_239 : i32 to index
    %c0_240 = arith.constant 0 : index
    %c0_241 = arith.constant 0 : index
    %877 = vector.load %arg13[%876, %c0_240, %c0_241] : memref<8x8x16xf32, #tpu.memory_space<vmem>>, vector<1x8x16xf32>
    %878 = vector.shape_cast %877 : vector<1x8x16xf32> to vector<8x16xf32>
    %879 = arith.truncf %878 : vector<8x16xf32> to vector<8x16xbf16>
    %880 = arith.index_cast %c6_i32_239 : i32 to index
    %c0_242 = arith.constant 0 : index
    %c0_243 = arith.constant 0 : index
    %881 = vector.load %arg14[%880, %c0_242, %c0_243] : memref<8x8x16xf32, #tpu.memory_space<vmem>>, vector<1x8x16xf32>
    %882 = vector.shape_cast %881 : vector<1x8x16xf32> to vector<8x16xf32>
    %883 = arith.truncf %882 : vector<8x16xf32> to vector<8x16xbf16>
    %cst_244 = arith.constant dense<0.000000e+00> : vector<8x64xf32>
    %884 = tpu.matmul %879, %602, %cst_244 {dimension_numbers = #tpu.dot_dimension_numbers<[1], [0], [0], [1], [0, 0, 1, 1], [], []>} : vector<8x16xbf16>, vector<16x64xbf16>, vector<8x64xf32> -> vector<8x64xf32>
    %cst_245 = arith.constant dense<0.000000e+00> : vector<8x64xf32>
    %885 = tpu.matmul %883, %603, %cst_245 {dimension_numbers = #tpu.dot_dimension_numbers<[1], [0], [0], [1], [0, 0, 1, 1], [], []>} : vector<8x16xbf16>, vector<16x64xbf16>, vector<8x64xf32> -> vector<8x64xf32>
    %886 = arith.addf %884, %885 : vector<8x64xf32>
    %887 = vector.broadcast %605 : vector<1x64xf32> to vector<8x64xf32>
    %888 = arith.addf %886, %887 : vector<8x64xf32>
    %889 = arith.truncf %871 : vector<8x16xf32> to vector<8x16xbf16>
    %cst_246 = arith.constant dense<0.000000e+00> : vector<8x64xf32>
    %890 = tpu.matmul %889, %604, %cst_246 {dimension_numbers = #tpu.dot_dimension_numbers<[1], [0], [0], [1], [0, 0, 1, 1], [], []>} : vector<8x16xbf16>, vector<16x64xbf16>, vector<8x64xf32> -> vector<8x64xf32>
    %891 = arith.addf %888, %890 : vector<8x64xf32>
    %892 = vector.extract_strided_slice %891 {offsets = [0, 0], sizes = [8, 16], strides = [1, 1]} : vector<8x64xf32> to vector<8x16xf32>
    %893 = arith.negf %892 : vector<8x16xf32>
    %894 = math.exp %893 : vector<8x16xf32>
    %cst_247 = arith.constant 1.000000e+00 : f32
    %895 = vector.broadcast %cst_247 : f32 to vector<8x16xf32>
    %896 = arith.addf %895, %894 : vector<8x16xf32>
    %897 = arith.divf %895, %896 : vector<8x16xf32>
    %898 = vector.extract_strided_slice %891 {offsets = [0, 16], sizes = [8, 16], strides = [1, 1]} : vector<8x64xf32> to vector<8x16xf32>
    %899 = arith.negf %898 : vector<8x16xf32>
    %900 = math.exp %899 : vector<8x16xf32>
    %cst_248 = arith.constant 1.000000e+00 : f32
    %901 = vector.broadcast %cst_248 : f32 to vector<8x16xf32>
    %902 = arith.addf %901, %900 : vector<8x16xf32>
    %903 = arith.divf %901, %902 : vector<8x16xf32>
    %904 = vector.extract_strided_slice %891 {offsets = [0, 32], sizes = [8, 16], strides = [1, 1]} : vector<8x64xf32> to vector<8x16xf32>
    %905 = math.tanh %904 : vector<8x16xf32>
    %906 = vector.extract_strided_slice %891 {offsets = [0, 48], sizes = [8, 16], strides = [1, 1]} : vector<8x64xf32> to vector<8x16xf32>
    %907 = arith.negf %906 : vector<8x16xf32>
    %908 = math.exp %907 : vector<8x16xf32>
    %cst_249 = arith.constant 1.000000e+00 : f32
    %909 = vector.broadcast %cst_249 : f32 to vector<8x16xf32>
    %910 = arith.addf %909, %908 : vector<8x16xf32>
    %911 = arith.divf %909, %910 : vector<8x16xf32>
    %912 = arith.mulf %903, %869 : vector<8x16xf32>
    %913 = arith.mulf %897, %905 : vector<8x16xf32>
    %914 = arith.addf %912, %913 : vector<8x16xf32>
    %915 = math.tanh %914 : vector<8x16xf32>
    %916 = arith.mulf %911, %915 : vector<8x16xf32>
    %917 = arith.index_cast %c6_i32_239 : i32 to index
    %c0_250 = arith.constant 0 : index
    %c0_251 = arith.constant 0 : index
    %918 = vector.load %arg10[%917, %c0_250, %c0_251] : memref<8x8x16xf32, #tpu.memory_space<vmem>>, vector<1x8x16xf32>
    %919 = vector.shape_cast %918 : vector<1x8x16xf32> to vector<8x16xf32>
    %920 = vector.shape_cast %916 : vector<8x16xf32> to vector<1x8x16xf32>
    tpu.vector_store %arg10[%917, %c0_250, %c0_251], %920 {strides = array<i32>} : memref<8x8x16xf32, #tpu.memory_space<vmem>>, vector<1x8x16xf32>,
    %c7_i32_252 = arith.constant 7 : i32
    %921 = arith.index_cast %c7_i32_252 : i32 to index
    %c0_253 = arith.constant 0 : index
    %c0_254 = arith.constant 0 : index
    %922 = vector.load %arg13[%921, %c0_253, %c0_254] : memref<8x8x16xf32, #tpu.memory_space<vmem>>, vector<1x8x16xf32>
    %923 = vector.shape_cast %922 : vector<1x8x16xf32> to vector<8x16xf32>
    %924 = arith.truncf %923 : vector<8x16xf32> to vector<8x16xbf16>
    %925 = arith.index_cast %c7_i32_252 : i32 to index
    %c0_255 = arith.constant 0 : index
    %c0_256 = arith.constant 0 : index
    %926 = vector.load %arg14[%925, %c0_255, %c0_256] : memref<8x8x16xf32, #tpu.memory_space<vmem>>, vector<1x8x16xf32>
    %927 = vector.shape_cast %926 : vector<1x8x16xf32> to vector<8x16xf32>
    %928 = arith.truncf %927 : vector<8x16xf32> to vector<8x16xbf16>
    %cst_257 = arith.constant dense<0.000000e+00> : vector<8x64xf32>
    %929 = tpu.matmul %924, %602, %cst_257 {dimension_numbers = #tpu.dot_dimension_numbers<[1], [0], [0], [1], [0, 0, 1, 1], [], []>} : vector<8x16xbf16>, vector<16x64xbf16>, vector<8x64xf32> -> vector<8x64xf32>
    %cst_258 = arith.constant dense<0.000000e+00> : vector<8x64xf32>
    %930 = tpu.matmul %928, %603, %cst_258 {dimension_numbers = #tpu.dot_dimension_numbers<[1], [0], [0], [1], [0, 0, 1, 1], [], []>} : vector<8x16xbf16>, vector<16x64xbf16>, vector<8x64xf32> -> vector<8x64xf32>
    %931 = arith.addf %929, %930 : vector<8x64xf32>
    %932 = vector.broadcast %605 : vector<1x64xf32> to vector<8x64xf32>
    %933 = arith.addf %931, %932 : vector<8x64xf32>
    %934 = arith.truncf %916 : vector<8x16xf32> to vector<8x16xbf16>
    %cst_259 = arith.constant dense<0.000000e+00> : vector<8x64xf32>
    %935 = tpu.matmul %934, %604, %cst_259 {dimension_numbers = #tpu.dot_dimension_numbers<[1], [0], [0], [1], [0, 0, 1, 1], [], []>} : vector<8x16xbf16>, vector<16x64xbf16>, vector<8x64xf32> -> vector<8x64xf32>
    %936 = arith.addf %933, %935 : vector<8x64xf32>
    %937 = vector.extract_strided_slice %936 {offsets = [0, 0], sizes = [8, 16], strides = [1, 1]} : vector<8x64xf32> to vector<8x16xf32>
    %938 = arith.negf %937 : vector<8x16xf32>
    %939 = math.exp %938 : vector<8x16xf32>
    %cst_260 = arith.constant 1.000000e+00 : f32
    %940 = vector.broadcast %cst_260 : f32 to vector<8x16xf32>
    %941 = arith.addf %940, %939 : vector<8x16xf32>
    %942 = arith.divf %940, %941 : vector<8x16xf32>
    %943 = vector.extract_strided_slice %936 {offsets = [0, 16], sizes = [8, 16], strides = [1, 1]} : vector<8x64xf32> to vector<8x16xf32>
    %944 = arith.negf %943 : vector<8x16xf32>
    %945 = math.exp %944 : vector<8x16xf32>
    %cst_261 = arith.constant 1.000000e+00 : f32
    %946 = vector.broadcast %cst_261 : f32 to vector<8x16xf32>
    %947 = arith.addf %946, %945 : vector<8x16xf32>
    %948 = arith.divf %946, %947 : vector<8x16xf32>
    %949 = vector.extract_strided_slice %936 {offsets = [0, 32], sizes = [8, 16], strides = [1, 1]} : vector<8x64xf32> to vector<8x16xf32>
    %950 = math.tanh %949 : vector<8x16xf32>
    %951 = vector.extract_strided_slice %936 {offsets = [0, 48], sizes = [8, 16], strides = [1, 1]} : vector<8x64xf32> to vector<8x16xf32>
    %952 = arith.negf %951 : vector<8x16xf32>
    %953 = math.exp %952 : vector<8x16xf32>
    %cst_262 = arith.constant 1.000000e+00 : f32
    %954 = vector.broadcast %cst_262 : f32 to vector<8x16xf32>
    %955 = arith.addf %954, %953 : vector<8x16xf32>
    %956 = arith.divf %954, %955 : vector<8x16xf32>
    %957 = arith.mulf %948, %914 : vector<8x16xf32>
    %958 = arith.mulf %942, %950 : vector<8x16xf32>
    %959 = arith.addf %957, %958 : vector<8x16xf32>
    %960 = math.tanh %959 : vector<8x16xf32>
    %961 = arith.mulf %956, %960 : vector<8x16xf32>
    %962 = arith.index_cast %c7_i32_252 : i32 to index
    %c0_263 = arith.constant 0 : index
    %c0_264 = arith.constant 0 : index
    %963 = vector.load %arg10[%962, %c0_263, %c0_264] : memref<8x8x16xf32, #tpu.memory_space<vmem>>, vector<1x8x16xf32>
    %964 = vector.shape_cast %963 : vector<1x8x16xf32> to vector<8x16xf32>
    %965 = vector.shape_cast %961 : vector<8x16xf32> to vector<1x8x16xf32>
    tpu.vector_store %arg10[%962, %c0_263, %c0_264], %965 {strides = array<i32>} : memref<8x8x16xf32, #tpu.memory_space<vmem>>, vector<1x8x16xf32>,
    %c8_i32_265 = arith.constant 8 : i32
    return
  }
}

module attributes {stable_mosaic.version = 11 : i64} {
  func.func @_mlp_kernel(%arg0: memref<2x128xf32, #tpu.memory_space<vmem>>, %arg1: memref<128x8xbf16, #tpu.memory_space<vmem>>, %arg2: memref<1x8xf32, #tpu.memory_space<vmem>>, %arg3: memref<2x8xf32, #tpu.memory_space<vmem>>) attributes {dimension_semantics = [], scalar_prefetch = 0 : i64, scratch_operands = 0 : i64, tpu.core_type = #tpu.core_type<tc>} {
    %c0 = arith.constant 0 : index
    %c0_0 = arith.constant 0 : index
    %0 = vector.load %arg0[%c0, %c0_0] : memref<2x128xf32, #tpu.memory_space<vmem>>, vector<2x128xf32>
    %c0_1 = arith.constant 0 : index
    %c0_2 = arith.constant 0 : index
    %1 = vector.load %arg1[%c0_1, %c0_2] : memref<128x8xbf16, #tpu.memory_space<vmem>>, vector<128x8xbf16>
    %c0_3 = arith.constant 0 : index
    %c0_4 = arith.constant 0 : index
    %2 = vector.load %arg2[%c0_3, %c0_4] : memref<1x8xf32, #tpu.memory_space<vmem>>, vector<1x8xf32>
    %3 = arith.truncf %0 : vector<2x128xf32> to vector<2x128xbf16>
    %cst = arith.constant dense<0.000000e+00> : vector<2x8xf32>
    %4 = tpu.matmul %3, %1, %cst {dimension_numbers = #tpu.dot_dimension_numbers<[1], [0], [0], [1], [0, 0, 1, 1], [], []>} : vector<2x128xbf16>, vector<128x8xbf16>, vector<2x8xf32> -> vector<2x8xf32>
    %5 = vector.broadcast %2 : vector<1x8xf32> to vector<2x8xf32>
    %6 = arith.addf %4, %5 : vector<2x8xf32>
    %c0_5 = arith.constant 0 : index
    %c0_6 = arith.constant 0 : index
    %7 = vector.load %arg3[%c0_5, %c0_6] : memref<2x8xf32, #tpu.memory_space<vmem>>, vector<2x8xf32>
    tpu.vector_store %arg3[%c0_5, %c0_6], %6 {strides = array<i32>} : memref<2x8xf32, #tpu.memory_space<vmem>>, vector<2x8xf32>,
    return
  }
}

module attributes {stable_mosaic.version = 11 : i64} {
  func.func @_attn_kernel(%arg0: i32, %arg1: memref<1x8x16xf32, #tpu.memory_space<vmem>>, %arg2: memref<16x192xbf16, #tpu.memory_space<vmem>>, %arg3: memref<16x192xbf16, #tpu.memory_space<vmem>>, %arg4: memref<16x192xbf16, #tpu.memory_space<vmem>>, %arg5: memref<192x16xbf16, #tpu.memory_space<vmem>>, %arg6: memref<1x16xf32, #tpu.memory_space<vmem>>, %arg7: memref<1x16xf32, #tpu.memory_space<vmem>>, %arg8: memref<1x16xf32, #tpu.memory_space<vmem>>, %arg9: memref<1x8x16xf32, #tpu.memory_space<vmem>>) attributes {dimension_semantics = [#tpu.dimension_semantics<parallel>], iteration_bounds = array<i64: 2>, scalar_prefetch = 0 : i64, scratch_operands = 0 : i64, tpu.core_type = #tpu.core_type<tc>, window_params = [{transform_indices = @transform_0, window_bounds = array<i64: 1, 8, 16>}, {pipeline_mode = #tpu.pipeline_mode<synchronous>, transform_indices = @transform_1, window_bounds = array<i64: 16, 192>}, {pipeline_mode = #tpu.pipeline_mode<synchronous>, transform_indices = @transform_2, window_bounds = array<i64: 16, 192>}, {pipeline_mode = #tpu.pipeline_mode<synchronous>, transform_indices = @transform_3, window_bounds = array<i64: 16, 192>}, {pipeline_mode = #tpu.pipeline_mode<synchronous>, transform_indices = @transform_4, window_bounds = array<i64: 192, 16>}, {pipeline_mode = #tpu.pipeline_mode<synchronous>, transform_indices = @transform_5, window_bounds = array<i64: 1, 16>}, {pipeline_mode = #tpu.pipeline_mode<synchronous>, transform_indices = @transform_6, window_bounds = array<i64: 1, 16>}, {pipeline_mode = #tpu.pipeline_mode<synchronous>, transform_indices = @transform_7, window_bounds = array<i64: 1, 16>}, {transform_indices = @transform_8, window_bounds = array<i64: 1, 8, 16>}]} {
    %c0 = arith.constant 0 : index
    %c0_0 = arith.constant 0 : index
    %c0_1 = arith.constant 0 : index
    %0 = vector.load %arg1[%c0, %c0_0, %c0_1] : memref<1x8x16xf32, #tpu.memory_space<vmem>>, vector<1x8x16xf32>
    %1 = vector.shape_cast %0 : vector<1x8x16xf32> to vector<8x16xf32>
    %2 = arith.truncf %1 : vector<8x16xf32> to vector<8x16xbf16>
    %c0_2 = arith.constant 0 : index
    %c0_3 = arith.constant 0 : index
    %3 = vector.load %arg2[%c0_2, %c0_3] : memref<16x192xbf16, #tpu.memory_space<vmem>>, vector<16x192xbf16>
    %cst = arith.constant dense<0.000000e+00> : vector<8x192xf32>
    %4 = tpu.matmul %2, %3, %cst {dimension_numbers = #tpu.dot_dimension_numbers<[1], [0], [0], [1], [0, 0, 1, 1], [], []>} : vector<8x16xbf16>, vector<16x192xbf16>, vector<8x192xf32> -> vector<8x192xf32>
    %c0_4 = arith.constant 0 : index
    %c0_5 = arith.constant 0 : index
    %5 = vector.load %arg3[%c0_4, %c0_5] : memref<16x192xbf16, #tpu.memory_space<vmem>>, vector<16x192xbf16>
    %cst_6 = arith.constant dense<0.000000e+00> : vector<8x192xf32>
    %6 = tpu.matmul %2, %5, %cst_6 {dimension_numbers = #tpu.dot_dimension_numbers<[1], [0], [0], [1], [0, 0, 1, 1], [], []>} : vector<8x16xbf16>, vector<16x192xbf16>, vector<8x192xf32> -> vector<8x192xf32>
    %c0_7 = arith.constant 0 : index
    %c0_8 = arith.constant 0 : index
    %7 = vector.load %arg4[%c0_7, %c0_8] : memref<16x192xbf16, #tpu.memory_space<vmem>>, vector<16x192xbf16>
    %cst_9 = arith.constant dense<0.000000e+00> : vector<8x192xf32>
    %8 = tpu.matmul %2, %7, %cst_9 {dimension_numbers = #tpu.dot_dimension_numbers<[1], [0], [0], [1], [0, 0, 1, 1], [], []>} : vector<8x16xbf16>, vector<16x192xbf16>, vector<8x192xf32> -> vector<8x192xf32>
    %c0_10 = arith.constant 0 : index
    %c0_11 = arith.constant 0 : index
    %9 = vector.load %arg5[%c0_10, %c0_11] : memref<192x16xbf16, #tpu.memory_space<vmem>>, vector<192x16xbf16>
    %cst_12 = arith.constant 0.000000e+00 : f32
    %10 = vector.broadcast %cst_12 : f32 to vector<8x16xf32>
    %11 = vector.extract_strided_slice %4 {offsets = [0, 0], sizes = [8, 64], strides = [1, 1]} : vector<8x192xf32> to vector<8x64xf32>
    %12 = arith.truncf %11 : vector<8x64xf32> to vector<8x64xbf16>
    %13 = vector.extract_strided_slice %6 {offsets = [0, 0], sizes = [8, 64], strides = [1, 1]} : vector<8x192xf32> to vector<8x64xf32>
    %14 = arith.truncf %13 : vector<8x64xf32> to vector<8x64xbf16>
    %15 = vector.extract_strided_slice %8 {offsets = [0, 0], sizes = [8, 64], strides = [1, 1]} : vector<8x192xf32> to vector<8x64xf32>
    %16 = arith.truncf %15 : vector<8x64xf32> to vector<8x64xbf16>
    %cst_13 = arith.constant dense<0.000000e+00> : vector<8x8xf32>
    %17 = tpu.matmul %12, %14, %cst_13 {dimension_numbers = #tpu.dot_dimension_numbers<[1], [1], [0], [0], [0, 0, 1, 0], [], []>} : vector<8x64xbf16>, vector<8x64xbf16>, vector<8x8xf32> -> vector<8x8xf32>
    %cst_14 = arith.constant 1.250000e-01 : f32
    %18 = vector.broadcast %cst_14 : f32 to vector<8x8xf32>
    %19 = arith.mulf %17, %18 : vector<8x8xf32>
    %cst_15 = arith.constant dense<0xFF800000> : vector<8xf32>
    %20 = vector.multi_reduction <maximumf>, %19, %cst_15 [1] : vector<8x8xf32> to vector<8xf32>
    %21 = vector.shape_cast %20 : vector<8xf32> to vector<8x1xf32>
    %22 = vector.broadcast %21 : vector<8x1xf32> to vector<8x8xf32>
    %23 = arith.subf %19, %22 : vector<8x8xf32>
    %24 = math.exp %23 : vector<8x8xf32>
    %cst_16 = arith.constant dense<0.000000e+00> : vector<8xf32>
    %25 = vector.multi_reduction <add>, %24, %cst_16 [1] : vector<8x8xf32> to vector<8xf32>
    %26 = vector.shape_cast %25 : vector<8xf32> to vector<8x1xf32>
    %27 = tpu.reciprocal %26 {approx = true} : vector<8x1xf32> -> vector<8x1xf32>
    %28 = vector.broadcast %27 : vector<8x1xf32> to vector<8x8xf32>
    %29 = arith.mulf %24, %28 : vector<8x8xf32>
    %30 = arith.truncf %29 : vector<8x8xf32> to vector<8x8xbf16>
    %cst_17 = arith.constant dense<0.000000e+00> : vector<8x64xf32>
    %31 = tpu.matmul %30, %16, %cst_17 {dimension_numbers = #tpu.dot_dimension_numbers<[1], [0], [0], [1], [0, 0, 1, 1], [], []>} : vector<8x8xbf16>, vector<8x64xbf16>, vector<8x64xf32> -> vector<8x64xf32>
    %32 = arith.truncf %31 : vector<8x64xf32> to vector<8x64xbf16>
    %33 = vector.extract_strided_slice %9 {offsets = [0, 0], sizes = [64, 16], strides = [1, 1]} : vector<192x16xbf16> to vector<64x16xbf16>
    %cst_18 = arith.constant dense<0.000000e+00> : vector<8x16xf32>
    %34 = tpu.matmul %32, %33, %cst_18 {dimension_numbers = #tpu.dot_dimension_numbers<[1], [0], [0], [1], [0, 0, 1, 1], [], []>} : vector<8x64xbf16>, vector<64x16xbf16>, vector<8x16xf32> -> vector<8x16xf32>
    %35 = arith.addf %10, %34 : vector<8x16xf32>
    %36 = vector.extract_strided_slice %4 {offsets = [0, 64], sizes = [8, 64], strides = [1, 1]} : vector<8x192xf32> to vector<8x64xf32>
    %37 = arith.truncf %36 : vector<8x64xf32> to vector<8x64xbf16>
    %38 = vector.extract_strided_slice %6 {offsets = [0, 64], sizes = [8, 64], strides = [1, 1]} : vector<8x192xf32> to vector<8x64xf32>
    %39 = arith.truncf %38 : vector<8x64xf32> to vector<8x64xbf16>
    %40 = vector.extract_strided_slice %8 {offsets = [0, 64], sizes = [8, 64], strides = [1, 1]} : vector<8x192xf32> to vector<8x64xf32>
    %41 = arith.truncf %40 : vector<8x64xf32> to vector<8x64xbf16>
    %cst_19 = arith.constant dense<0.000000e+00> : vector<8x8xf32>
    %42 = tpu.matmul %37, %39, %cst_19 {dimension_numbers = #tpu.dot_dimension_numbers<[1], [1], [0], [0], [0, 0, 1, 0], [], []>} : vector<8x64xbf16>, vector<8x64xbf16>, vector<8x8xf32> -> vector<8x8xf32>
    %cst_20 = arith.constant 1.250000e-01 : f32
    %43 = vector.broadcast %cst_20 : f32 to vector<8x8xf32>
    %44 = arith.mulf %42, %43 : vector<8x8xf32>
    %cst_21 = arith.constant dense<0xFF800000> : vector<8xf32>
    %45 = vector.multi_reduction <maximumf>, %44, %cst_21 [1] : vector<8x8xf32> to vector<8xf32>
    %46 = vector.shape_cast %45 : vector<8xf32> to vector<8x1xf32>
    %47 = vector.broadcast %46 : vector<8x1xf32> to vector<8x8xf32>
    %48 = arith.subf %44, %47 : vector<8x8xf32>
    %49 = math.exp %48 : vector<8x8xf32>
    %cst_22 = arith.constant dense<0.000000e+00> : vector<8xf32>
    %50 = vector.multi_reduction <add>, %49, %cst_22 [1] : vector<8x8xf32> to vector<8xf32>
    %51 = vector.shape_cast %50 : vector<8xf32> to vector<8x1xf32>
    %52 = tpu.reciprocal %51 {approx = true} : vector<8x1xf32> -> vector<8x1xf32>
    %53 = vector.broadcast %52 : vector<8x1xf32> to vector<8x8xf32>
    %54 = arith.mulf %49, %53 : vector<8x8xf32>
    %55 = arith.truncf %54 : vector<8x8xf32> to vector<8x8xbf16>
    %cst_23 = arith.constant dense<0.000000e+00> : vector<8x64xf32>
    %56 = tpu.matmul %55, %41, %cst_23 {dimension_numbers = #tpu.dot_dimension_numbers<[1], [0], [0], [1], [0, 0, 1, 1], [], []>} : vector<8x8xbf16>, vector<8x64xbf16>, vector<8x64xf32> -> vector<8x64xf32>
    %57 = arith.truncf %56 : vector<8x64xf32> to vector<8x64xbf16>
    %58 = vector.extract_strided_slice %9 {offsets = [64, 0], sizes = [64, 16], strides = [1, 1]} : vector<192x16xbf16> to vector<64x16xbf16>
    %cst_24 = arith.constant dense<0.000000e+00> : vector<8x16xf32>
    %59 = tpu.matmul %57, %58, %cst_24 {dimension_numbers = #tpu.dot_dimension_numbers<[1], [0], [0], [1], [0, 0, 1, 1], [], []>} : vector<8x64xbf16>, vector<64x16xbf16>, vector<8x16xf32> -> vector<8x16xf32>
    %60 = arith.addf %35, %59 : vector<8x16xf32>
    %61 = vector.extract_strided_slice %4 {offsets = [0, 128], sizes = [8, 64], strides = [1, 1]} : vector<8x192xf32> to vector<8x64xf32>
    %62 = arith.truncf %61 : vector<8x64xf32> to vector<8x64xbf16>
    %63 = vector.extract_strided_slice %6 {offsets = [0, 128], sizes = [8, 64], strides = [1, 1]} : vector<8x192xf32> to vector<8x64xf32>
    %64 = arith.truncf %63 : vector<8x64xf32> to vector<8x64xbf16>
    %65 = vector.extract_strided_slice %8 {offsets = [0, 128], sizes = [8, 64], strides = [1, 1]} : vector<8x192xf32> to vector<8x64xf32>
    %66 = arith.truncf %65 : vector<8x64xf32> to vector<8x64xbf16>
    %cst_25 = arith.constant dense<0.000000e+00> : vector<8x8xf32>
    %67 = tpu.matmul %62, %64, %cst_25 {dimension_numbers = #tpu.dot_dimension_numbers<[1], [1], [0], [0], [0, 0, 1, 0], [], []>} : vector<8x64xbf16>, vector<8x64xbf16>, vector<8x8xf32> -> vector<8x8xf32>
    %cst_26 = arith.constant 1.250000e-01 : f32
    %68 = vector.broadcast %cst_26 : f32 to vector<8x8xf32>
    %69 = arith.mulf %67, %68 : vector<8x8xf32>
    %cst_27 = arith.constant dense<0xFF800000> : vector<8xf32>
    %70 = vector.multi_reduction <maximumf>, %69, %cst_27 [1] : vector<8x8xf32> to vector<8xf32>
    %71 = vector.shape_cast %70 : vector<8xf32> to vector<8x1xf32>
    %72 = vector.broadcast %71 : vector<8x1xf32> to vector<8x8xf32>
    %73 = arith.subf %69, %72 : vector<8x8xf32>
    %74 = math.exp %73 : vector<8x8xf32>
    %cst_28 = arith.constant dense<0.000000e+00> : vector<8xf32>
    %75 = vector.multi_reduction <add>, %74, %cst_28 [1] : vector<8x8xf32> to vector<8xf32>
    %76 = vector.shape_cast %75 : vector<8xf32> to vector<8x1xf32>
    %77 = tpu.reciprocal %76 {approx = true} : vector<8x1xf32> -> vector<8x1xf32>
    %78 = vector.broadcast %77 : vector<8x1xf32> to vector<8x8xf32>
    %79 = arith.mulf %74, %78 : vector<8x8xf32>
    %80 = arith.truncf %79 : vector<8x8xf32> to vector<8x8xbf16>
    %cst_29 = arith.constant dense<0.000000e+00> : vector<8x64xf32>
    %81 = tpu.matmul %80, %66, %cst_29 {dimension_numbers = #tpu.dot_dimension_numbers<[1], [0], [0], [1], [0, 0, 1, 1], [], []>} : vector<8x8xbf16>, vector<8x64xbf16>, vector<8x64xf32> -> vector<8x64xf32>
    %82 = arith.truncf %81 : vector<8x64xf32> to vector<8x64xbf16>
    %83 = vector.extract_strided_slice %9 {offsets = [128, 0], sizes = [64, 16], strides = [1, 1]} : vector<192x16xbf16> to vector<64x16xbf16>
    %cst_30 = arith.constant dense<0.000000e+00> : vector<8x16xf32>
    %84 = tpu.matmul %82, %83, %cst_30 {dimension_numbers = #tpu.dot_dimension_numbers<[1], [0], [0], [1], [0, 0, 1, 1], [], []>} : vector<8x64xbf16>, vector<64x16xbf16>, vector<8x16xf32> -> vector<8x16xf32>
    %85 = arith.addf %60, %84 : vector<8x16xf32>
    %86 = arith.addf %1, %85 : vector<8x16xf32>
    %c0_31 = arith.constant 0 : index
    %c0_32 = arith.constant 0 : index
    %87 = vector.load %arg6[%c0_31, %c0_32] : memref<1x16xf32, #tpu.memory_space<vmem>>, vector<1x16xf32>
    %88 = vector.broadcast %87 : vector<1x16xf32> to vector<8x16xf32>
    %89 = arith.addf %86, %88 : vector<8x16xf32>
    %cst_33 = arith.constant dense<0.000000e+00> : vector<8xf32>
    %90 = vector.multi_reduction <add>, %89, %cst_33 [1] : vector<8x16xf32> to vector<8xf32>
    %91 = vector.shape_cast %90 : vector<8xf32> to vector<8x1xf32>
    %cst_34 = arith.constant 1.600000e+01 : f32
    %92 = vector.broadcast %cst_34 : f32 to vector<8x1xf32>
    %93 = arith.divf %91, %92 : vector<8x1xf32>
    %94 = vector.broadcast %93 : vector<8x1xf32> to vector<8x16xf32>
    %95 = arith.subf %89, %94 : vector<8x16xf32>
    %96 = arith.mulf %95, %95 : vector<8x16xf32>
    %cst_35 = arith.constant dense<0.000000e+00> : vector<8xf32>
    %97 = vector.multi_reduction <add>, %96, %cst_35 [1] : vector<8x16xf32> to vector<8xf32>
    %98 = vector.shape_cast %97 : vector<8xf32> to vector<8x1xf32>
    %cst_36 = arith.constant 0.0666666701 : f32
    %99 = vector.broadcast %cst_36 : f32 to vector<8x1xf32>
    %100 = arith.mulf %98, %99 : vector<8x1xf32>
    %101 = math.sqrt %100 : vector<8x1xf32>
    %cst_37 = arith.constant 1.000000e-03 : f32
    %102 = vector.broadcast %cst_37 : f32 to vector<8x1xf32>
    %103 = arith.addf %101, %102 : vector<8x1xf32>
    %104 = tpu.reciprocal %103 {approx = true} : vector<8x1xf32> -> vector<8x1xf32>
    %c0_38 = arith.constant 0 : index
    %c0_39 = arith.constant 0 : index
    %105 = vector.load %arg7[%c0_38, %c0_39] : memref<1x16xf32, #tpu.memory_space<vmem>>, vector<1x16xf32>
    %106 = vector.broadcast %93 : vector<8x1xf32> to vector<8x16xf32>
    %107 = arith.subf %89, %106 : vector<8x16xf32>
    %108 = vector.broadcast %104 : vector<8x1xf32> to vector<8x16xf32>
    %109 = arith.mulf %107, %108 : vector<8x16xf32>
    %110 = vector.broadcast %105 : vector<1x16xf32> to vector<8x16xf32>
    %111 = arith.mulf %110, %109 : vector<8x16xf32>
    %c0_40 = arith.constant 0 : index
    %c0_41 = arith.constant 0 : index
    %112 = vector.load %arg8[%c0_40, %c0_41] : memref<1x16xf32, #tpu.memory_space<vmem>>, vector<1x16xf32>
    %113 = vector.broadcast %112 : vector<1x16xf32> to vector<8x16xf32>
    %114 = arith.addf %111, %113 : vector<8x16xf32>
    %c0_42 = arith.constant 0 : index
    %c0_43 = arith.constant 0 : index
    %c0_44 = arith.constant 0 : index
    %115 = vector.load %arg9[%c0_42, %c0_43, %c0_44] : memref<1x8x16xf32, #tpu.memory_space<vmem>>, vector<1x8x16xf32>
    %116 = vector.shape_cast %115 : vector<1x8x16xf32> to vector<8x16xf32>
    %117 = vector.shape_cast %114 : vector<8x16xf32> to vector<1x8x16xf32>
    tpu.vector_store %arg9[%c0_42, %c0_43, %c0_44], %117 {strides = array<i32>} : memref<1x8x16xf32, #tpu.memory_space<vmem>>, vector<1x8x16xf32>,
    return
  }
  func.func @transform_0(%arg0: i32) -> (i32, i32, i32) {
    %c0_i32 = arith.constant 0 : i32
    %c0_i32_0 = arith.constant 0 : i32
    %c0_i32_1 = arith.constant 0 : i32
    return %arg0, %c0_i32, %c0_i32_0 : i32, i32, i32
  }
  func.func @transform_1(%arg0: i32) -> (i32, i32) {
    %c0_i32 = arith.constant 0 : i32
    %c0_i32_0 = arith.constant 0 : i32
    %c0_i32_1 = arith.constant 0 : i32
    return %c0_i32, %c0_i32_0 : i32, i32
  }
  func.func @transform_2(%arg0: i32) -> (i32, i32) {
    %c0_i32 = arith.constant 0 : i32
    %c0_i32_0 = arith.constant 0 : i32
    %c0_i32_1 = arith.constant 0 : i32
    return %c0_i32, %c0_i32_0 : i32, i32
  }
  func.func @transform_3(%arg0: i32) -> (i32, i32) {
    %c0_i32 = arith.constant 0 : i32
    %c0_i32_0 = arith.constant 0 : i32
    %c0_i32_1 = arith.constant 0 : i32
    return %c0_i32, %c0_i32_0 : i32, i32
  }
  func.func @transform_4(%arg0: i32) -> (i32, i32) {
    %c0_i32 = arith.constant 0 : i32
    %c0_i32_0 = arith.constant 0 : i32
    %c0_i32_1 = arith.constant 0 : i32
    return %c0_i32, %c0_i32_0 : i32, i32
  }
  func.func @transform_5(%arg0: i32) -> (i32, i32) {
    %c0_i32 = arith.constant 0 : i32
    %c0_i32_0 = arith.constant 0 : i32
    %c0_i32_1 = arith.constant 0 : i32
    return %c0_i32, %c0_i32_0 : i32, i32
  }
  func.func @transform_6(%arg0: i32) -> (i32, i32) {
    %c0_i32 = arith.constant 0 : i32
    %c0_i32_0 = arith.constant 0 : i32
    %c0_i32_1 = arith.constant 0 : i32
    return %c0_i32, %c0_i32_0 : i32, i32
  }
  func.func @transform_7(%arg0: i32) -> (i32, i32) {
    %c0_i32 = arith.constant 0 : i32
    %c0_i32_0 = arith.constant 0 : i32
    %c0_i32_1 = arith.constant 0 : i32
    return %c0_i32, %c0_i32_0 : i32, i32
  }
  func.func @transform_8(%arg0: i32) -> (i32, i32, i32) {
    %c0_i32 = arith.constant 0 : i32
    %c0_i32_0 = arith.constant 0 : i32
    %c0_i32_1 = arith.constant 0 : i32
    return %arg0, %c0_i32, %c0_i32_0 : i32, i32, i32
  }
}

</mosaic_0001>

<llo_original>
// kernel: _lambda_.5
$region0: #{_lambda_.5}
  #allocation0 [shape = 'u32[]', space=smem, size = 0x4, offset = 0x4, fixed_abs, tag = 'smem constant byte address 0x4 - core index']
  #allocation1 [shape = 'u32[144,128]{1,0:T(1,128)}', space=vmem, size = 0x12000, scoped, tag = 'internal scratch']
  %s0 = inlined_call_operand.vmem [shape: f32[2,128], index: 0, kind: input, shape index: {}]
  %s1 = inlined_call_operand.vmem [shape: bf16[128,8], index: 1, kind: input, shape index: {}]
  %s2 = inlined_call_operand.vmem [shape: f32[1,8], index: 2, kind: input, shape index: {}]
  %s3 = inlined_call_operand.hbm [shape: f32[2,8], index: 3, kind: output, shape index: {}]
  %s4 = sld [smem:[#allocation0]]
  $region22: #{_lambda_.5} parent=0
    _
  %s6 = ssub.s32 1, %s4
  %s7 = scalar_select 0, %s6, %s4
  $region1: #{_lambda_.5} parent=0
    #allocation2 [shape = 'u8[1024]{0}', space=vmem, size = 0x400, scoped, tag = 'output window, operand 0, single buffered']
    #allocation3 [shape = 's32[1]{0}', space=sflag, size = 0x4, scoped, tag = 'scoped memory for _lambda_.5']
    %8 = vsyncpa [#allocation3], 0
    // Predicated region
    $region2: #{_lambda_.5} parent=1 // pred_check
      _
    $region3: #{_lambda_.5} parent=1 // pred_check_branch
      %10 = sbr.rel (0) target = $region5
    $region4: #{_lambda_.5} parent=1 // pred_region
      _
    $region5: #{_lambda_.5} parent=1 // pred_fallthru
      _
    // Predicated region
    $region6: #{_lambda_.5} parent=1 // pred_check
      _
    $region7: #{_lambda_.5} parent=1 // pred_check_branch
      %12 = sbr.rel (0) target = $region9
    $region8: #{_lambda_.5} parent=1 // pred_region
      _
    $region9: #{_lambda_.5} parent=1 // pred_fallthru
      _
    // Predicated region
    $region10: #{_lambda_.5} parent=1 // pred_check
      _
    $region11: #{_lambda_.5} parent=1 // pred_check_branch
      %14 = sbr.rel (0) target = $region13
    $region12: #{_lambda_.5} parent=1 // pred_region
      _
    $region13: #{_lambda_.5} parent=1 // pred_fallthru
      _
    %v16 = vld [vmem:[%s0] sm:$0x3]
    %v17 = vld [vmem:[%s1] sm:$0xf]
    %v18 = vld [vmem:[%s1 + $0x4] sm:$0xf]
    %v19 = vld [vmem:[%s1 + $0x8] sm:$0xf]
    %v20 = vld [vmem:[%s1 + $0xc] sm:$0xf]
    %v21 = vld [vmem:[%s1 + $0x10] sm:$0xf]
    %v22 = vld [vmem:[%s1 + $0x14] sm:$0xf]
    %v23 = vld [vmem:[%s1 + $0x18] sm:$0xf]
    %v24 = vld [vmem:[%s1 + $0x1c] sm:$0xf]
    %v25 = vld [vmem:[%s1 + $0x20] sm:$0xf]
    %v26 = vld [vmem:[%s1 + $0x24] sm:$0xf]
    %v27 = vld [vmem:[%s1 + $0x28] sm:$0xf]
    %v28 = vld [vmem:[%s1 + $0x2c] sm:$0xf]
    %v29 = vld [vmem:[%s1 + $0x30] sm:$0xf]
    %v30 = vld [vmem:[%s1 + $0x34] sm:$0xf]
    %v31 = vld [vmem:[%s1 + $0x38] sm:$0xf]
    %v32 = vld [vmem:[%s1 + $0x3c] sm:$0xf]
    %v33 = vld [vmem:[%s2] sm:$0x1]
    %v34 = vpack.c.bf16 %v16, %v16
    %v36 = vlaneseq
    %v37 = vshrl.u32 %v36, 7
    %v38 = vsub.s32 0, %v37
    %v39 = vrot.slane %v33, %v38
    %v57 = vunpack.c.l.b16 %v17
    %v58 = vunpack.c.l.b16 %v18
    %v59 = vunpack.c.l.b16 %v19
    %v60 = vunpack.c.l.b16 %v20
    %v61 = vunpack.c.l.b16 %v21
    %v62 = vunpack.c.l.b16 %v22
    %v63 = vunpack.c.l.b16 %v23
    %v64 = vunpack.c.l.b16 %v24
    %v65 = vunpack.c.l.b16 %v25
    %v66 = vunpack.c.l.b16 %v26
    %v67 = vunpack.c.l.b16 %v27
    %v68 = vunpack.c.l.b16 %v28
    %v69 = vunpack.c.l.b16 %v29
    %v70 = vunpack.c.l.b16 %v30
    %v71 = vunpack.c.l.b16 %v31
    %v72 = vunpack.c.l.b16 %v32
    %v73 = vpack.c.b16 %v58, %v57
    %v74 = vpack.c.b16 %v60, %v59
    %v75 = vpack.c.b16 %v62, %v61
    %v76 = vpack.c.b16 %v64, %v63
    %v77 = vpack.c.b16 %v66, %v65
    %v78 = vpack.c.b16 %v68, %v67
    %v79 = vpack.c.b16 %v70, %v69
    %v80 = vpack.c.b16 %v72, %v71
    %89 = vmatprep.subr.bf16.mxu0 0
    %90 = vmatpush1.bf16.msra.mxu0 %v80
    %91 = vmatprep.subr.bf16.mxu0 0
    %92 = vmatpush1.bf16.msra.mxu0 %v79
    %93 = vmatprep.subr.bf16.mxu0 0
    %94 = vmatpush1.bf16.msra.mxu0 %v78
    %95 = vmatprep.subr.bf16.mxu0 0
    %96 = vmatpush1.bf16.msra.mxu0 %v77
    %97 = vmatprep.subr.bf16.mxu0 0
    %98 = vmatpush1.bf16.msra.mxu0 %v76
    %99 = vmatprep.subr.bf16.mxu0 0
    %100 = vmatpush1.bf16.msra.mxu0 %v75
    %101 = vmatprep.subr.bf16.mxu0 0
    %102 = vmatpush1.bf16.msra.mxu0 %v74
    %103 = vmatprep.subr.bf16.mxu0 0
    %104 = vmatpush1.bf16.msra.mxu0 %v73
    %105 = vmatprep.subr.bf16.mxu0 0
    %106 = vmatpush2.bf16.msra.mxu0 0
    %107 = vmatprep.subr.bf16.mxu0 0
    %108 = vmatpush2.bf16.msra.mxu0 0
    %109 = vmatprep.subr.bf16.mxu0 0
    %110 = vmatpush2.bf16.msra.mxu0 0
    %111 = vmatprep.subr.bf16.mxu0 0
    %112 = vmatpush2.bf16.msra.mxu0 0
    %113 = vmatprep.subr.bf16.mxu0 0
    %114 = vmatpush2.bf16.msra.mxu0 0
    %115 = vmatprep.subr.bf16.mxu0 0
    %116 = vmatpush2.bf16.msra.mxu0 0
    %117 = vmatprep.subr.bf16.mxu0 0
    %118 = vmatpush2.bf16.msra.mxu0 0
    %119 = vmatprep.subr.bf16.mxu0 0
    %120 = vmatpush2.bf16.msra.mxu0 0
    %121 = vmatprep.mubr.bf16.mxu0 0
    %122 = vmatmul.mubr.bf16.gmra.mxu0 %v34
    %v123 = vpop.f32.mrf.mxu0
    %v124 = vadd.f32 %v39, %v123
    %v125 = vpop.f32.mrf.mxu0
    %v126 = vpop.f32.mrf.mxu0
    %v127 = vpop.f32.mrf.mxu0
    %128 = vdwg.mxu0
    %vm129 = vcmask 58368
    %130 = vst.msk [vmem:[#allocation2] sm:$0x3] %vm129, %v124
    // Predicated region
    $region14: #{_lambda_.5} parent=1 // pred_check
      _
    $region15: #{_lambda_.5} parent=1 // pred_check_branch
      %132 = sbr.rel (0) target = $region17
    $region16: #{_lambda_.5} parent=1 // pred_region
      %s134 = ssub.s32 32, 32
      %135 = vsyncadd [#allocation3], %s134
      %s137 = sshll.u32 [#allocation2], 4
      %s138 = int_to_ptr.vmem [resolvable:$true] %s137
      %140 = dma.vmem_to_hbm [thread:$0]  %s138, 32, %s3, [#allocation3]
    $region17: #{_lambda_.5} parent=1 // pred_fallthru
      _
    // Predicated region
    $region18: #{_lambda_.5} parent=1 // pred_check
      _
    $region19: #{_lambda_.5} parent=1 // pred_check_branch
      %142 = sbr.rel (0) target = $region21
    $region20: #{_lambda_.5} parent=1 // pred_region
      %143 = dma.done [#allocation3], 32
    $region21: #{_lambda_.5} parent=1 // pred_fallthru
      _
    %144 = vsyncpa [#allocation3], 1

// kernel: _lambda_.4
$region0: #{_lambda_.4}
  #allocation0 [shape = 'u32[]', space=smem, size = 0x4, offset = 0x4, fixed_abs, tag = 'smem constant byte address 0x4 - core index']
  #allocation1 [shape = 'u32[144,128]{1,0:T(1,128)}', space=vmem, size = 0x12000, scoped, tag = 'internal scratch']
  %s0 = inlined_call_operand.vmem [shape: f32[2,8,16], index: 0, kind: input, shape index: {}]
  %s1 = inlined_call_operand.vmem [shape: bf16[16,192], index: 1, kind: input, shape index: {}]
  %s2 = inlined_call_operand.vmem [shape: bf16[16,192], index: 2, kind: input, shape index: {}]
  %s3 = inlined_call_operand.vmem [shape: bf16[16,192], index: 3, kind: input, shape index: {}]
  %s4 = inlined_call_operand.vmem [shape: bf16[192,16], index: 4, kind: input, shape index: {}]
  %s5 = inlined_call_operand.vmem [shape: f32[1,16], index: 5, kind: input, shape index: {}]
  %s6 = inlined_call_operand.vmem [shape: f32[1,16], index: 6, kind: input, shape index: {}]
  %s7 = inlined_call_operand.vmem [shape: f32[1,16], index: 7, kind: input, shape index: {}]
  %s8 = inlined_call_operand.vmem [shape: f32[2,8,16], index: 8, kind: output, shape index: {}]
  %s9 = sld [smem:[#allocation0]]
  $region65: #{_lambda_.4} parent=0
    _
  %s11 = ssub.s32 1, %s9
  %s12 = scalar_select 0, %s11, %s9
  loop: start=0, step=1, limit=4
  $region2: #{_lambda_.4} parent=0 // loop_pre_header
    _
  $region3: #{_lambda_.4} parent=0 // loop_header
    %s14 = sphi 0, %s18
    %p15 = scmp.ge.s32.totalorder %s14, 4
    %s24 = sphi 0, %s26
    %s27 = sphi 0, %s24
    %s28 = sphi 0, %s27
    %s44 = sphi 0, %s28
    %s48 = sphi 0, %s48
    %s50 = sphi 0, %s48
    %s51 = sphi 0, %s50
    %s65 = sphi 0, %s51
    %s69 = sphi 0, %s69
    %s71 = sphi 0, %s69
    %s72 = sphi 0, %s71
    %s86 = sphi 0, %s72
    %s90 = sphi 0, %s90
    %s92 = sphi 0, %s90
    %s93 = sphi 0, %s92
    %s107 = sphi 0, %s93
    %s111 = sphi 0, %s111
    %s113 = sphi 0, %s111
    %s114 = sphi 0, %s113
    %s128 = sphi 0, %s114
    %s132 = sphi 0, %s132
    %s134 = sphi 0, %s132
    %s135 = sphi 0, %s134
    %s149 = sphi 0, %s135
    %s153 = sphi 0, %s153
    %s155 = sphi 0, %s153
    %s156 = sphi 0, %s155
    %s170 = sphi 0, %s156
    %s174 = sphi 0, %s174
    %s176 = sphi 0, %s174
    %s177 = sphi 0, %s176
    %s191 = sphi 0, %s177
    %s197 = sphi 0, %s199
    %s200 = sphi 0, %s197
    %s201 = sphi 0, %s200
    %s217 = sphi 0, %s201
  $region4: #{_lambda_.4} parent=0 // loop_header_branch
    %17 = sbr.rel (%p15) target = $region8
  $region5: #{_lambda_.4} parent=0 // loop_body
    %s19 = ssub.s32 %s14, 1
    %s20 = ssub.s32 %s14, 2
    %s21 = sadd.s32 %s14, 1
    %s22 = ssub.s32 %s14, %s21
    %p23 = scmp.eq.s32.totalorder %s22, 0
    %s25 = sadd.s32 %s24, 1
    %s26 = scalar_select %p23, %s24, %s25
    %p29 = pneg %p23
    %p30 = scmp.eq.s32.totalorder %s14, 1
    %p31 = por %p29, %p30
    %p32 = scmp.ne.s32.totalorder %s24, %s27
    %p33 = scmp.eq.s32.totalorder %s14, 0
    %p34 = por %p32, %p33
    %p35 = scmp.ne.s32.totalorder %s24, %s27
    %p36 = scmp.eq.s32.totalorder %s19, 1
    %p37 = por %p35, %p36
    %p38 = scmp.ne.s32.totalorder %s27, %s28
    %p39 = scmp.eq.s32.totalorder %s19, 0
    %p40 = por %p38, %p39
    %p41 = scmp.ne.s32.totalorder %s27, %s28
    %p42 = scmp.eq.s32.totalorder %s20, 1
    %p43 = por %p41, %p42
    %p45 = scmp.ne.s32.totalorder %s28, %s44
    %p46 = scmp.eq.s32.totalorder %s20, 0
    %p47 = por %p45, %p46
    %s49 = sadd.s32 %s48, 1
    %p52 = scmp.eq.s32.totalorder %s14, 1
    %p53 = scmp.ne.s32.totalorder %s48, %s50
    %p54 = scmp.eq.s32.totalorder %s14, 0
    %p55 = por %p53, %p54
    %p56 = scmp.ne.s32.totalorder %s48, %s50
    %p57 = scmp.eq.s32.totalorder %s19, 1
    %p58 = por %p56, %p57
    %p59 = scmp.ne.s32.totalorder %s50, %s51
    %p60 = scmp.eq.s32.totalorder %s19, 0
    %p61 = por %p59, %p60
    %p62 = scmp.ne.s32.totalorder %s50, %s51
    %p63 = scmp.eq.s32.totalorder %s20, 1
    %p64 = por %p62, %p63
    %p66 = scmp.ne.s32.totalorder %s51, %s65
    %p67 = scmp.eq.s32.totalorder %s20, 0
    %p68 = por %p66, %p67
    %s70 = sadd.s32 %s69, 1
    %p73 = scmp.eq.s32.totalorder %s14, 1
    %p74 = scmp.ne.s32.totalorder %s69, %s71
    %p75 = scmp.eq.s32.totalorder %s14, 0
    %p76 = por %p74, %p75
    %p77 = scmp.ne.s32.totalorder %s69, %s71
    %p78 = scmp.eq.s32.totalorder %s19, 1
    %p79 = por %p77, %p78
    %p80 = scmp.ne.s32.totalorder %s71, %s72
    %p81 = scmp.eq.s32.totalorder %s19, 0
    %p82 = por %p80, %p81
    %p83 = scmp.ne.s32.totalorder %s71, %s72
    %p84 = scmp.eq.s32.totalorder %s20, 1
    %p85 = por %p83, %p84
    %p87 = scmp.ne.s32.totalorder %s72, %s86
    %p88 = scmp.eq.s32.totalorder %s20, 0
    %p89 = por %p87, %p88
    %s91 = sadd.s32 %s90, 1
    %p94 = scmp.eq.s32.totalorder %s14, 1
    %p95 = scmp.ne.s32.totalorder %s90, %s92
    %p96 = scmp.eq.s32.totalorder %s14, 0
    %p97 = por %p95, %p96
    %p98 = scmp.ne.s32.totalorder %s90, %s92
    %p99 = scmp.eq.s32.totalorder %s19, 1
    %p100 = por %p98, %p99
    %p101 = scmp.ne.s32.totalorder %s92, %s93
    %p102 = scmp.eq.s32.totalorder %s19, 0
    %p103 = por %p101, %p102
    %p104 = scmp.ne.s32.totalorder %s92, %s93
    %p105 = scmp.eq.s32.totalorder %s20, 1
    %p106 = por %p104, %p105
    %p108 = scmp.ne.s32.totalorder %s93, %s107
    %p109 = scmp.eq.s32.totalorder %s20, 0
    %p110 = por %p108, %p109
    %s112 = sadd.s32 %s111, 1
    %p115 = scmp.eq.s32.totalorder %s14, 1
    %p116 = scmp.ne.s32.totalorder %s111, %s113
    %p117 = scmp.eq.s32.totalorder %s14, 0
    %p118 = por %p116, %p117
    %p119 = scmp.ne.s32.totalorder %s111, %s113
    %p120 = scmp.eq.s32.totalorder %s19, 1
    %p121 = por %p119, %p120
    %p122 = scmp.ne.s32.totalorder %s113, %s114
    %p123 = scmp.eq.s32.totalorder %s19, 0
    %p124 = por %p122, %p123
    %p125 = scmp.ne.s32.totalorder %s113, %s114
    %p126 = scmp.eq.s32.totalorder %s20, 1
    %p127 = por %p125, %p126
    %p129 = scmp.ne.s32.totalorder %s114, %s128
    %p130 = scmp.eq.s32.totalorder %s20, 0
    %p131 = por %p129, %p130
    %s133 = sadd.s32 %s132, 1
    %p136 = scmp.eq.s32.totalorder %s14, 1
    %p137 = scmp.ne.s32.totalorder %s132, %s134
    %p138 = scmp.eq.s32.totalorder %s14, 0
    %p139 = por %p137, %p138
    %p140 = scmp.ne.s32.totalorder %s132, %s134
    %p141 = scmp.eq.s32.totalorder %s19, 1
    %p142 = por %p140, %p141
    %p143 = scmp.ne.s32.totalorder %s134, %s135
    %p144 = scmp.eq.s32.totalorder %s19, 0
    %p145 = por %p143, %p144
    %p146 = scmp.ne.s32.totalorder %s134, %s135
    %p147 = scmp.eq.s32.totalorder %s20, 1
    %p148 = por %p146, %p147
    %p150 = scmp.ne.s32.totalorder %s135, %s149
    %p151 = scmp.eq.s32.totalorder %s20, 0
    %p152 = por %p150, %p151
    %s154 = sadd.s32 %s153, 1
    %p157 = scmp.eq.s32.totalorder %s14, 1
    %p158 = scmp.ne.s32.totalorder %s153, %s155
    %p159 = scmp.eq.s32.totalorder %s14, 0
    %p160 = por %p158, %p159
    %p161 = scmp.ne.s32.totalorder %s153, %s155
    %p162 = scmp.eq.s32.totalorder %s19, 1
    %p163 = por %p161, %p162
    %p164 = scmp.ne.s32.totalorder %s155, %s156
    %p165 = scmp.eq.s32.totalorder %s19, 0
    %p166 = por %p164, %p165
    %p167 = scmp.ne.s32.totalorder %s155, %s156
    %p168 = scmp.eq.s32.totalorder %s20, 1
    %p169 = por %p167, %p168
    %p171 = scmp.ne.s32.totalorder %s156, %s170
    %p172 = scmp.eq.s32.totalorder %s20, 0
    %p173 = por %p171, %p172
    %s175 = sadd.s32 %s174, 1
    %p178 = scmp.eq.s32.totalorder %s14, 1
    %p179 = scmp.ne.s32.totalorder %s174, %s176
    %p180 = scmp.eq.s32.totalorder %s14, 0
    %p181 = por %p179, %p180
    %p182 = scmp.ne.s32.totalorder %s174, %s176
    %p183 = scmp.eq.s32.totalorder %s19, 1
    %p184 = por %p182, %p183
    %p185 = scmp.ne.s32.totalorder %s176, %s177
    %p186 = scmp.eq.s32.totalorder %s19, 0
    %p187 = por %p185, %p186
    %p188 = scmp.ne.s32.totalorder %s176, %s177
    %p189 = scmp.eq.s32.totalorder %s20, 1
    %p190 = por %p188, %p189
    %p192 = scmp.ne.s32.totalorder %s177, %s191
    %p193 = scmp.eq.s32.totalorder %s20, 0
    %p194 = por %p192, %p193
    %s195 = ssub.s32 %s14, %s21
    %p196 = scmp.eq.s32.totalorder %s195, 0
    %s198 = sadd.s32 %s197, 1
    %s199 = scalar_select %p196, %s197, %s198
    %p202 = pneg %p196
    %p203 = scmp.eq.s32.totalorder %s14, 1
    %p204 = por %p202, %p203
    %p205 = scmp.ne.s32.totalorder %s197, %s200
    %p206 = scmp.eq.s32.totalorder %s14, 0
    %p207 = por %p205, %p206
    %p208 = scmp.ne.s32.totalorder %s197, %s200
    %p209 = scmp.eq.s32.totalorder %s19, 1
    %p210 = por %p208, %p209
    %p211 = scmp.ne.s32.totalorder %s200, %s201
    %p212 = scmp.eq.s32.totalorder %s19, 0
    %p213 = por %p211, %p212
    %p214 = scmp.ne.s32.totalorder %s200, %s201
    %p215 = scmp.eq.s32.totalorder %s20, 1
    %p216 = por %p214, %p215
    %p218 = scmp.ne.s32.totalorder %s201, %s217
    %p219 = scmp.eq.s32.totalorder %s20, 0
    %p220 = por %p218, %p219
    %p221 = scmp.le.s32.totalorder 1, %s14
    %p222 = scmp.lt.s32.totalorder %s14, 3
    %p223 = pnand %p221, %p222
    %p224 = pneg %p223
    // Predicated region
    $region9: #{_lambda_.4} parent=5 // pred_check
      _
    $region10: #{_lambda_.4} parent=5 // pred_check_branch
      %226 = sbr.rel (%p223) target = $region12
    $region11: #{_lambda_.4} parent=5 // pred_region
      %s227 = ssub.s32 %s14, 1
      // Predicated region
      $region13: #{_lambda_.4} parent=11 // pred_check
        %p228 = pneg %p61
      $region14: #{_lambda_.4} parent=11 // pred_check_branch
        %230 = sbr.rel (%p228) target = $region16
      $region15: #{_lambda_.4} parent=11 // pred_region
        _
      $region16: #{_lambda_.4} parent=11 // pred_fallthru
        _
      // Predicated region
      $region17: #{_lambda_.4} parent=11 // pred_check
        %p231 = pneg %p82
      $region18: #{_lambda_.4} parent=11 // pred_check_branch
        %233 = sbr.rel (%p231) target = $region20
      $region19: #{_lambda_.4} parent=11 // pred_region
        _
      $region20: #{_lambda_.4} parent=11 // pred_fallthru
        _
      // Predicated region
      $region21: #{_lambda_.4} parent=11 // pred_check
        %p234 = pneg %p103
      $region22: #{_lambda_.4} parent=11 // pred_check_branch
        %236 = sbr.rel (%p234) target = $region24
      $region23: #{_lambda_.4} parent=11 // pred_region
        _
      $region24: #{_lambda_.4} parent=11 // pred_fallthru
        _
      // Predicated region
      $region25: #{_lambda_.4} parent=11 // pred_check
        %p237 = pneg %p124
      $region26: #{_lambda_.4} parent=11 // pred_check_branch
        %239 = sbr.rel (%p237) target = $region28
      $region27: #{_lambda_.4} parent=11 // pred_region
        _
      $region28: #{_lambda_.4} parent=11 // pred_fallthru
        _
      // Predicated region
      $region29: #{_lambda_.4} parent=11 // pred_check
        %p240 = pneg %p145
      $region30: #{_lambda_.4} parent=11 // pred_check_branch
        %242 = sbr.rel (%p240) target = $region32
      $region31: #{_lambda_.4} parent=11 // pred_region
        _
      $region32: #{_lambda_.4} parent=11 // pred_fallthru
        _
      // Predicated region
      $region33: #{_lambda_.4} parent=11 // pred_check
        %p243 = pneg %p166
      $region34: #{_lambda_.4} parent=11 // pred_check_branch
        %245 = sbr.rel (%p243) target = $region36
      $region35: #{_lambda_.4} parent=11 // pred_region
        _
      $region36: #{_lambda_.4} parent=11 // pred_fallthru
        _
      // Predicated region
      $region37: #{_lambda_.4} parent=11 // pred_check
        %p246 = pneg %p187
      $region38: #{_lambda_.4} parent=11 // pred_check_branch
        %248 = sbr.rel (%p246) target = $region40
      $region39: #{_lambda_.4} parent=11 // pred_region
        _
      $region40: #{_lambda_.4} parent=11 // pred_fallthru
        _
    $region12: #{_lambda_.4} parent=5 // pred_fallthru
      _
    %p249 = scmp.lt.s32.totalorder %s14, 2
    // Predicated region
    $region41: #{_lambda_.4} parent=5 // pred_check
      %p250 = pneg %p249
    $region42: #{_lambda_.4} parent=5 // pred_check_branch
      %252 = sbr.rel (%p250) target = $region44
    $region43: #{_lambda_.4} parent=5 // pred_region
      // Predicated region
      $region45: #{_lambda_.4} parent=43 // pred_check
        %p253 = pneg %p34
      $region46: #{_lambda_.4} parent=43 // pred_check_branch
        %255 = sbr.rel (%p253) target = $region48
      $region47: #{_lambda_.4} parent=43 // pred_region
        %p256 = scmp.lt.s32.totalorder %s14, 1
        %s257 = scalar_select %p256, %s14, 1
        %s258 = smul.addr %s257, 8
        %s259 = scalar_lea.vmem %s0, %s258
      $region48: #{_lambda_.4} parent=43 // pred_fallthru
        _
    $region44: #{_lambda_.4} parent=5 // pred_fallthru
      _
    %p260 = scmp.le.s32.totalorder 1, %s14
    %p261 = scmp.lt.s32.totalorder %s14, 3
    %p262 = pnand %p260, %p261
    %p263 = pneg %p262
    // Predicated region
    $region49: #{_lambda_.4} parent=5 // pred_check
      _
    $region50: #{_lambda_.4} parent=5 // pred_check_branch
      %265 = sbr.rel (%p262) target = $region52
    $region51: #{_lambda_.4} parent=5 // pred_region
      %s266 = ssub.s32 %s14, 1
      %p267 = scmp.lt.s32.totalorder %s19, 1
      %s268 = scalar_select %p267, %s19, 1
      %s269 = smul.addr %s268, 8
      %s270 = scalar_lea.vmem %s0, %s269
      %p271 = pneg %p40
      %p272 = pneg %p37
      %p273 = pneg %p61
      %p274 = pneg %p58
      %p275 = pneg %p82
      %p276 = pneg %p79
      %p277 = pneg %p103
      %p278 = pneg %p100
      %p279 = pneg %p124
      %p280 = pneg %p121
      %p281 = pneg %p145
      %p282 = pneg %p142
      %p283 = pneg %p166
      %p284 = pneg %p163
      %p285 = pneg %p187
      %p286 = pneg %p184
      %p287 = pneg %p213
      %p288 = pneg %p210
      %p289 = scmp.lt.s32.totalorder %s19, 1
      %s290 = scalar_select %p289, %s19, 1
      %s291 = smul.addr %s290, 8
      %s292 = scalar_lea.vmem %s8, %s291
      %p293 = scmp.lt.s32.totalorder %s19, 1
      %s294 = scalar_select %p293, %s19, 1
      %s295 = smul.addr %s294, 8
      %s296 = scalar_lea.vmem %s0, %s295
      %p297 = scmp.lt.s32.totalorder %s19, 1
      %s298 = scalar_select %p297, %s19, 1
      %s299 = smul.addr %s298, 8
      %s300 = scalar_lea.vmem %s8, %s299
      %v302 = vld [vmem:[%s296] sm:$0xff]
      %v303 = vpack.c.bf16 %v302, %v302
      %v304 = vld [vmem:[%s1] sm:$0xff]
      %v305 = vld [vmem:[%s1 + $0x8] sm:$0xff]
      %v308 = vunpack.c.l.b16 %v304
      %v309 = vunpack.c.h.b16 %v304
      %v310 = vunpack.c.l.b16 %v305
      %v311 = vunpack.c.h.b16 %v305
      %v312 = vpack.c.b16 %v310, %v308
      %v313 = vpack.c.b16 %v311, %v309
      %vm316 = vcmask 130048
      %v318 = vsel %vm316, %v303, 0
      %320 = vmatprep.subr.bf16.mxu0 0
      %321 = vmatpush1.bf16.msra.mxu0 0
      %322 = vmatprep.subr.bf16.mxu0 0
      %323 = vmatpush1.bf16.msra.mxu0 0
      %324 = vmatprep.subr.bf16.mxu0 0
      %325 = vmatpush1.bf16.msra.mxu0 0
      %326 = vmatprep.subr.bf16.mxu0 0
      %327 = vmatpush1.bf16.msra.mxu0 0
      %328 = vmatprep.subr.bf16.mxu0 0
      %329 = vmatpush1.bf16.msra.mxu0 0
      %330 = vmatprep.subr.bf16.mxu0 0
      %331 = vmatpush1.bf16.msra.mxu0 0
      %332 = vmatprep.subr.bf16.mxu0 0
      %333 = vmatpush1.bf16.msra.mxu0 0
      %334 = vmatprep.subr.bf16.mxu0 %v313
      %335 = vmatpush1.bf16.msra.mxu0 %v312
      %336 = vmatprep.subr.bf16.mxu0 0
      %337 = vmatpush2.bf16.msra.mxu0 0
      %338 = vmatprep.subr.bf16.mxu0 0
      %339 = vmatpush2.bf16.msra.mxu0 0
      %340 = vmatprep.subr.bf16.mxu0 0
      %341 = vmatpush2.bf16.msra.mxu0 0
      %342 = vmatprep.subr.bf16.mxu0 0
      %343 = vmatpush2.bf16.msra.mxu0 0
      %344 = vmatprep.subr.bf16.mxu0 0
      %345 = vmatpush2.bf16.msra.mxu0 0
      %346 = vmatprep.subr.bf16.mxu0 0
      %347 = vmatpush2.bf16.msra.mxu0 0
      %348 = vmatprep.subr.bf16.mxu0 0
      %349 = vmatpush2.bf16.msra.mxu0 0
      %350 = vmatprep.subr.bf16.mxu0 0
      %351 = vmatpush2.bf16.msra.mxu0 0
      %352 = vmatprep.mubr.bf16.mxu0 0
      %353 = vmatmul.mubr.bf16.gmra.mxu0 %v318
      %v354 = vpop.f32.mrf.mxu0
      %v355 = vadd.f32 0.0, %v354
      %v356 = vpop.f32.mrf.mxu0
      %v357 = vadd.f32 0.0, %v356
      %v358 = vpop.f32.mrf.mxu0
      %v359 = vpop.f32.mrf.mxu0
      %360 = vdwg.mxu0
      %v361 = vld [vmem:[%s2] sm:$0xff]
      %v362 = vld [vmem:[%s2 + $0x8] sm:$0xff]
      %v365 = vunpack.c.l.b16 %v361
      %v366 = vunpack.c.h.b16 %v361
      %v367 = vunpack.c.l.b16 %v362
      %v368 = vunpack.c.h.b16 %v362
      %v369 = vpack.c.b16 %v367, %v365
      %v370 = vpack.c.b16 %v368, %v366
      %373 = vmatprep.subr.bf16.mxu0 0
      %374 = vmatpush1.bf16.msra.mxu0 0
      %375 = vmatprep.subr.bf16.mxu0 0
      %376 = vmatpush1.bf16.msra.mxu0 0
      %377 = vmatprep.subr.bf16.mxu0 0
      %378 = vmatpush1.bf16.msra.mxu0 0
      %379 = vmatprep.subr.bf16.mxu0 0
      %380 = vmatpush1.bf16.msra.mxu0 0
      %381 = vmatprep.subr.bf16.mxu0 0
      %382 = vmatpush1.bf16.msra.mxu0 0
      %383 = vmatprep.subr.bf16.mxu0 0
      %384 = vmatpush1.bf16.msra.mxu0 0
      %385 = vmatprep.subr.bf16.mxu0 0
      %386 = vmatpush1.bf16.msra.mxu0 0
      %387 = vmatprep.subr.bf16.mxu0 %v370
      %388 = vmatpush1.bf16.msra.mxu0 %v369
      %389 = vmatprep.subr.bf16.mxu0 0
      %390 = vmatpush2.bf16.msra.mxu0 0
      %391 = vmatprep.subr.bf16.mxu0 0
      %392 = vmatpush2.bf16.msra.mxu0 0
      %393 = vmatprep.subr.bf16.mxu0 0
      %394 = vmatpush2.bf16.msra.mxu0 0
      %395 = vmatprep.subr.bf16.mxu0 0
      %396 = vmatpush2.bf16.msra.mxu0 0
      %397 = vmatprep.subr.bf16.mxu0 0
      %398 = vmatpush2.bf16.msra.mxu0 0
      %399 = vmatprep.subr.bf16.mxu0 0
      %400 = vmatpush2.bf16.msra.mxu0 0
      %401 = vmatprep.subr.bf16.mxu0 0
      %402 = vmatpush2.bf16.msra.mxu0 0
      %403 = vmatprep.subr.bf16.mxu0 0
      %404 = vmatpush2.bf16.msra.mxu0 0
      %405 = vmatprep.mubr.bf16.mxu0 0
      %406 = vmatmul.mubr.bf16.gmra.mxu0 %v318
      %v407 = vpop.f32.mrf.mxu0
      %v408 = vadd.f32 0.0, %v407
      %v409 = vpop.f32.mrf.mxu0
      %v410 = vadd.f32 0.0, %v409
      %v411 = vpop.f32.mrf.mxu0
      %v412 = vpop.f32.mrf.mxu0
      %413 = vdwg.mxu0
      %v414 = vld [vmem:[%s3] sm:$0xff]
      %v415 = vld [vmem:[%s3 + $0x8] sm:$0xff]
      %v418 = vunpack.c.l.b16 %v414
      %v419 = vunpack.c.h.b16 %v414
      %v420 = vunpack.c.l.b16 %v415
      %v421 = vunpack.c.h.b16 %v415
      %v422 = vpack.c.b16 %v420, %v418
      %v423 = vpack.c.b16 %v421, %v419
      %426 = vmatprep.subr.bf16.mxu0 0
      %427 = vmatpush1.bf16.msra.mxu0 0
      %428 = vmatprep.subr.bf16.mxu0 0
      %429 = vmatpush1.bf16.msra.mxu0 0
      %430 = vmatprep.subr.bf16.mxu0 0
      %431 = vmatpush1.bf16.msra.mxu0 0
      %432 = vmatprep.subr.bf16.mxu0 0
      %433 = vmatpush1.bf16.msra.mxu0 0
      %434 = vmatprep.subr.bf16.mxu0 0
      %435 = vmatpush1.bf16.msra.mxu0 0
      %436 = vmatprep.subr.bf16.mxu0 0
      %437 = vmatpush1.bf16.msra.mxu0 0
      %438 = vmatprep.subr.bf16.mxu0 0
      %439 = vmatpush1.bf16.msra.mxu0 0
      %440 = vmatprep.subr.bf16.mxu0 %v423
      %441 = vmatpush1.bf16.msra.mxu0 %v422
      %442 = vmatprep.subr.bf16.mxu0 0
      %443 = vmatpush2.bf16.msra.mxu0 0
      %444 = vmatprep.subr.bf16.mxu0 0
      %445 = vmatpush2.bf16.msra.mxu0 0
      %446 = vmatprep.subr.bf16.mxu0 0
      %447 = vmatpush2.bf16.msra.mxu0 0
      %448 = vmatprep.subr.bf16.mxu0 0
      %449 = vmatpush2.bf16.msra.mxu0 0
      %450 = vmatprep.subr.bf16.mxu0 0
      %451 = vmatpush2.bf16.msra.mxu0 0
      %452 = vmatprep.subr.bf16.mxu0 0
      %453 = vmatpush2.bf16.msra.mxu0 0
      %454 = vmatprep.subr.bf16.mxu0 0
      %455 = vmatpush2.bf16.msra.mxu0 0
      %456 = vmatprep.subr.bf16.mxu0 0
      %457 = vmatpush2.bf16.msra.mxu0 0
      %458 = vmatprep.mubr.bf16.mxu0 0
      %459 = vmatmul.mubr.bf16.gmra.mxu0 %v318
      %v460 = vpop.f32.mrf.mxu0
      %v461 = vadd.f32 0.0, %v460
      %v462 = vpop.f32.mrf.mxu0
      %v463 = vadd.f32 0.0, %v462
      %v464 = vpop.f32.mrf.mxu0
      %v465 = vpop.f32.mrf.mxu0
      %466 = vdwg.mxu0
      %v467 = vld [vmem:[%s4] sm:$0xf]
      %v468 = vld [vmem:[%s4 + $0x4] sm:$0xf]
      %v469 = vld [vmem:[%s4 + $0x8] sm:$0xf]
      %v470 = vld [vmem:[%s4 + $0xc] sm:$0xf]
      %v471 = vld [vmem:[%s4 + $0x10] sm:$0xf]
      %v472 = vld [vmem:[%s4 + $0x14] sm:$0xf]
      %v473 = vld [vmem:[%s4 + $0x18] sm:$0xf]
      %v474 = vld [vmem:[%s4 + $0x1c] sm:$0xf]
      %v475 = vld [vmem:[%s4 + $0x20] sm:$0xf]
      %v476 = vld [vmem:[%s4 + $0x24] sm:$0xf]
      %v477 = vld [vmem:[%s4 + $0x28] sm:$0xf]
      %v478 = vld [vmem:[%s4 + $0x2c] sm:$0xf]
      %v479 = vld [vmem:[%s4 + $0x30] sm:$0xf]
      %v480 = vld [vmem:[%s4 + $0x34] sm:$0xf]
      %v481 = vld [vmem:[%s4 + $0x38] sm:$0xf]
      %v482 = vld [vmem:[%s4 + $0x3c] sm:$0xf]
      %v483 = vld [vmem:[%s4 + $0x40] sm:$0xf]
      %v484 = vld [vmem:[%s4 + $0x44] sm:$0xf]
      %v485 = vld [vmem:[%s4 + $0x48] sm:$0xf]
      %v486 = vld [vmem:[%s4 + $0x4c] sm:$0xf]
      %v487 = vld [vmem:[%s4 + $0x50] sm:$0xf]
      %v488 = vld [vmem:[%s4 + $0x54] sm:$0xf]
      %v489 = vld [vmem:[%s4 + $0x58] sm:$0xf]
      %v490 = vld [vmem:[%s4 + $0x5c] sm:$0xf]
      %v491 = vpack.c.bf16 %v355, %v355
      %v492 = vpack.c.bf16 %v408, %v408
      %v493 = vpack.c.bf16 %v461, %v461
      %vm494 = vcmask 523264
      %v496 = vsel %vm494, %v491, 0
      %v499 = vsel %vm494, %v492, 0
      %501 = vmatprep.subr.bf16.mxu0 0
      %502 = vmatpush1.bf16.xpose.msra.mxu0 0
      %503 = vmatprep.subr.bf16.mxu0 0
      %504 = vmatpush1.bf16.xpose.msra.mxu0 0
      %505 = vmatprep.subr.bf16.mxu0 0
      %506 = vmatpush1.bf16.xpose.msra.mxu0 0
      %507 = vmatprep.subr.bf16.mxu0 0
      %508 = vmatpush1.bf16.xpose.msra.mxu0 0
      %509 = vmatprep.subr.bf16.mxu0 0
      %510 = vmatpush1.bf16.xpose.msra.mxu0 0
      %511 = vmatprep.subr.bf16.mxu0 0
      %512 = vmatpush1.bf16.xpose.msra.mxu0 0
      %513 = vmatprep.subr.bf16.mxu0 0
      %514 = vmatpush1.bf16.xpose.msra.mxu0 0
      %515 = vmatprep.subr.bf16.mxu0 0
      %516 = vmatpush1.bf16.xpose.msra.mxu0 %v499
      %517 = vmatprep.subr.bf16.mxu0 0
      %518 = vmatpush2.bf16.xpose.msra.mxu0 0
      %519 = vmatprep.subr.bf16.mxu0 0
      %520 = vmatpush2.bf16.xpose.msra.mxu0 0
      %521 = vmatprep.subr.bf16.mxu0 0
      %522 = vmatpush2.bf16.xpose.msra.mxu0 0
      %523 = vmatprep.subr.bf16.mxu0 0
      %524 = vmatpush2.bf16.xpose.msra.mxu0 0
      %525 = vmatprep.subr.bf16.mxu0 0
      %526 = vmatpush2.bf16.xpose.msra.mxu0 0
      %527 = vmatprep.subr.bf16.mxu0 0
      %528 = vmatpush2.bf16.xpose.msra.mxu0 0
      %529 = vmatprep.subr.bf16.mxu0 0
      %530 = vmatpush2.bf16.xpose.msra.mxu0 0
      %531 = vmatprep.subr.bf16.mxu0 0
      %532 = vmatpush2.bf16.xpose.msra.mxu0 0
      %533 = vmatprep.mubr.bf16.mxu0 0
      %534 = vmatmul.mubr.bf16.gmra.mxu0 %v496
      %v535 = vpop.f32.mrf.mxu0
      %v536 = vadd.f32 0.0, %v535
      %v537 = vpop.f32.mrf.mxu0
      %v538 = vpop.f32.mrf.mxu0
      %v539 = vpop.f32.mrf.mxu0
      %540 = vdwg.mxu0
      %v541 = vmul.f32 %v536, 0.125
      %vm542 = vcmask 64512
      %v543 = vsel %vm542, %v541, -inf
      %544 = vmax.xlane.f32.xlu0 %v543
      %v545 = vpop.xlane.xlu0 %544
      %v546 = vsub.f32 %v541, %v545
      %v547 = vmul.f32 %v546, 1.442695
      %v548 = vpow.pop %v547
      %v549 = vsel %vm542, %v548, 0.0
      %550 = vadd.xlane.f32.xlu0 %v549
      %v551 = vpop.xlane.xlu0 %550
      %v552 = vrcp.pop %v551
      %v553 = vmul.f32 %v548, %v552
      %v554 = vpack.c.bf16 %v553, %v553
      %v556 = vsel %vm542, %v554, 0
      %vm558 = vcmask 1043456
      %v560 = vsel %vm558, %v493, 0
      %562 = vmatprep.subr.bf16.mxu0 0
      %563 = vmatpush1.bf16.msra.mxu0 0
      %564 = vmatprep.subr.bf16.mxu0 0
      %565 = vmatpush1.bf16.msra.mxu0 0
      %566 = vmatprep.subr.bf16.mxu0 0
      %567 = vmatpush1.bf16.msra.mxu0 0
      %568 = vmatprep.subr.bf16.mxu0 0
      %569 = vmatpush1.bf16.msra.mxu0 0
      %570 = vmatprep.subr.bf16.mxu0 0
      %571 = vmatpush1.bf16.msra.mxu0 0
      %572 = vmatprep.subr.bf16.mxu0 0
      %573 = vmatpush1.bf16.msra.mxu0 0
      %574 = vmatprep.subr.bf16.mxu0 0
      %575 = vmatpush1.bf16.msra.mxu0 0
      %576 = vmatprep.subr.bf16.mxu0 0
      %577 = vmatpush1.bf16.msra.mxu0 %v560
      %578 = vmatprep.subr.bf16.mxu0 0
      %579 = vmatpush2.bf16.msra.mxu0 0
      %580 = vmatprep.subr.bf16.mxu0 0
      %581 = vmatpush2.bf16.msra.mxu0 0
      %582 = vmatprep.subr.bf16.mxu0 0
      %583 = vmatpush2.bf16.msra.mxu0 0
      %584 = vmatprep.subr.bf16.mxu0 0
      %585 = vmatpush2.bf16.msra.mxu0 0
      %586 = vmatprep.subr.bf16.mxu0 0
      %587 = vmatpush2.bf16.msra.mxu0 0
      %588 = vmatprep.subr.bf16.mxu0 0
      %589 = vmatpush2.bf16.msra.mxu0 0
      %590 = vmatprep.subr.bf16.mxu0 0
      %591 = vmatpush2.bf16.msra.mxu0 0
      %592 = vmatprep.subr.bf16.mxu0 0
      %593 = vmatpush2.bf16.msra.mxu0 0
      %594 = vmatprep.mubr.bf16.mxu0 0
      %595 = vmatmul.mubr.bf16.gmra.mxu0 %v556
      %v596 = vpop.f32.mrf.mxu0
      %v597 = vadd.f32 0.0, %v596
      %v598 = vpop.f32.mrf.mxu0
      %v599 = vpop.f32.mrf.mxu0
      %v600 = vpop.f32.mrf.mxu0
      %601 = vdwg.mxu0
      %v602 = vpack.c.bf16 %v597, %v597
      %604 = vrot.lane.b32.xlu0 %v491, 64
      %v605 = vpop.permute.xlu0 %604
      %607 = vrot.lane.b32.xlu0 %v492, 64
      %v608 = vpop.permute.xlu0 %607
      %v610 = vsel %vm494, %v605, 0
      %v613 = vsel %vm494, %v608, 0
      %615 = vmatprep.subr.bf16.mxu0 0
      %616 = vmatpush1.bf16.xpose.msra.mxu0 0
      %617 = vmatprep.subr.bf16.mxu0 0
      %618 = vmatpush1.bf16.xpose.msra.mxu0 0
      %619 = vmatprep.subr.bf16.mxu0 0
      %620 = vmatpush1.bf16.xpose.msra.mxu0 0
      %621 = vmatprep.subr.bf16.mxu0 0
      %622 = vmatpush1.bf16.xpose.msra.mxu0 0
      %623 = vmatprep.subr.bf16.mxu0 0
      %624 = vmatpush1.bf16.xpose.msra.mxu0 0
      %625 = vmatprep.subr.bf16.mxu0 0
      %626 = vmatpush1.bf16.xpose.msra.mxu0 0
      %627 = vmatprep.subr.bf16.mxu0 0
      %628 = vmatpush1.bf16.xpose.msra.mxu0 0
      %629 = vmatprep.subr.bf16.mxu0 0
      %630 = vmatpush1.bf16.xpose.msra.mxu0 %v613
      %631 = vmatprep.subr.bf16.mxu0 0
      %632 = vmatpush2.bf16.xpose.msra.mxu0 0
      %633 = vmatprep.subr.bf16.mxu0 0
      %634 = vmatpush2.bf16.xpose.msra.mxu0 0
      %635 = vmatprep.subr.bf16.mxu0 0
      %636 = vmatpush2.bf16.xpose.msra.mxu0 0
      %637 = vmatprep.subr.bf16.mxu0 0
      %638 = vmatpush2.bf16.xpose.msra.mxu0 0
      %639 = vmatprep.subr.bf16.mxu0 0
      %640 = vmatpush2.bf16.xpose.msra.mxu0 0
      %641 = vmatprep.subr.bf16.mxu0 0
      %642 = vmatpush2.bf16.xpose.msra.mxu0 0
      %643 = vmatprep.subr.bf16.mxu0 0
      %644 = vmatpush2.bf16.xpose.msra.mxu0 0
      %645 = vmatprep.subr.bf16.mxu0 0
      %646 = vmatpush2.bf16.xpose.msra.mxu0 0
      %647 = vmatprep.mubr.bf16.mxu0 0
      %648 = vmatmul.mubr.bf16.gmra.mxu0 %v610
      %v649 = vpop.f32.mrf.mxu0
      %v650 = vadd.f32 0.0, %v649
      %v651 = vpop.f32.mrf.mxu0
      %v652 = vpop.f32.mrf.mxu0
      %v653 = vpop.f32.mrf.mxu0
      %654 = vdwg.mxu0
      %v655 = vmul.f32 %v650, 0.125
      %v656 = vsel %vm542, %v655, -inf
      %657 = vmax.xlane.f32.xlu0 %v656
      %v658 = vpop.xlane.xlu0 %657
      %v659 = vsub.f32 %v655, %v658
      %v660 = vmul.f32 %v659, 1.442695
      %v661 = vpow.pop %v660
      %v662 = vsel %vm542, %v661, 0.0
      %663 = vadd.xlane.f32.xlu0 %v662
      %v664 = vpop.xlane.xlu0 %663
      %v665 = vrcp.pop %v664
      %v666 = vmul.f32 %v661, %v665
      %v667 = vpack.c.bf16 %v666, %v666
      %669 = vrot.lane.b32.xlu0 %v493, 64
      %v670 = vpop.permute.xlu0 %669
      %v672 = vsel %vm542, %v667, 0
      %v675 = vsel %vm558, %v670, 0
      %677 = vmatprep.subr.bf16.mxu0 0
      %678 = vmatpush1.bf16.msra.mxu0 0
      %679 = vmatprep.subr.bf16.mxu0 0
      %680 = vmatpush1.bf16.msra.mxu0 0
      %681 = vmatprep.subr.bf16.mxu0 0
      %682 = vmatpush1.bf16.msra.mxu0 0
      %683 = vmatprep.subr.bf16.mxu0 0
      %684 = vmatpush1.bf16.msra.mxu0 0
      %685 = vmatprep.subr.bf16.mxu0 0
      %686 = vmatpush1.bf16.msra.mxu0 0
      %687 = vmatprep.subr.bf16.mxu0 0
      %688 = vmatpush1.bf16.msra.mxu0 0
      %689 = vmatprep.subr.bf16.mxu0 0
      %690 = vmatpush1.bf16.msra.mxu0 0
      %691 = vmatprep.subr.bf16.mxu0 0
      %692 = vmatpush1.bf16.msra.mxu0 %v675
      %693 = vmatprep.subr.bf16.mxu0 0
      %694 = vmatpush2.bf16.msra.mxu0 0
      %695 = vmatprep.subr.bf16.mxu0 0
      %696 = vmatpush2.bf16.msra.mxu0 0
      %697 = vmatprep.subr.bf16.mxu0 0
      %698 = vmatpush2.bf16.msra.mxu0 0
      %699 = vmatprep.subr.bf16.mxu0 0
      %700 = vmatpush2.bf16.msra.mxu0 0
      %701 = vmatprep.subr.bf16.mxu0 0
      %702 = vmatpush2.bf16.msra.mxu0 0
      %703 = vmatprep.subr.bf16.mxu0 0
      %704 = vmatpush2.bf16.msra.mxu0 0
      %705 = vmatprep.subr.bf16.mxu0 0
      %706 = vmatpush2.bf16.msra.mxu0 0
      %707 = vmatprep.subr.bf16.mxu0 0
      %708 = vmatpush2.bf16.msra.mxu0 0
      %709 = vmatprep.mubr.bf16.mxu0 0
      %710 = vmatmul.mubr.bf16.gmra.mxu0 %v672
      %v711 = vpop.f32.mrf.mxu0
      %v712 = vadd.f32 0.0, %v711
      %v713 = vpop.f32.mrf.mxu0
      %v714 = vpop.f32.mrf.mxu0
      %v715 = vpop.f32.mrf.mxu0
      %716 = vdwg.mxu0
      %v717 = vpack.c.bf16 %v712, %v712
      %v726 = vunpack.c.l.b16 %v475
      %v727 = vunpack.c.l.b16 %v476
      %v728 = vunpack.c.l.b16 %v477
      %v729 = vunpack.c.l.b16 %v478
      %v730 = vunpack.c.l.b16 %v479
      %v731 = vunpack.c.l.b16 %v480
      %v732 = vunpack.c.l.b16 %v481
      %v733 = vunpack.c.l.b16 %v482
      %v734 = vpack.c.b16 %v727, %v726
      %v735 = vpack.c.b16 %v729, %v728
      %v736 = vpack.c.b16 %v731, %v730
      %v737 = vpack.c.b16 %v733, %v732
      %v743 = vsel %vm494, %v717, 0
      %745 = vmatprep.subr.bf16.mxu0 0
      %746 = vmatpush1.bf16.msra.mxu0 0
      %747 = vmatprep.subr.bf16.mxu0 0
      %748 = vmatpush1.bf16.msra.mxu0 0
      %749 = vmatprep.subr.bf16.mxu0 0
      %750 = vmatpush1.bf16.msra.mxu0 0
      %751 = vmatprep.subr.bf16.mxu0 0
      %752 = vmatpush1.bf16.msra.mxu0 0
      %753 = vmatprep.subr.bf16.mxu0 0
      %754 = vmatpush1.bf16.msra.mxu0 %v737
      %755 = vmatprep.subr.bf16.mxu0 0
      %756 = vmatpush1.bf16.msra.mxu0 %v736
      %757 = vmatprep.subr.bf16.mxu0 0
      %758 = vmatpush1.bf16.msra.mxu0 %v735
      %759 = vmatprep.subr.bf16.mxu0 0
      %760 = vmatpush1.bf16.msra.mxu0 %v734
      %761 = vmatprep.subr.bf16.mxu0 0
      %762 = vmatpush2.bf16.msra.mxu0 0
      %763 = vmatprep.subr.bf16.mxu0 0
      %764 = vmatpush2.bf16.msra.mxu0 0
      %765 = vmatprep.subr.bf16.mxu0 0
      %766 = vmatpush2.bf16.msra.mxu0 0
      %767 = vmatprep.subr.bf16.mxu0 0
      %768 = vmatpush2.bf16.msra.mxu0 0
      %769 = vmatprep.subr.bf16.mxu0 0
      %770 = vmatpush2.bf16.msra.mxu0 0
      %771 = vmatprep.subr.bf16.mxu0 0
      %772 = vmatpush2.bf16.msra.mxu0 0
      %773 = vmatprep.subr.bf16.mxu0 0
      %774 = vmatpush2.bf16.msra.mxu0 0
      %775 = vmatprep.subr.bf16.mxu0 0
      %776 = vmatpush2.bf16.msra.mxu0 0
      %777 = vmatprep.mubr.bf16.mxu0 0
      %778 = vmatmul.mubr.bf16.gmra.mxu0 %v743
      %v779 = vpop.f32.mrf.mxu0
      %v780 = vadd.f32 0.0, %v779
      %v781 = vpop.f32.mrf.mxu0
      %v782 = vpop.f32.mrf.mxu0
      %v783 = vpop.f32.mrf.mxu0
      %784 = vdwg.mxu0
      %v793 = vunpack.c.l.b16 %v467
      %v794 = vunpack.c.l.b16 %v468
      %v795 = vunpack.c.l.b16 %v469
      %v796 = vunpack.c.l.b16 %v470
      %v797 = vunpack.c.l.b16 %v471
      %v798 = vunpack.c.l.b16 %v472
      %v799 = vunpack.c.l.b16 %v473
      %v800 = vunpack.c.l.b16 %v474
      %v801 = vpack.c.b16 %v794, %v793
      %v802 = vpack.c.b16 %v796, %v795
      %v803 = vpack.c.b16 %v798, %v797
      %v804 = vpack.c.b16 %v800, %v799
      %v810 = vsel %vm494, %v602, 0
      %812 = vmatprep.subr.bf16.mxu0 0
      %813 = vmatpush1.bf16.msra.mxu0 0
      %814 = vmatprep.subr.bf16.mxu0 0
      %815 = vmatpush1.bf16.msra.mxu0 0
      %816 = vmatprep.subr.bf16.mxu0 0
      %817 = vmatpush1.bf16.msra.mxu0 0
      %818 = vmatprep.subr.bf16.mxu0 0
      %819 = vmatpush1.bf16.msra.mxu0 0
      %820 = vmatprep.subr.bf16.mxu0 0
      %821 = vmatpush1.bf16.msra.mxu0 %v804
      %822 = vmatprep.subr.bf16.mxu0 0
      %823 = vmatpush1.bf16.msra.mxu0 %v803
      %824 = vmatprep.subr.bf16.mxu0 0
      %825 = vmatpush1.bf16.msra.mxu0 %v802
      %826 = vmatprep.subr.bf16.mxu0 0
      %827 = vmatpush1.bf16.msra.mxu0 %v801
      %828 = vmatprep.subr.bf16.mxu0 0
      %829 = vmatpush2.bf16.msra.mxu0 0
      %830 = vmatprep.subr.bf16.mxu0 0
      %831 = vmatpush2.bf16.msra.mxu0 0
      %832 = vmatprep.subr.bf16.mxu0 0
      %833 = vmatpush2.bf16.msra.mxu0 0
      %834 = vmatprep.subr.bf16.mxu0 0
      %835 = vmatpush2.bf16.msra.mxu0 0
      %836 = vmatprep.subr.bf16.mxu0 0
      %837 = vmatpush2.bf16.msra.mxu0 0
      %838 = vmatprep.subr.bf16.mxu0 0
      %839 = vmatpush2.bf16.msra.mxu0 0
      %840 = vmatprep.subr.bf16.mxu0 0
      %841 = vmatpush2.bf16.msra.mxu0 0
      %842 = vmatprep.subr.bf16.mxu0 0
      %843 = vmatpush2.bf16.msra.mxu0 0
      %844 = vmatprep.mubr.bf16.mxu0 0
      %845 = vmatmul.mubr.bf16.gmra.mxu0 %v810
      %v846 = vpop.f32.mrf.mxu0
      %v847 = vadd.f32 %v780, %v846
      %v848 = vpop.f32.mrf.mxu0
      %v849 = vpop.f32.mrf.mxu0
      %v850 = vpop.f32.mrf.mxu0
      %851 = vdwg.mxu0
      %v852 = vpack.c.bf16 %v357, %v357
      %v853 = vpack.c.bf16 %v410, %v410
      %v854 = vpack.c.bf16 %v463, %v463
      %v856 = vsel %vm494, %v852, 0
      %v859 = vsel %vm494, %v853, 0
      %861 = vmatprep.subr.bf16.mxu0 0
      %862 = vmatpush1.bf16.xpose.msra.mxu0 0
      %863 = vmatprep.subr.bf16.mxu0 0
      %864 = vmatpush1.bf16.xpose.msra.mxu0 0
      %865 = vmatprep.subr.bf16.mxu0 0
      %866 = vmatpush1.bf16.xpose.msra.mxu0 0
      %867 = vmatprep.subr.bf16.mxu0 0
      %868 = vmatpush1.bf16.xpose.msra.mxu0 0
      %869 = vmatprep.subr.bf16.mxu0 0
      %870 = vmatpush1.bf16.xpose.msra.mxu0 0
      %871 = vmatprep.subr.bf16.mxu0 0
      %872 = vmatpush1.bf16.xpose.msra.mxu0 0
      %873 = vmatprep.subr.bf16.mxu0 0
      %874 = vmatpush1.bf16.xpose.msra.mxu0 0
      %875 = vmatprep.subr.bf16.mxu0 0
      %876 = vmatpush1.bf16.xpose.msra.mxu0 %v859
      %877 = vmatprep.subr.bf16.mxu0 0
      %878 = vmatpush2.bf16.xpose.msra.mxu0 0
      %879 = vmatprep.subr.bf16.mxu0 0
      %880 = vmatpush2.bf16.xpose.msra.mxu0 0
      %881 = vmatprep.subr.bf16.mxu0 0
      %882 = vmatpush2.bf16.xpose.msra.mxu0 0
      %883 = vmatprep.subr.bf16.mxu0 0
      %884 = vmatpush2.bf16.xpose.msra.mxu0 0
      %885 = vmatprep.subr.bf16.mxu0 0
      %886 = vmatpush2.bf16.xpose.msra.mxu0 0
      %887 = vmatprep.subr.bf16.mxu0 0
      %888 = vmatpush2.bf16.xpose.msra.mxu0 0
      %889 = vmatprep.subr.bf16.mxu0 0
      %890 = vmatpush2.bf16.xpose.msra.mxu0 0
      %891 = vmatprep.subr.bf16.mxu0 0
      %892 = vmatpush2.bf16.xpose.msra.mxu0 0
      %893 = vmatprep.mubr.bf16.mxu0 0
      %894 = vmatmul.mubr.bf16.gmra.mxu0 %v856
      %v895 = vpop.f32.mrf.mxu0
      %v896 = vadd.f32 0.0, %v895
      %v897 = vpop.f32.mrf.mxu0
      %v898 = vpop.f32.mrf.mxu0
      %v899 = vpop.f32.mrf.mxu0
      %900 = vdwg.mxu0
      %v901 = vmul.f32 %v896, 0.125
      %v902 = vsel %vm542, %v901, -inf
      %903 = vmax.xlane.f32.xlu0 %v902
      %v904 = vpop.xlane.xlu0 %903
      %v905 = vsub.f32 %v901, %v904
      %v906 = vmul.f32 %v905, 1.442695
      %v907 = vpow.pop %v906
      %v908 = vsel %vm542, %v907, 0.0
      %909 = vadd.xlane.f32.xlu0 %v908
      %v910 = vpop.xlane.xlu0 %909
      %v911 = vrcp.pop %v910
      %v912 = vmul.f32 %v907, %v911
      %v913 = vpack.c.bf16 %v912, %v912
      %v915 = vsel %vm542, %v913, 0
      %v918 = vsel %vm558, %v854, 0
      %920 = vmatprep.subr.bf16.mxu0 0
      %921 = vmatpush1.bf16.msra.mxu0 0
      %922 = vmatprep.subr.bf16.mxu0 0
      %923 = vmatpush1.bf16.msra.mxu0 0
      %924 = vmatprep.subr.bf16.mxu0 0
      %925 = vmatpush1.bf16.msra.mxu0 0
      %926 = vmatprep.subr.bf16.mxu0 0
      %927 = vmatpush1.bf16.msra.mxu0 0
      %928 = vmatprep.subr.bf16.mxu0 0
      %929 = vmatpush1.bf16.msra.mxu0 0
      %930 = vmatprep.subr.bf16.mxu0 0
      %931 = vmatpush1.bf16.msra.mxu0 0
      %932 = vmatprep.subr.bf16.mxu0 0
      %933 = vmatpush1.bf16.msra.mxu0 0
      %934 = vmatprep.subr.bf16.mxu0 0
      %935 = vmatpush1.bf16.msra.mxu0 %v918
      %936 = vmatprep.subr.bf16.mxu0 0
      %937 = vmatpush2.bf16.msra.mxu0 0
      %938 = vmatprep.subr.bf16.mxu0 0
      %939 = vmatpush2.bf16.msra.mxu0 0
      %940 = vmatprep.subr.bf16.mxu0 0
      %941 = vmatpush2.bf16.msra.mxu0 0
      %942 = vmatprep.subr.bf16.mxu0 0
      %943 = vmatpush2.bf16.msra.mxu0 0
      %944 = vmatprep.subr.bf16.mxu0 0
      %945 = vmatpush2.bf16.msra.mxu0 0
      %946 = vmatprep.subr.bf16.mxu0 0
      %947 = vmatpush2.bf16.msra.mxu0 0
      %948 = vmatprep.subr.bf16.mxu0 0
      %949 = vmatpush2.bf16.msra.mxu0 0
      %950 = vmatprep.subr.bf16.mxu0 0
      %951 = vmatpush2.bf16.msra.mxu0 0
      %952 = vmatprep.mubr.bf16.mxu0 0
      %953 = vmatmul.mubr.bf16.gmra.mxu0 %v915
      %v954 = vpop.f32.mrf.mxu0
      %v955 = vadd.f32 0.0, %v954
      %v956 = vpop.f32.mrf.mxu0
      %v957 = vpop.f32.mrf.mxu0
      %v958 = vpop.f32.mrf.mxu0
      %959 = vdwg.mxu0
      %v960 = vpack.c.bf16 %v955, %v955
      %v969 = vunpack.c.l.b16 %v483
      %v970 = vunpack.c.l.b16 %v484
      %v971 = vunpack.c.l.b16 %v485
      %v972 = vunpack.c.l.b16 %v486
      %v973 = vunpack.c.l.b16 %v487
      %v974 = vunpack.c.l.b16 %v488
      %v975 = vunpack.c.l.b16 %v489
      %v976 = vunpack.c.l.b16 %v490
      %v977 = vpack.c.b16 %v970, %v969
      %v978 = vpack.c.b16 %v972, %v971
      %v979 = vpack.c.b16 %v974, %v973
      %v980 = vpack.c.b16 %v976, %v975
      %v986 = vsel %vm494, %v960, 0
      %988 = vmatprep.subr.bf16.mxu0 0
      %989 = vmatpush1.bf16.msra.mxu0 0
      %990 = vmatprep.subr.bf16.mxu0 0
      %991 = vmatpush1.bf16.msra.mxu0 0
      %992 = vmatprep.subr.bf16.mxu0 0
      %993 = vmatpush1.bf16.msra.mxu0 0
      %994 = vmatprep.subr.bf16.mxu0 0
      %995 = vmatpush1.bf16.msra.mxu0 0
      %996 = vmatprep.subr.bf16.mxu0 0
      %997 = vmatpush1.bf16.msra.mxu0 %v980
      %998 = vmatprep.subr.bf16.mxu0 0
      %999 = vmatpush1.bf16.msra.mxu0 %v979
      %1000 = vmatprep.subr.bf16.mxu0 0
      %1001 = vmatpush1.bf16.msra.mxu0 %v978
      %1002 = vmatprep.subr.bf16.mxu0 0
      %1003 = vmatpush1.bf16.msra.mxu0 %v977
      %1004 = vmatprep.subr.bf16.mxu0 0
      %1005 = vmatpush2.bf16.msra.mxu0 0
      %1006 = vmatprep.subr.bf16.mxu0 0
      %1007 = vmatpush2.bf16.msra.mxu0 0
      %1008 = vmatprep.subr.bf16.mxu0 0
      %1009 = vmatpush2.bf16.msra.mxu0 0
      %1010 = vmatprep.subr.bf16.mxu0 0
      %1011 = vmatpush2.bf16.msra.mxu0 0
      %1012 = vmatprep.subr.bf16.mxu0 0
      %1013 = vmatpush2.bf16.msra.mxu0 0
      %1014 = vmatprep.subr.bf16.mxu0 0
      %1015 = vmatpush2.bf16.msra.mxu0 0
      %1016 = vmatprep.subr.bf16.mxu0 0
      %1017 = vmatpush2.bf16.msra.mxu0 0
      %1018 = vmatprep.subr.bf16.mxu0 0
      %1019 = vmatpush2.bf16.msra.mxu0 0
      %1020 = vmatprep.mubr.bf16.mxu0 0
      %1021 = vmatmul.mubr.bf16.gmra.mxu0 %v986
      %v1022 = vpop.f32.mrf.mxu0
      %v1023 = vadd.f32 0.0, %v1022
      %v1024 = vpop.f32.mrf.mxu0
      %v1025 = vpop.f32.mrf.mxu0
      %v1026 = vpop.f32.mrf.mxu0
      %1027 = vdwg.mxu0
      %v1028 = vadd.f32 %v847, %v1023
      %v1029 = vadd.f32 %v302, %v1028
      %v1030 = vld [vmem:[%s5] sm:$0x1]
      %v1032 = vlaneseq
      %v1033 = vshrl.u32 %v1032, 7
      %v1034 = vsub.s32 0, %v1033
      %v1035 = vrot.slane %v1030, %v1034
      %v1037 = vadd.f32 %v1029, %v1035
      %v1038 = vsel %vm316, %v1037, 0.0
      %1039 = vadd.xlane.f32.xlu0 %v1038
      %v1040 = vpop.xlane.xlu0 %1039
      %v1041 = vrcp.pop 16.0
      %v1042 = vmul.f32 %v1040, %v1041
      %v1043 = vsub.f32 %v1037, %v1042
      %v1044 = vmul.f32 %v1043, %v1043
      %v1045 = vsel %vm316, %v1044, 0.0
      %1046 = vadd.xlane.f32.xlu0 %v1045
      %v1047 = vpop.xlane.xlu0 %1046
      %v1048 = vmul.f32 %v1047, 0.06666667
      %v1049 = vrsqrt.pop %v1048
      %v1050 = vmul.f32 %v1048, %v1049
      %vm1051 = vcmp.eq.f32.partialorder %v1048, inf
      %v1052 = vsel %vm1051, %v1048, %v1050
      %vm1053 = vcmp.eq.f32.partialorder %v1048, 0.0
      %v1054 = vand.u32 %v1048, 2147483648
      %v1055 = vsel %vm1053, %v1054, %v1052
      %v1056 = vadd.f32 %v1055, 0.001
      %v1057 = vrcp.pop %v1056
      %v1058 = vld [vmem:[%s6] sm:$0x1]
      %v1059 = vmul.f32 %v1043, %v1057
      %v1061 = vlaneseq
      %v1062 = vshrl.u32 %v1061, 7
      %v1063 = vsub.s32 0, %v1062
      %v1064 = vrot.slane %v1058, %v1063
      %v1066 = vmul.f32 %v1064, %v1059
      %v1067 = vld [vmem:[%s7] sm:$0x1]
      %v1069 = vlaneseq
      %v1070 = vshrl.u32 %v1069, 7
      %v1071 = vsub.s32 0, %v1070
      %v1072 = vrot.slane %v1067, %v1071
      %v1074 = vadd.f32 %v1066, %v1072
      %1075 = vst.msk [vmem:[%s300] sm:$0xff] %vm316, %v1074
      %p1076 = scmp.lt.s32.totalorder %s19, 1
      %s1077 = scalar_select %p1076, %s19, 1
      %s1078 = smul.addr %s1077, 8
      %s1079 = scalar_lea.vmem %s8, %s1078
      // Predicated region
      $region53: #{_lambda_.4} parent=51 // pred_check
        %p1080 = pneg %p210
      $region54: #{_lambda_.4} parent=51 // pred_check_branch
        %1082 = sbr.rel (%p1080) target = $region56
      $region55: #{_lambda_.4} parent=51 // pred_region
        _
      $region56: #{_lambda_.4} parent=51 // pred_fallthru
        _
    $region52: #{_lambda_.4} parent=5 // pred_fallthru
      _
    %p1083 = scmp.le.s32.totalorder 2, %s14
    // Predicated region
    $region57: #{_lambda_.4} parent=5 // pred_check
      %p1084 = pneg %p1083
    $region58: #{_lambda_.4} parent=5 // pred_check_branch
      %1086 = sbr.rel (%p1084) target = $region60
    $region59: #{_lambda_.4} parent=5 // pred_region
      %s1087 = ssub.s32 %s14, 2
      // Predicated region
      $region61: #{_lambda_.4} parent=59 // pred_check
        %p1088 = pneg %p216
      $region62: #{_lambda_.4} parent=59 // pred_check_branch
        %1090 = sbr.rel (%p1088) target = $region64
      $region63: #{_lambda_.4} parent=59 // pred_region
        %p1091 = scmp.lt.s32.totalorder %s20, 1
        %s1092 = scalar_select %p1091, %s20, 1
        %s1093 = smul.addr %s1092, 8
        %s1094 = scalar_lea.vmem %s8, %s1093
      $region64: #{_lambda_.4} parent=59 // pred_fallthru
        _
    $region60: #{_lambda_.4} parent=5 // pred_fallthru
      _
  $region6: #{_lambda_.4} parent=0 // loop_footer
    %s18 = sadd.s32 1, %s14
  $region7: #{_lambda_.4} parent=0 // loop_footer_branch
    %13 = sbr.rel target = $region3
  $region8: #{_lambda_.4} parent=0 // loop_exit
    _

// kernel: _lambda_.3
$region0: #{_lambda_.3}
  #allocation0 [shape = 'u32[]', space=smem, size = 0x4, offset = 0x4, fixed_abs, tag = 'smem constant byte address 0x4 - core index']
  #allocation1 [shape = 'u32[144,128]{1,0:T(1,128)}', space=vmem, size = 0x12000, scoped, tag = 'internal scratch']
  #allocation2 [shape = 'f32[64,64]{1,0:T(8,128)}', space=vmem, size = 0x8000, scoped, tag = 'scratch operand']
  #allocation3 [shape = 'f32[64,64]{1,0:T(8,128)}', space=vmem, size = 0x8000, scoped, tag = 'scratch operand']
  #allocation4 [shape = 'f32[8,8,16]{2,1,0:T(8,128)}', space=vmem, size = 0x8000, scoped, tag = 'scratch operand']
  #allocation5 [shape = 'f32[8,8,16]{2,1,0:T(8,128)}', space=vmem, size = 0x8000, scoped, tag = 'scratch operand']
  %s0 = inlined_call_operand.vmem [shape: f32[64,32], index: 0, kind: input, shape index: {}]
  %s1 = inlined_call_operand.vmem [shape: bf16[32,64], index: 1, kind: input, shape index: {}]
  %s2 = inlined_call_operand.vmem [shape: bf16[16,64], index: 2, kind: input, shape index: {}]
  %s3 = inlined_call_operand.vmem [shape: f32[1,64], index: 3, kind: input, shape index: {}]
  %s4 = inlined_call_operand.vmem [shape: bf16[32,64], index: 4, kind: input, shape index: {}]
  %s5 = inlined_call_operand.vmem [shape: bf16[16,64], index: 5, kind: input, shape index: {}]
  %s6 = inlined_call_operand.vmem [shape: f32[1,64], index: 6, kind: input, shape index: {}]
  %s7 = inlined_call_operand.vmem [shape: bf16[32,64], index: 7, kind: input, shape index: {}]
  %s8 = inlined_call_operand.vmem [shape: bf16[16,64], index: 8, kind: input, shape index: {}]
  %s9 = inlined_call_operand.vmem [shape: f32[1,64], index: 9, kind: input, shape index: {}]
  %s10 = inlined_call_operand.vmem [shape: f32[8,8,16], index: 10, kind: output, shape index: {}]
  %s11 = sld [smem:[#allocation0]]
  $region50: #{_lambda_.3} parent=0
    _
  %s13 = ssub.s32 1, %s11
  %s14 = scalar_select 0, %s13, %s11
  // Predicated region
  $region2: #{_lambda_.3} parent=0 // pred_check
    _
  $region3: #{_lambda_.3} parent=0 // pred_check_branch
    %16 = sbr.rel (0) target = $region5
  $region4: #{_lambda_.3} parent=0 // pred_region
    _
  $region5: #{_lambda_.3} parent=0 // pred_fallthru
    _
  // Predicated region
  $region6: #{_lambda_.3} parent=0 // pred_check
    _
  $region7: #{_lambda_.3} parent=0 // pred_check_branch
    %18 = sbr.rel (0) target = $region9
  $region8: #{_lambda_.3} parent=0 // pred_region
    _
  $region9: #{_lambda_.3} parent=0 // pred_fallthru
    _
  // Predicated region
  $region10: #{_lambda_.3} parent=0 // pred_check
    _
  $region11: #{_lambda_.3} parent=0 // pred_check_branch
    %20 = sbr.rel (0) target = $region13
  $region12: #{_lambda_.3} parent=0 // pred_region
    _
  $region13: #{_lambda_.3} parent=0 // pred_fallthru
    _
  // Predicated region
  $region14: #{_lambda_.3} parent=0 // pred_check
    _
  $region15: #{_lambda_.3} parent=0 // pred_check_branch
    %22 = sbr.rel (0) target = $region17
  $region16: #{_lambda_.3} parent=0 // pred_region
    _
  $region17: #{_lambda_.3} parent=0 // pred_fallthru
    _
  // Predicated region
  $region18: #{_lambda_.3} parent=0 // pred_check
    _
  $region19: #{_lambda_.3} parent=0 // pred_check_branch
    %24 = sbr.rel (0) target = $region21
  $region20: #{_lambda_.3} parent=0 // pred_region
    _
  $region21: #{_lambda_.3} parent=0 // pred_fallthru
    _
  // Predicated region
  $region22: #{_lambda_.3} parent=0 // pred_check
    _
  $region23: #{_lambda_.3} parent=0 // pred_check_branch
    %26 = sbr.rel (0) target = $region25
  $region24: #{_lambda_.3} parent=0 // pred_region
    _
  $region25: #{_lambda_.3} parent=0 // pred_fallthru
    _
  // Predicated region
  $region26: #{_lambda_.3} parent=0 // pred_check
    _
  $region27: #{_lambda_.3} parent=0 // pred_check_branch
    %28 = sbr.rel (0) target = $region29
  $region28: #{_lambda_.3} parent=0 // pred_region
    _
  $region29: #{_lambda_.3} parent=0 // pred_fallthru
    _
  // Predicated region
  $region30: #{_lambda_.3} parent=0 // pred_check
    _
  $region31: #{_lambda_.3} parent=0 // pred_check_branch
    %30 = sbr.rel (0) target = $region33
  $region32: #{_lambda_.3} parent=0 // pred_region
    _
  $region33: #{_lambda_.3} parent=0 // pred_fallthru
    _
  // Predicated region
  $region34: #{_lambda_.3} parent=0 // pred_check
    _
  $region35: #{_lambda_.3} parent=0 // pred_check_branch
    %32 = sbr.rel (0) target = $region37
  $region36: #{_lambda_.3} parent=0 // pred_region
    _
  $region37: #{_lambda_.3} parent=0 // pred_fallthru
    _
  // Predicated region
  $region38: #{_lambda_.3} parent=0 // pred_check
    _
  $region39: #{_lambda_.3} parent=0 // pred_check_branch
    %34 = sbr.rel (0) target = $region41
  $region40: #{_lambda_.3} parent=0 // pred_region
    _
  $region41: #{_lambda_.3} parent=0 // pred_fallthru
    _
  %v36 = vld [vmem:[%s0] sm:$0xff]
  %v37 = vld [vmem:[%s0 + $0x8] sm:$0xff]
  %v38 = vld [vmem:[%s0 + $0x10] sm:$0xff]
  %v39 = vld [vmem:[%s0 + $0x18] sm:$0xff]
  %v40 = vld [vmem:[%s0 + $0x20] sm:$0xff]
  %v41 = vld [vmem:[%s0 + $0x28] sm:$0xff]
  %v42 = vld [vmem:[%s0 + $0x30] sm:$0xff]
  %v43 = vld [vmem:[%s0 + $0x38] sm:$0xff]
  %v44 = vpack.c.bf16 %v37, %v36
  %v45 = vpack.c.bf16 %v39, %v38
  %v46 = vpack.c.bf16 %v41, %v40
  %v47 = vpack.c.bf16 %v43, %v42
  %v48 = vld [vmem:[%s1] sm:$0xf]
  %v49 = vld [vmem:[%s1 + $0x4] sm:$0xf]
  %v50 = vld [vmem:[%s1 + $0x8] sm:$0xf]
  %v51 = vld [vmem:[%s1 + $0xc] sm:$0xf]
  %v52 = vld [vmem:[%s3] sm:$0x1]
  %v54 = vlaneseq
  %v55 = vshrl.u32 %v54, 7
  %v56 = vsub.s32 0, %v55
  %v57 = vrot.slane %v52, %v56
  %v63 = vunpack.c.l.b16 %v48
  %v64 = vunpack.c.l.b16 %v49
  %v65 = vunpack.c.l.b16 %v50
  %v66 = vunpack.c.l.b16 %v51
  %v67 = vpack.c.b16 %v64, %v63
  %v68 = vpack.c.b16 %v66, %v65
  %vm71 = vcmask 261120
  %v73 = vsel %vm71, %v44, 0
  %v76 = vsel %vm71, %v45, 0
  %v79 = vsel %vm71, %v46, 0
  %v82 = vsel %vm71, %v47, 0
  %84 = vmatprep.subr.bf16.mxu0 0
  %85 = vmatpush1.bf16.msra.mxu0 0
  %86 = vmatprep.subr.bf16.mxu0 0
  %87 = vmatpush1.bf16.msra.mxu0 0
  %88 = vmatprep.subr.bf16.mxu0 0
  %89 = vmatpush1.bf16.msra.mxu0 0
  %90 = vmatprep.subr.bf16.mxu0 0
  %91 = vmatpush1.bf16.msra.mxu0 0
  %92 = vmatprep.subr.bf16.mxu0 0
  %93 = vmatpush1.bf16.msra.mxu0 0
  %94 = vmatprep.subr.bf16.mxu0 0
  %95 = vmatpush1.bf16.msra.mxu0 0
  %96 = vmatprep.subr.bf16.mxu0 0
  %97 = vmatpush1.bf16.msra.mxu0 %v68
  %98 = vmatprep.subr.bf16.mxu0 0
  %99 = vmatpush1.bf16.msra.mxu0 %v67
  %100 = vmatprep.subr.bf16.mxu0 0
  %101 = vmatpush2.bf16.msra.mxu0 0
  %102 = vmatprep.subr.bf16.mxu0 0
  %103 = vmatpush2.bf16.msra.mxu0 0
  %104 = vmatprep.subr.bf16.mxu0 0
  %105 = vmatpush2.bf16.msra.mxu0 0
  %106 = vmatprep.subr.bf16.mxu0 0
  %107 = vmatpush2.bf16.msra.mxu0 0
  %108 = vmatprep.subr.bf16.mxu0 0
  %109 = vmatpush2.bf16.msra.mxu0 0
  %110 = vmatprep.subr.bf16.mxu0 0
  %111 = vmatpush2.bf16.msra.mxu0 0
  %112 = vmatprep.subr.bf16.mxu0 0
  %113 = vmatpush2.bf16.msra.mxu0 0
  %114 = vmatprep.subr.bf16.mxu0 0
  %115 = vmatpush2.bf16.msra.mxu0 0
  %116 = vmatprep.mubr.bf16.mxu0 0
  %117 = vmatmul.mubr.bf16.gmra.mxu0 %v73
  %v118 = vpop.f32.mrf.mxu0
  %v119 = vadd.f32 %v57, %v118
  %v120 = vpop.f32.mrf.mxu0
  %v121 = vpop.f32.mrf.mxu0
  %v122 = vadd.f32 %v57, %v121
  %v123 = vpop.f32.mrf.mxu0
  %124 = vmatprep.mubr.bf16.mxu0 0
  %125 = vmatmul.mubr.bf16.gmra.mxu0 %v76
  %v126 = vpop.f32.mrf.mxu0
  %v127 = vadd.f32 %v57, %v126
  %v128 = vpop.f32.mrf.mxu0
  %v129 = vpop.f32.mrf.mxu0
  %v130 = vadd.f32 %v57, %v129
  %v131 = vpop.f32.mrf.mxu0
  %132 = vmatprep.mubr.bf16.mxu0 0
  %133 = vmatmul.mubr.bf16.gmra.mxu0 %v79
  %v134 = vpop.f32.mrf.mxu0
  %v135 = vadd.f32 %v57, %v134
  %v136 = vpop.f32.mrf.mxu0
  %v137 = vpop.f32.mrf.mxu0
  %v138 = vadd.f32 %v57, %v137
  %v139 = vpop.f32.mrf.mxu0
  %140 = vmatprep.mubr.bf16.mxu0 0
  %141 = vmatmul.mubr.bf16.gmra.mxu0 %v82
  %v142 = vpop.f32.mrf.mxu0
  %v143 = vadd.f32 %v57, %v142
  %v144 = vpop.f32.mrf.mxu0
  %v145 = vpop.f32.mrf.mxu0
  %v146 = vadd.f32 %v57, %v145
  %v147 = vpop.f32.mrf.mxu0
  %148 = vdwg.mxu0
  %vm149 = vcmask 523264
  %150 = vst.msk [vmem:[#allocation2] sm:$0xff] %vm149, %v119
  %151 = vst.msk [vmem:[#allocation2 + $0x8] sm:$0xff] %vm149, %v122
  %152 = vst.msk [vmem:[#allocation2 + $0x10] sm:$0xff] %vm149, %v127
  %153 = vst.msk [vmem:[#allocation2 + $0x18] sm:$0xff] %vm149, %v130
  %154 = vst.msk [vmem:[#allocation2 + $0x20] sm:$0xff] %vm149, %v135
  %155 = vst.msk [vmem:[#allocation2 + $0x28] sm:$0xff] %vm149, %v138
  %156 = vst.msk [vmem:[#allocation2 + $0x30] sm:$0xff] %vm149, %v143
  %157 = vst.msk [vmem:[#allocation2 + $0x38] sm:$0xff] %vm149, %v146
  %v158 = vld [vmem:[%s4] sm:$0xf]
  %v159 = vld [vmem:[%s4 + $0x4] sm:$0xf]
  %v160 = vld [vmem:[%s4 + $0x8] sm:$0xf]
  %v161 = vld [vmem:[%s4 + $0xc] sm:$0xf]
  %v162 = vld [vmem:[%s6] sm:$0x1]
  %v164 = vlaneseq
  %v165 = vshrl.u32 %v164, 7
  %v166 = vsub.s32 0, %v165
  %v167 = vrot.slane %v162, %v166
  %v173 = vunpack.c.l.b16 %v158
  %v174 = vunpack.c.l.b16 %v159
  %v175 = vunpack.c.l.b16 %v160
  %v176 = vunpack.c.l.b16 %v161
  %v177 = vpack.c.b16 %v174, %v173
  %v178 = vpack.c.b16 %v176, %v175
  %181 = vmatprep.subr.bf16.mxu0 0
  %182 = vmatpush1.bf16.msra.mxu0 0
  %183 = vmatprep.subr.bf16.mxu0 0
  %184 = vmatpush1.bf16.msra.mxu0 0
  %185 = vmatprep.subr.bf16.mxu0 0
  %186 = vmatpush1.bf16.msra.mxu0 0
  %187 = vmatprep.subr.bf16.mxu0 0
  %188 = vmatpush1.bf16.msra.mxu0 0
  %189 = vmatprep.subr.bf16.mxu0 0
  %190 = vmatpush1.bf16.msra.mxu0 0
  %191 = vmatprep.subr.bf16.mxu0 0
  %192 = vmatpush1.bf16.msra.mxu0 0
  %193 = vmatprep.subr.bf16.mxu0 0
  %194 = vmatpush1.bf16.msra.mxu0 %v178
  %195 = vmatprep.subr.bf16.mxu0 0
  %196 = vmatpush1.bf16.msra.mxu0 %v177
  %197 = vmatprep.subr.bf16.mxu0 0
  %198 = vmatpush2.bf16.msra.mxu0 0
  %199 = vmatprep.subr.bf16.mxu0 0
  %200 = vmatpush2.bf16.msra.mxu0 0
  %201 = vmatprep.subr.bf16.mxu0 0
  %202 = vmatpush2.bf16.msra.mxu0 0
  %203 = vmatprep.subr.bf16.mxu0 0
  %204 = vmatpush2.bf16.msra.mxu0 0
  %205 = vmatprep.subr.bf16.mxu0 0
  %206 = vmatpush2.bf16.msra.mxu0 0
  %207 = vmatprep.subr.bf16.mxu0 0
  %208 = vmatpush2.bf16.msra.mxu0 0
  %209 = vmatprep.subr.bf16.mxu0 0
  %210 = vmatpush2.bf16.msra.mxu0 0
  %211 = vmatprep.subr.bf16.mxu0 0
  %212 = vmatpush2.bf16.msra.mxu0 0
  %213 = vmatprep.mubr.bf16.mxu0 0
  %214 = vmatmul.mubr.bf16.gmra.mxu0 %v73
  %v215 = vpop.f32.mrf.mxu0
  %v216 = vadd.f32 %v167, %v215
  %v217 = vpop.f32.mrf.mxu0
  %v218 = vpop.f32.mrf.mxu0
  %v219 = vadd.f32 %v167, %v218
  %v220 = vpop.f32.mrf.mxu0
  %221 = vmatprep.mubr.bf16.mxu0 0
  %222 = vmatmul.mubr.bf16.gmra.mxu0 %v76
  %v223 = vpop.f32.mrf.mxu0
  %v224 = vadd.f32 %v167, %v223
  %v225 = vpop.f32.mrf.mxu0
  %v226 = vpop.f32.mrf.mxu0
  %v227 = vadd.f32 %v167, %v226
  %v228 = vpop.f32.mrf.mxu0
  %229 = vmatprep.mubr.bf16.mxu0 0
  %230 = vmatmul.mubr.bf16.gmra.mxu0 %v79
  %v231 = vpop.f32.mrf.mxu0
  %v232 = vadd.f32 %v167, %v231
  %v233 = vpop.f32.mrf.mxu0
  %v234 = vpop.f32.mrf.mxu0
  %v235 = vadd.f32 %v167, %v234
  %v236 = vpop.f32.mrf.mxu0
  %237 = vmatprep.mubr.bf16.mxu0 0
  %238 = vmatmul.mubr.bf16.gmra.mxu0 %v82
  %v239 = vpop.f32.mrf.mxu0
  %v240 = vadd.f32 %v167, %v239
  %v241 = vpop.f32.mrf.mxu0
  %v242 = vpop.f32.mrf.mxu0
  %v243 = vadd.f32 %v167, %v242
  %v244 = vpop.f32.mrf.mxu0
  %245 = vdwg.mxu0
  %246 = vst.msk [vmem:[#allocation3] sm:$0xff] %vm149, %v216
  %247 = vst.msk [vmem:[#allocation3 + $0x8] sm:$0xff] %vm149, %v219
  %248 = vst.msk [vmem:[#allocation3 + $0x10] sm:$0xff] %vm149, %v224
  %249 = vst.msk [vmem:[#allocation3 + $0x18] sm:$0xff] %vm149, %v227
  %250 = vst.msk [vmem:[#allocation3 + $0x20] sm:$0xff] %vm149, %v232
  %251 = vst.msk [vmem:[#allocation3 + $0x28] sm:$0xff] %vm149, %v235
  %252 = vst.msk [vmem:[#allocation3 + $0x30] sm:$0xff] %vm149, %v240
  %253 = vst.msk [vmem:[#allocation3 + $0x38] sm:$0xff] %vm149, %v243
  %v254 = vld [vmem:[%s2] sm:$0xf]
  %v255 = vld [vmem:[%s2 + $0x4] sm:$0xf]
  %v256 = vld [vmem:[%s5] sm:$0xf]
  %v257 = vld [vmem:[%s5 + $0x4] sm:$0xf]
  %v258 = vld [vmem:[#allocation2] sm:$0xff]
  %v261 = vunpack.c.l.b16 %v254
  %v262 = vunpack.c.l.b16 %v255
  %v263 = vpack.c.b16 %v262, %v261
  %vm265 = vcmask 130048
  %v267 = vsel %vm265, 0, 0
  %269 = vmatprep.subr.bf16.mxu0 0
  %270 = vmatpush1.bf16.msra.mxu0 0
  %271 = vmatprep.subr.bf16.mxu0 0
  %272 = vmatpush1.bf16.msra.mxu0 0
  %273 = vmatprep.subr.bf16.mxu0 0
  %274 = vmatpush1.bf16.msra.mxu0 0
  %275 = vmatprep.subr.bf16.mxu0 0
  %276 = vmatpush1.bf16.msra.mxu0 0
  %277 = vmatprep.subr.bf16.mxu0 0
  %278 = vmatpush1.bf16.msra.mxu0 0
  %279 = vmatprep.subr.bf16.mxu0 0
  %280 = vmatpush1.bf16.msra.mxu0 0
  %281 = vmatprep.subr.bf16.mxu0 0
  %282 = vmatpush1.bf16.msra.mxu0 0
  %283 = vmatprep.subr.bf16.mxu0 0
  %284 = vmatpush1.bf16.msra.mxu0 %v263
  %285 = vmatprep.subr.bf16.mxu0 0
  %286 = vmatpush2.bf16.msra.mxu0 0
  %287 = vmatprep.subr.bf16.mxu0 0
  %288 = vmatpush2.bf16.msra.mxu0 0
  %289 = vmatprep.subr.bf16.mxu0 0
  %290 = vmatpush2.bf16.msra.mxu0 0
  %291 = vmatprep.subr.bf16.mxu0 0
  %292 = vmatpush2.bf16.msra.mxu0 0
  %293 = vmatprep.subr.bf16.mxu0 0
  %294 = vmatpush2.bf16.msra.mxu0 0
  %295 = vmatprep.subr.bf16.mxu0 0
  %296 = vmatpush2.bf16.msra.mxu0 0
  %297 = vmatprep.subr.bf16.mxu0 0
  %298 = vmatpush2.bf16.msra.mxu0 0
  %299 = vmatprep.subr.bf16.mxu0 0
  %300 = vmatpush2.bf16.msra.mxu0 0
  %301 = vmatprep.mubr.bf16.mxu0 0
  %302 = vmatmul.mubr.bf16.gmra.mxu0 %v267
  %v303 = vpop.f32.mrf.mxu0
  %v304 = vadd.f32 0.0, %v303
  %v305 = vpop.f32.mrf.mxu0
  %v306 = vpop.f32.mrf.mxu0
  %v307 = vpop.f32.mrf.mxu0
  %308 = vdwg.mxu0
  %v309 = vadd.f32 %v258, %v304
  %v310 = vxor.u32 %v309, 2147483648
  %v311 = vmul.f32 %v310, 1.442695
  %v312 = vpow.pop %v311
  %v313 = vadd.f32 %v312, 1.0
  %v314 = vrcp.pop %v313
  %v315 = vmul.f32 1.0, %v314
  %v316 = vtanh.pop %v309
  %v317 = vmul.f32 %v315, 0.0
  %319 = vrot.lane.b32.xlu0 %v316, 96
  %v320 = vpop.permute.xlu0 %319
  %v322 = vmul.f32 %v315, %v320
  %324 = vrot.lane.b32.xlu0 %v322, 16
  %v325 = vpop.permute.xlu0 %324
  %v327 = vadd.f32 %v317, %v325
  %v328 = vtanh.pop %v327
  %330 = vrot.lane.b32.xlu0 %v328, 32
  %v331 = vpop.permute.xlu0 %330
  %v333 = vmul.f32 %v315, %v331
  %335 = vrot.lane.b32.xlu0 %v333, 80
  %v336 = vpop.permute.xlu0 %335
  %338 = vst.msk [vmem:[#allocation4] sm:$0xff] %vm265, %v336
  %s339 = scalar_lea.vmem [#allocation3], 56
  %v340 = vld [vmem:[%s339] sm:$0xff]
  %v343 = vunpack.c.l.b16 %v256
  %v344 = vunpack.c.l.b16 %v257
  %v345 = vpack.c.b16 %v344, %v343
  %347 = vmatprep.subr.bf16.mxu0 0
  %348 = vmatpush1.bf16.msra.mxu0 0
  %349 = vmatprep.subr.bf16.mxu0 0
  %350 = vmatpush1.bf16.msra.mxu0 0
  %351 = vmatprep.subr.bf16.mxu0 0
  %352 = vmatpush1.bf16.msra.mxu0 0
  %353 = vmatprep.subr.bf16.mxu0 0
  %354 = vmatpush1.bf16.msra.mxu0 0
  %355 = vmatprep.subr.bf16.mxu0 0
  %356 = vmatpush1.bf16.msra.mxu0 0
  %357 = vmatprep.subr.bf16.mxu0 0
  %358 = vmatpush1.bf16.msra.mxu0 0
  %359 = vmatprep.subr.bf16.mxu0 0
  %360 = vmatpush1.bf16.msra.mxu0 0
  %361 = vmatprep.subr.bf16.mxu0 0
  %362 = vmatpush1.bf16.msra.mxu0 %v345
  %363 = vmatprep.subr.bf16.mxu0 0
  %364 = vmatpush2.bf16.msra.mxu0 0
  %365 = vmatprep.subr.bf16.mxu0 0
  %366 = vmatpush2.bf16.msra.mxu0 0
  %367 = vmatprep.subr.bf16.mxu0 0
  %368 = vmatpush2.bf16.msra.mxu0 0
  %369 = vmatprep.subr.bf16.mxu0 0
  %370 = vmatpush2.bf16.msra.mxu0 0
  %371 = vmatprep.subr.bf16.mxu0 0
  %372 = vmatpush2.bf16.msra.mxu0 0
  %373 = vmatprep.subr.bf16.mxu0 0
  %374 = vmatpush2.bf16.msra.mxu0 0
  %375 = vmatprep.subr.bf16.mxu0 0
  %376 = vmatpush2.bf16.msra.mxu0 0
  %377 = vmatprep.subr.bf16.mxu0 0
  %378 = vmatpush2.bf16.msra.mxu0 0
  %379 = vmatprep.mubr.bf16.mxu0 0
  %380 = vmatmul.mubr.bf16.gmra.mxu0 %v267
  %v381 = vpop.f32.mrf.mxu0
  %v382 = vadd.f32 0.0, %v381
  %v383 = vpop.f32.mrf.mxu0
  %v384 = vpop.f32.mrf.mxu0
  %v385 = vpop.f32.mrf.mxu0
  %386 = vdwg.mxu0
  %v387 = vadd.f32 %v340, %v382
  %v388 = vxor.u32 %v387, 2147483648
  %v389 = vmul.f32 %v388, 1.442695
  %v390 = vpow.pop %v389
  %v391 = vadd.f32 %v390, 1.0
  %v392 = vrcp.pop %v391
  %v393 = vmul.f32 1.0, %v392
  %v394 = vtanh.pop %v387
  %v395 = vmul.f32 %v393, 0.0
  %397 = vrot.lane.b32.xlu0 %v394, 96
  %v398 = vpop.permute.xlu0 %397
  %v400 = vmul.f32 %v393, %v398
  %402 = vrot.lane.b32.xlu0 %v400, 16
  %v403 = vpop.permute.xlu0 %402
  %v405 = vadd.f32 %v395, %v403
  %v406 = vtanh.pop %v405
  %408 = vrot.lane.b32.xlu0 %v406, 32
  %v409 = vpop.permute.xlu0 %408
  %v411 = vmul.f32 %v393, %v409
  %413 = vrot.lane.b32.xlu0 %v411, 80
  %v414 = vpop.permute.xlu0 %413
  %s416 = scalar_lea.vmem [#allocation5], 56
  %417 = vst.msk [vmem:[%s416] sm:$0xff] %vm265, %v414
  %s418 = scalar_lea.vmem [#allocation2], 8
  %v419 = vld [vmem:[%s418] sm:$0xff]
  %v420 = vpack.c.bf16 %v333, %v333
  %422 = vrot.lane.b32.xlu0 %v420, 80
  %v423 = vpop.permute.xlu0 %422
  %v425 = vsel %vm265, %v423, 0
  %427 = vmatprep.subr.bf16.mxu0 0
  %428 = vmatpush1.bf16.msra.mxu0 0
  %429 = vmatprep.subr.bf16.mxu0 0
  %430 = vmatpush1.bf16.msra.mxu0 0
  %431 = vmatprep.subr.bf16.mxu0 0
  %432 = vmatpush1.bf16.msra.mxu0 0
  %433 = vmatprep.subr.bf16.mxu0 0
  %434 = vmatpush1.bf16.msra.mxu0 0
  %435 = vmatprep.subr.bf16.mxu0 0
  %436 = vmatpush1.bf16.msra.mxu0 0
  %437 = vmatprep.subr.bf16.mxu0 0
  %438 = vmatpush1.bf16.msra.mxu0 0
  %439 = vmatprep.subr.bf16.mxu0 0
  %440 = vmatpush1.bf16.msra.mxu0 0
  %441 = vmatprep.subr.bf16.mxu0 0
  %442 = vmatpush1.bf16.msra.mxu0 %v263
  %443 = vmatprep.subr.bf16.mxu0 0
  %444 = vmatpush2.bf16.msra.mxu0 0
  %445 = vmatprep.subr.bf16.mxu0 0
  %446 = vmatpush2.bf16.msra.mxu0 0
  %447 = vmatprep.subr.bf16.mxu0 0
  %448 = vmatpush2.bf16.msra.mxu0 0
  %449 = vmatprep.subr.bf16.mxu0 0
  %450 = vmatpush2.bf16.msra.mxu0 0
  %451 = vmatprep.subr.bf16.mxu0 0
  %452 = vmatpush2.bf16.msra.mxu0 0
  %453 = vmatprep.subr.bf16.mxu0 0
  %454 = vmatpush2.bf16.msra.mxu0 0
  %455 = vmatprep.subr.bf16.mxu0 0
  %456 = vmatpush2.bf16.msra.mxu0 0
  %457 = vmatprep.subr.bf16.mxu0 0
  %458 = vmatpush2.bf16.msra.mxu0 0
  %459 = vmatprep.mubr.bf16.mxu0 0
  %460 = vmatmul.mubr.bf16.gmra.mxu0 %v425
  %v461 = vpop.f32.mrf.mxu0
  %v462 = vadd.f32 0.0, %v461
  %v463 = vpop.f32.mrf.mxu0
  %v464 = vpop.f32.mrf.mxu0
  %v465 = vpop.f32.mrf.mxu0
  %466 = vdwg.mxu0
  %v467 = vadd.f32 %v419, %v462
  %v468 = vxor.u32 %v467, 2147483648
  %v469 = vmul.f32 %v468, 1.442695
  %v470 = vpow.pop %v469
  %v471 = vadd.f32 %v470, 1.0
  %v472 = vrcp.pop %v471
  %v473 = vmul.f32 1.0, %v472
  %v474 = vtanh.pop %v467
  %v475 = vmul.f32 %v473, %v327
  %477 = vrot.lane.b32.xlu0 %v474, 96
  %v478 = vpop.permute.xlu0 %477
  %v480 = vmul.f32 %v473, %v478
  %482 = vrot.lane.b32.xlu0 %v480, 16
  %v483 = vpop.permute.xlu0 %482
  %v485 = vadd.f32 %v475, %v483
  %v486 = vtanh.pop %v485
  %488 = vrot.lane.b32.xlu0 %v486, 32
  %v489 = vpop.permute.xlu0 %488
  %v491 = vmul.f32 %v473, %v489
  %493 = vrot.lane.b32.xlu0 %v491, 80
  %v494 = vpop.permute.xlu0 %493
  %s496 = scalar_lea.vmem [#allocation4], 8
  %497 = vst.msk [vmem:[%s496] sm:$0xff] %vm265, %v494
  %s498 = scalar_lea.vmem [#allocation3], 48
  %v499 = vld [vmem:[%s498] sm:$0xff]
  %v500 = vpack.c.bf16 %v411, %v411
  %502 = vrot.lane.b32.xlu0 %v500, 80
  %v503 = vpop.permute.xlu0 %502
  %v505 = vsel %vm265, %v503, 0
  %507 = vmatprep.subr.bf16.mxu0 0
  %508 = vmatpush1.bf16.msra.mxu0 0
  %509 = vmatprep.subr.bf16.mxu0 0
  %510 = vmatpush1.bf16.msra.mxu0 0
  %511 = vmatprep.subr.bf16.mxu0 0
  %512 = vmatpush1.bf16.msra.mxu0 0
  %513 = vmatprep.subr.bf16.mxu0 0
  %514 = vmatpush1.bf16.msra.mxu0 0
  %515 = vmatprep.subr.bf16.mxu0 0
  %516 = vmatpush1.bf16.msra.mxu0 0
  %517 = vmatprep.subr.bf16.mxu0 0
  %518 = vmatpush1.bf16.msra.mxu0 0
  %519 = vmatprep.subr.bf16.mxu0 0
  %520 = vmatpush1.bf16.msra.mxu0 0
  %521 = vmatprep.subr.bf16.mxu0 0
  %522 = vmatpush1.bf16.msra.mxu0 %v345
  %523 = vmatprep.subr.bf16.mxu0 0
  %524 = vmatpush2.bf16.msra.mxu0 0
  %525 = vmatprep.subr.bf16.mxu0 0
  %526 = vmatpush2.bf16.msra.mxu0 0
  %527 = vmatprep.subr.bf16.mxu0 0
  %528 = vmatpush2.bf16.msra.mxu0 0
  %529 = vmatprep.subr.bf16.mxu0 0
  %530 = vmatpush2.bf16.msra.mxu0 0
  %531 = vmatprep.subr.bf16.mxu0 0
  %532 = vmatpush2.bf16.msra.mxu0 0
  %533 = vmatprep.subr.bf16.mxu0 0
  %534 = vmatpush2.bf16.msra.mxu0 0
  %535 = vmatprep.subr.bf16.mxu0 0
  %536 = vmatpush2.bf16.msra.mxu0 0
  %537 = vmatprep.subr.bf16.mxu0 0
  %538 = vmatpush2.bf16.msra.mxu0 0
  %539 = vmatprep.mubr.bf16.mxu0 0
  %540 = vmatmul.mubr.bf16.gmra.mxu0 %v505
  %v541 = vpop.f32.mrf.mxu0
  %v542 = vadd.f32 0.0, %v541
  %v543 = vpop.f32.mrf.mxu0
  %v544 = vpop.f32.mrf.mxu0
  %v545 = vpop.f32.mrf.mxu0
  %546 = vdwg.mxu0
  %v547 = vadd.f32 %v499, %v542
  %v548 = vxor.u32 %v547, 2147483648
  %v549 = vmul.f32 %v548, 1.442695
  %v550 = vpow.pop %v549
  %v551 = vadd.f32 %v550, 1.0
  %v552 = vrcp.pop %v551
  %v553 = vmul.f32 1.0, %v552
  %v554 = vtanh.pop %v547
  %v555 = vmul.f32 %v553, %v405
  %557 = vrot.lane.b32.xlu0 %v554, 96
  %v558 = vpop.permute.xlu0 %557
  %v560 = vmul.f32 %v553, %v558
  %562 = vrot.lane.b32.xlu0 %v560, 16
  %v563 = vpop.permute.xlu0 %562
  %v565 = vadd.f32 %v555, %v563
  %v566 = vtanh.pop %v565
  %568 = vrot.lane.b32.xlu0 %v566, 32
  %v569 = vpop.permute.xlu0 %568
  %v571 = vmul.f32 %v553, %v569
  %573 = vrot.lane.b32.xlu0 %v571, 80
  %v574 = vpop.permute.xlu0 %573
  %s576 = scalar_lea.vmem [#allocation5], 48
  %577 = vst.msk [vmem:[%s576] sm:$0xff] %vm265, %v574
  %s578 = scalar_lea.vmem [#allocation2], 16
  %v579 = vld [vmem:[%s578] sm:$0xff]
  %v580 = vpack.c.bf16 %v491, %v491
  %582 = vrot.lane.b32.xlu0 %v580, 80
  %v583 = vpop.permute.xlu0 %582
  %v585 = vsel %vm265, %v583, 0
  %587 = vmatprep.subr.bf16.mxu0 0
  %588 = vmatpush1.bf16.msra.mxu0 0
  %589 = vmatprep.subr.bf16.mxu0 0
  %590 = vmatpush1.bf16.msra.mxu0 0
  %591 = vmatprep.subr.bf16.mxu0 0
  %592 = vmatpush1.bf16.msra.mxu0 0
  %593 = vmatprep.subr.bf16.mxu0 0
  %594 = vmatpush1.bf16.msra.mxu0 0
  %595 = vmatprep.subr.bf16.mxu0 0
  %596 = vmatpush1.bf16.msra.mxu0 0
  %597 = vmatprep.subr.bf16.mxu0 0
  %598 = vmatpush1.bf16.msra.mxu0 0
  %599 = vmatprep.subr.bf16.mxu0 0
  %600 = vmatpush1.bf16.msra.mxu0 0
  %601 = vmatprep.subr.bf16.mxu0 0
  %602 = vmatpush1.bf16.msra.mxu0 %v263
  %603 = vmatprep.subr.bf16.mxu0 0
  %604 = vmatpush2.bf16.msra.mxu0 0
  %605 = vmatprep.subr.bf16.mxu0 0
  %606 = vmatpush2.bf16.msra.mxu0 0
  %607 = vmatprep.subr.bf16.mxu0 0
  %608 = vmatpush2.bf16.msra.mxu0 0
  %609 = vmatprep.subr.bf16.mxu0 0
  %610 = vmatpush2.bf16.msra.mxu0 0
  %611 = vmatprep.subr.bf16.mxu0 0
  %612 = vmatpush2.bf16.msra.mxu0 0
  %613 = vmatprep.subr.bf16.mxu0 0
  %614 = vmatpush2.bf16.msra.mxu0 0
  %615 = vmatprep.subr.bf16.mxu0 0
  %616 = vmatpush2.bf16.msra.mxu0 0
  %617 = vmatprep.subr.bf16.mxu0 0
  %618 = vmatpush2.bf16.msra.mxu0 0
  %619 = vmatprep.mubr.bf16.mxu0 0
  %620 = vmatmul.mubr.bf16.gmra.mxu0 %v585
  %v621 = vpop.f32.mrf.mxu0
  %v622 = vadd.f32 0.0, %v621
  %v623 = vpop.f32.mrf.mxu0
  %v624 = vpop.f32.mrf.mxu0
  %v625 = vpop.f32.mrf.mxu0
  %626 = vdwg.mxu0
  %v627 = vadd.f32 %v579, %v622
  %v628 = vxor.u32 %v627, 2147483648
  %v629 = vmul.f32 %v628, 1.442695
  %v630 = vpow.pop %v629
  %v631 = vadd.f32 %v630, 1.0
  %v632 = vrcp.pop %v631
  %v633 = vmul.f32 1.0, %v632
  %v634 = vtanh.pop %v627
  %v635 = vmul.f32 %v633, %v485
  %637 = vrot.lane.b32.xlu0 %v634, 96
  %v638 = vpop.permute.xlu0 %637
  %v640 = vmul.f32 %v633, %v638
  %642 = vrot.lane.b32.xlu0 %v640, 16
  %v643 = vpop.permute.xlu0 %642
  %v645 = vadd.f32 %v635, %v643
  %v646 = vtanh.pop %v645
  %648 = vrot.lane.b32.xlu0 %v646, 32
  %v649 = vpop.permute.xlu0 %648
  %v651 = vmul.f32 %v633, %v649
  %653 = vrot.lane.b32.xlu0 %v651, 80
  %v654 = vpop.permute.xlu0 %653
  %s656 = scalar_lea.vmem [#allocation4], 16
  %657 = vst.msk [vmem:[%s656] sm:$0xff] %vm265, %v654
  %s658 = scalar_lea.vmem [#allocation3], 40
  %v659 = vld [vmem:[%s658] sm:$0xff]
  %v660 = vpack.c.bf16 %v571, %v571
  %662 = vrot.lane.b32.xlu0 %v660, 80
  %v663 = vpop.permute.xlu0 %662
  %v665 = vsel %vm265, %v663, 0
  %667 = vmatprep.subr.bf16.mxu0 0
  %668 = vmatpush1.bf16.msra.mxu0 0
  %669 = vmatprep.subr.bf16.mxu0 0
  %670 = vmatpush1.bf16.msra.mxu0 0
  %671 = vmatprep.subr.bf16.mxu0 0
  %672 = vmatpush1.bf16.msra.mxu0 0
  %673 = vmatprep.subr.bf16.mxu0 0
  %674 = vmatpush1.bf16.msra.mxu0 0
  %675 = vmatprep.subr.bf16.mxu0 0
  %676 = vmatpush1.bf16.msra.mxu0 0
  %677 = vmatprep.subr.bf16.mxu0 0
  %678 = vmatpush1.bf16.msra.mxu0 0
  %679 = vmatprep.subr.bf16.mxu0 0
  %680 = vmatpush1.bf16.msra.mxu0 0
  %681 = vmatprep.subr.bf16.mxu0 0
  %682 = vmatpush1.bf16.msra.mxu0 %v345
  %683 = vmatprep.subr.bf16.mxu0 0
  %684 = vmatpush2.bf16.msra.mxu0 0
  %685 = vmatprep.subr.bf16.mxu0 0
  %686 = vmatpush2.bf16.msra.mxu0 0
  %687 = vmatprep.subr.bf16.mxu0 0
  %688 = vmatpush2.bf16.msra.mxu0 0
  %689 = vmatprep.subr.bf16.mxu0 0
  %690 = vmatpush2.bf16.msra.mxu0 0
  %691 = vmatprep.subr.bf16.mxu0 0
  %692 = vmatpush2.bf16.msra.mxu0 0
  %693 = vmatprep.subr.bf16.mxu0 0
  %694 = vmatpush2.bf16.msra.mxu0 0
  %695 = vmatprep.subr.bf16.mxu0 0
  %696 = vmatpush2.bf16.msra.mxu0 0
  %697 = vmatprep.subr.bf16.mxu0 0
  %698 = vmatpush2.bf16.msra.mxu0 0
  %699 = vmatprep.mubr.bf16.mxu0 0
  %700 = vmatmul.mubr.bf16.gmra.mxu0 %v665
  %v701 = vpop.f32.mrf.mxu0
  %v702 = vadd.f32 0.0, %v701
  %v703 = vpop.f32.mrf.mxu0
  %v704 = vpop.f32.mrf.mxu0
  %v705 = vpop.f32.mrf.mxu0
  %706 = vdwg.mxu0
  %v707 = vadd.f32 %v659, %v702
  %v708 = vxor.u32 %v707, 2147483648
  %v709 = vmul.f32 %v708, 1.442695
  %v710 = vpow.pop %v709
  %v711 = vadd.f32 %v710, 1.0
  %v712 = vrcp.pop %v711
  %v713 = vmul.f32 1.0, %v712
  %v714 = vtanh.pop %v707
  %v715 = vmul.f32 %v713, %v565
  %717 = vrot.lane.b32.xlu0 %v714, 96
  %v718 = vpop.permute.xlu0 %717
  %v720 = vmul.f32 %v713, %v718
  %722 = vrot.lane.b32.xlu0 %v720, 16
  %v723 = vpop.permute.xlu0 %722
  %v725 = vadd.f32 %v715, %v723
  %v726 = vtanh.pop %v725
  %728 = vrot.lane.b32.xlu0 %v726, 32
  %v729 = vpop.permute.xlu0 %728
  %v731 = vmul.f32 %v713, %v729
  %733 = vrot.lane.b32.xlu0 %v731, 80
  %v734 = vpop.permute.xlu0 %733
  %s736 = scalar_lea.vmem [#allocation5], 40
  %737 = vst.msk [vmem:[%s736] sm:$0xff] %vm265, %v734
  %s738 = scalar_lea.vmem [#allocation2], 24
  %v739 = vld [vmem:[%s738] sm:$0xff]
  %v740 = vpack.c.bf16 %v651, %v651
  %742 = vrot.lane.b32.xlu0 %v740, 80
  %v743 = vpop.permute.xlu0 %742
  %v745 = vsel %vm265, %v743, 0
  %747 = vmatprep.subr.bf16.mxu0 0
  %748 = vmatpush1.bf16.msra.mxu0 0
  %749 = vmatprep.subr.bf16.mxu0 0
  %750 = vmatpush1.bf16.msra.mxu0 0
  %751 = vmatprep.subr.bf16.mxu0 0
  %752 = vmatpush1.bf16.msra.mxu0 0
  %753 = vmatprep.subr.bf16.mxu0 0
  %754 = vmatpush1.bf16.msra.mxu0 0
  %755 = vmatprep.subr.bf16.mxu0 0
  %756 = vmatpush1.bf16.msra.mxu0 0
  %757 = vmatprep.subr.bf16.mxu0 0
  %758 = vmatpush1.bf16.msra.mxu0 0
  %759 = vmatprep.subr.bf16.mxu0 0
  %760 = vmatpush1.bf16.msra.mxu0 0
  %761 = vmatprep.subr.bf16.mxu0 0
  %762 = vmatpush1.bf16.msra.mxu0 %v263
  %763 = vmatprep.subr.bf16.mxu0 0
  %764 = vmatpush2.bf16.msra.mxu0 0
  %765 = vmatprep.subr.bf16.mxu0 0
  %766 = vmatpush2.bf16.msra.mxu0 0
  %767 = vmatprep.subr.bf16.mxu0 0
  %768 = vmatpush2.bf16.msra.mxu0 0
  %769 = vmatprep.subr.bf16.mxu0 0
  %770 = vmatpush2.bf16.msra.mxu0 0
  %771 = vmatprep.subr.bf16.mxu0 0
  %772 = vmatpush2.bf16.msra.mxu0 0
  %773 = vmatprep.subr.bf16.mxu0 0
  %774 = vmatpush2.bf16.msra.mxu0 0
  %775 = vmatprep.subr.bf16.mxu0 0
  %776 = vmatpush2.bf16.msra.mxu0 0
  %777 = vmatprep.subr.bf16.mxu0 0
  %778 = vmatpush2.bf16.msra.mxu0 0
  %779 = vmatprep.mubr.bf16.mxu0 0
  %780 = vmatmul.mubr.bf16.gmra.mxu0 %v745
  %v781 = vpop.f32.mrf.mxu0
  %v782 = vadd.f32 0.0, %v781
  %v783 = vpop.f32.mrf.mxu0
  %v784 = vpop.f32.mrf.mxu0
  %v785 = vpop.f32.mrf.mxu0
  %786 = vdwg.mxu0
  %v787 = vadd.f32 %v739, %v782
  %v788 = vxor.u32 %v787, 2147483648
  %v789 = vmul.f32 %v788, 1.442695
  %v790 = vpow.pop %v789
  %v791 = vadd.f32 %v790, 1.0
  %v792 = vrcp.pop %v791
  %v793 = vmul.f32 1.0, %v792
  %v794 = vtanh.pop %v787
  %v795 = vmul.f32 %v793, %v645
  %797 = vrot.lane.b32.xlu0 %v794, 96
  %v798 = vpop.permute.xlu0 %797
  %v800 = vmul.f32 %v793, %v798
  %802 = vrot.lane.b32.xlu0 %v800, 16
  %v803 = vpop.permute.xlu0 %802
  %v805 = vadd.f32 %v795, %v803
  %v806 = vtanh.pop %v805
  %808 = vrot.lane.b32.xlu0 %v806, 32
  %v809 = vpop.permute.xlu0 %808
  %v811 = vmul.f32 %v793, %v809
  %813 = vrot.lane.b32.xlu0 %v811, 80
  %v814 = vpop.permute.xlu0 %813
  %s816 = scalar_lea.vmem [#allocation4], 24
  %817 = vst.msk [vmem:[%s816] sm:$0xff] %vm265, %v814
  %s818 = scalar_lea.vmem [#allocation3], 32
  %v819 = vld [vmem:[%s818] sm:$0xff]
  %v820 = vpack.c.bf16 %v731, %v731
  %822 = vrot.lane.b32.xlu0 %v820, 80
  %v823 = vpop.permute.xlu0 %822
  %v825 = vsel %vm265, %v823, 0
  %827 = vmatprep.subr.bf16.mxu0 0
  %828 = vmatpush1.bf16.msra.mxu0 0
  %829 = vmatprep.subr.bf16.mxu0 0
  %830 = vmatpush1.bf16.msra.mxu0 0
  %831 = vmatprep.subr.bf16.mxu0 0
  %832 = vmatpush1.bf16.msra.mxu0 0
  %833 = vmatprep.subr.bf16.mxu0 0
  %834 = vmatpush1.bf16.msra.mxu0 0
  %835 = vmatprep.subr.bf16.mxu0 0
  %836 = vmatpush1.bf16.msra.mxu0 0
  %837 = vmatprep.subr.bf16.mxu0 0
  %838 = vmatpush1.bf16.msra.mxu0 0
  %839 = vmatprep.subr.bf16.mxu0 0
  %840 = vmatpush1.bf16.msra.mxu0 0
  %841 = vmatprep.subr.bf16.mxu0 0
  %842 = vmatpush1.bf16.msra.mxu0 %v345
  %843 = vmatprep.subr.bf16.mxu0 0
  %844 = vmatpush2.bf16.msra.mxu0 0
  %845 = vmatprep.subr.bf16.mxu0 0
  %846 = vmatpush2.bf16.msra.mxu0 0
  %847 = vmatprep.subr.bf16.mxu0 0
  %848 = vmatpush2.bf16.msra.mxu0 0
  %849 = vmatprep.subr.bf16.mxu0 0
  %850 = vmatpush2.bf16.msra.mxu0 0
  %851 = vmatprep.subr.bf16.mxu0 0
  %852 = vmatpush2.bf16.msra.mxu0 0
  %853 = vmatprep.subr.bf16.mxu0 0
  %854 = vmatpush2.bf16.msra.mxu0 0
  %855 = vmatprep.subr.bf16.mxu0 0
  %856 = vmatpush2.bf16.msra.mxu0 0
  %857 = vmatprep.subr.bf16.mxu0 0
  %858 = vmatpush2.bf16.msra.mxu0 0
  %859 = vmatprep.mubr.bf16.mxu0 0
  %860 = vmatmul.mubr.bf16.gmra.mxu0 %v825
  %v861 = vpop.f32.mrf.mxu0
  %v862 = vadd.f32 0.0, %v861
  %v863 = vpop.f32.mrf.mxu0
  %v864 = vpop.f32.mrf.mxu0
  %v865 = vpop.f32.mrf.mxu0
  %866 = vdwg.mxu0
  %v867 = vadd.f32 %v819, %v862
  %v868 = vxor.u32 %v867, 2147483648
  %v869 = vmul.f32 %v868, 1.442695
  %v870 = vpow.pop %v869
  %v871 = vadd.f32 %v870, 1.0
  %v872 = vrcp.pop %v871
  %v873 = vmul.f32 1.0, %v872
  %v874 = vtanh.pop %v867
  %v875 = vmul.f32 %v873, %v725
  %877 = vrot.lane.b32.xlu0 %v874, 96
  %v878 = vpop.permute.xlu0 %877
  %v880 = vmul.f32 %v873, %v878
  %882 = vrot.lane.b32.xlu0 %v880, 16
  %v883 = vpop.permute.xlu0 %882
  %v885 = vadd.f32 %v875, %v883
  %v886 = vtanh.pop %v885
  %888 = vrot.lane.b32.xlu0 %v886, 32
  %v889 = vpop.permute.xlu0 %888
  %v891 = vmul.f32 %v873, %v889
  %893 = vrot.lane.b32.xlu0 %v891, 80
  %v894 = vpop.permute.xlu0 %893
  %s896 = scalar_lea.vmem [#allocation5], 32
  %897 = vst.msk [vmem:[%s896] sm:$0xff] %vm265, %v894
  %s898 = scalar_lea.vmem [#allocation2], 32
  %v899 = vld [vmem:[%s898] sm:$0xff]
  %v900 = vpack.c.bf16 %v811, %v811
  %902 = vrot.lane.b32.xlu0 %v900, 80
  %v903 = vpop.permute.xlu0 %902
  %v905 = vsel %vm265, %v903, 0
  %907 = vmatprep.subr.bf16.mxu0 0
  %908 = vmatpush1.bf16.msra.mxu0 0
  %909 = vmatprep.subr.bf16.mxu0 0
  %910 = vmatpush1.bf16.msra.mxu0 0
  %911 = vmatprep.subr.bf16.mxu0 0
  %912 = vmatpush1.bf16.msra.mxu0 0
  %913 = vmatprep.subr.bf16.mxu0 0
  %914 = vmatpush1.bf16.msra.mxu0 0
  %915 = vmatprep.subr.bf16.mxu0 0
  %916 = vmatpush1.bf16.msra.mxu0 0
  %917 = vmatprep.subr.bf16.mxu0 0
  %918 = vmatpush1.bf16.msra.mxu0 0
  %919 = vmatprep.subr.bf16.mxu0 0
  %920 = vmatpush1.bf16.msra.mxu0 0
  %921 = vmatprep.subr.bf16.mxu0 0
  %922 = vmatpush1.bf16.msra.mxu0 %v263
  %923 = vmatprep.subr.bf16.mxu0 0
  %924 = vmatpush2.bf16.msra.mxu0 0
  %925 = vmatprep.subr.bf16.mxu0 0
  %926 = vmatpush2.bf16.msra.mxu0 0
  %927 = vmatprep.subr.bf16.mxu0 0
  %928 = vmatpush2.bf16.msra.mxu0 0
  %929 = vmatprep.subr.bf16.mxu0 0
  %930 = vmatpush2.bf16.msra.mxu0 0
  %931 = vmatprep.subr.bf16.mxu0 0
  %932 = vmatpush2.bf16.msra.mxu0 0
  %933 = vmatprep.subr.bf16.mxu0 0
  %934 = vmatpush2.bf16.msra.mxu0 0
  %935 = vmatprep.subr.bf16.mxu0 0
  %936 = vmatpush2.bf16.msra.mxu0 0
  %937 = vmatprep.subr.bf16.mxu0 0
  %938 = vmatpush2.bf16.msra.mxu0 0
  %939 = vmatprep.mubr.bf16.mxu0 0
  %940 = vmatmul.mubr.bf16.gmra.mxu0 %v905
  %v941 = vpop.f32.mrf.mxu0
  %v942 = vadd.f32 0.0, %v941
  %v943 = vpop.f32.mrf.mxu0
  %v944 = vpop.f32.mrf.mxu0
  %v945 = vpop.f32.mrf.mxu0
  %946 = vdwg.mxu0
  %v947 = vadd.f32 %v899, %v942
  %v948 = vxor.u32 %v947, 2147483648
  %v949 = vmul.f32 %v948, 1.442695
  %v950 = vpow.pop %v949
  %v951 = vadd.f32 %v950, 1.0
  %v952 = vrcp.pop %v951
  %v953 = vmul.f32 1.0, %v952
  %v954 = vtanh.pop %v947
  %v955 = vmul.f32 %v953, %v805
  %957 = vrot.lane.b32.xlu0 %v954, 96
  %v958 = vpop.permute.xlu0 %957
  %v960 = vmul.f32 %v953, %v958
  %962 = vrot.lane.b32.xlu0 %v960, 16
  %v963 = vpop.permute.xlu0 %962
  %v965 = vadd.f32 %v955, %v963
  %v966 = vtanh.pop %v965
  %968 = vrot.lane.b32.xlu0 %v966, 32
  %v969 = vpop.permute.xlu0 %968
  %v971 = vmul.f32 %v953, %v969
  %973 = vrot.lane.b32.xlu0 %v971, 80
  %v974 = vpop.permute.xlu0 %973
  %s976 = scalar_lea.vmem [#allocation4], 32
  %977 = vst.msk [vmem:[%s976] sm:$0xff] %vm265, %v974
  %s978 = scalar_lea.vmem [#allocation3], 24
  %v979 = vld [vmem:[%s978] sm:$0xff]
  %v980 = vpack.c.bf16 %v891, %v891
  %982 = vrot.lane.b32.xlu0 %v980, 80
  %v983 = vpop.permute.xlu0 %982
  %v985 = vsel %vm265, %v983, 0
  %987 = vmatprep.subr.bf16.mxu0 0
  %988 = vmatpush1.bf16.msra.mxu0 0
  %989 = vmatprep.subr.bf16.mxu0 0
  %990 = vmatpush1.bf16.msra.mxu0 0
  %991 = vmatprep.subr.bf16.mxu0 0
  %992 = vmatpush1.bf16.msra.mxu0 0
  %993 = vmatprep.subr.bf16.mxu0 0
  %994 = vmatpush1.bf16.msra.mxu0 0
  %995 = vmatprep.subr.bf16.mxu0 0
  %996 = vmatpush1.bf16.msra.mxu0 0
  %997 = vmatprep.subr.bf16.mxu0 0
  %998 = vmatpush1.bf16.msra.mxu0 0
  %999 = vmatprep.subr.bf16.mxu0 0
  %1000 = vmatpush1.bf16.msra.mxu0 0
  %1001 = vmatprep.subr.bf16.mxu0 0
  %1002 = vmatpush1.bf16.msra.mxu0 %v345
  %1003 = vmatprep.subr.bf16.mxu0 0
  %1004 = vmatpush2.bf16.msra.mxu0 0
  %1005 = vmatprep.subr.bf16.mxu0 0
  %1006 = vmatpush2.bf16.msra.mxu0 0
  %1007 = vmatprep.subr.bf16.mxu0 0
  %1008 = vmatpush2.bf16.msra.mxu0 0
  %1009 = vmatprep.subr.bf16.mxu0 0
  %1010 = vmatpush2.bf16.msra.mxu0 0
  %1011 = vmatprep.subr.bf16.mxu0 0
  %1012 = vmatpush2.bf16.msra.mxu0 0
  %1013 = vmatprep.subr.bf16.mxu0 0
  %1014 = vmatpush2.bf16.msra.mxu0 0
  %1015 = vmatprep.subr.bf16.mxu0 0
  %1016 = vmatpush2.bf16.msra.mxu0 0
  %1017 = vmatprep.subr.bf16.mxu0 0
  %1018 = vmatpush2.bf16.msra.mxu0 0
  %1019 = vmatprep.mubr.bf16.mxu0 0
  %1020 = vmatmul.mubr.bf16.gmra.mxu0 %v985
  %v1021 = vpop.f32.mrf.mxu0
  %v1022 = vadd.f32 0.0, %v1021
  %v1023 = vpop.f32.mrf.mxu0
  %v1024 = vpop.f32.mrf.mxu0
  %v1025 = vpop.f32.mrf.mxu0
  %1026 = vdwg.mxu0
  %v1027 = vadd.f32 %v979, %v1022
  %v1028 = vxor.u32 %v1027, 2147483648
  %v1029 = vmul.f32 %v1028, 1.442695
  %v1030 = vpow.pop %v1029
  %v1031 = vadd.f32 %v1030, 1.0
  %v1032 = vrcp.pop %v1031
  %v1033 = vmul.f32 1.0, %v1032
  %v1034 = vtanh.pop %v1027
  %v1035 = vmul.f32 %v1033, %v885
  %1037 = vrot.lane.b32.xlu0 %v1034, 96
  %v1038 = vpop.permute.xlu0 %1037
  %v1040 = vmul.f32 %v1033, %v1038
  %1042 = vrot.lane.b32.xlu0 %v1040, 16
  %v1043 = vpop.permute.xlu0 %1042
  %v1045 = vadd.f32 %v1035, %v1043
  %v1046 = vtanh.pop %v1045
  %1048 = vrot.lane.b32.xlu0 %v1046, 32
  %v1049 = vpop.permute.xlu0 %1048
  %v1051 = vmul.f32 %v1033, %v1049
  %1053 = vrot.lane.b32.xlu0 %v1051, 80
  %v1054 = vpop.permute.xlu0 %1053
  %s1056 = scalar_lea.vmem [#allocation5], 24
  %1057 = vst.msk [vmem:[%s1056] sm:$0xff] %vm265, %v1054
  %s1058 = scalar_lea.vmem [#allocation2], 40
  %v1059 = vld [vmem:[%s1058] sm:$0xff]
  %v1060 = vpack.c.bf16 %v971, %v971
  %1062 = vrot.lane.b32.xlu0 %v1060, 80
  %v1063 = vpop.permute.xlu0 %1062
  %v1065 = vsel %vm265, %v1063, 0
  %1067 = vmatprep.subr.bf16.mxu0 0
  %1068 = vmatpush1.bf16.msra.mxu0 0
  %1069 = vmatprep.subr.bf16.mxu0 0
  %1070 = vmatpush1.bf16.msra.mxu0 0
  %1071 = vmatprep.subr.bf16.mxu0 0
  %1072 = vmatpush1.bf16.msra.mxu0 0
  %1073 = vmatprep.subr.bf16.mxu0 0
  %1074 = vmatpush1.bf16.msra.mxu0 0
  %1075 = vmatprep.subr.bf16.mxu0 0
  %1076 = vmatpush1.bf16.msra.mxu0 0
  %1077 = vmatprep.subr.bf16.mxu0 0
  %1078 = vmatpush1.bf16.msra.mxu0 0
  %1079 = vmatprep.subr.bf16.mxu0 0
  %1080 = vmatpush1.bf16.msra.mxu0 0
  %1081 = vmatprep.subr.bf16.mxu0 0
  %1082 = vmatpush1.bf16.msra.mxu0 %v263
  %1083 = vmatprep.subr.bf16.mxu0 0
  %1084 = vmatpush2.bf16.msra.mxu0 0
  %1085 = vmatprep.subr.bf16.mxu0 0
  %1086 = vmatpush2.bf16.msra.mxu0 0
  %1087 = vmatprep.subr.bf16.mxu0 0
  %1088 = vmatpush2.bf16.msra.mxu0 0
  %1089 = vmatprep.subr.bf16.mxu0 0
  %1090 = vmatpush2.bf16.msra.mxu0 0
  %1091 = vmatprep.subr.bf16.mxu0 0
  %1092 = vmatpush2.bf16.msra.mxu0 0
  %1093 = vmatprep.subr.bf16.mxu0 0
  %1094 = vmatpush2.bf16.msra.mxu0 0
  %1095 = vmatprep.subr.bf16.mxu0 0
  %1096 = vmatpush2.bf16.msra.mxu0 0
  %1097 = vmatprep.subr.bf16.mxu0 0
  %1098 = vmatpush2.bf16.msra.mxu0 0
  %1099 = vmatprep.mubr.bf16.mxu0 0
  %1100 = vmatmul.mubr.bf16.gmra.mxu0 %v1065
  %v1101 = vpop.f32.mrf.mxu0
  %v1102 = vadd.f32 0.0, %v1101
  %v1103 = vpop.f32.mrf.mxu0
  %v1104 = vpop.f32.mrf.mxu0
  %v1105 = vpop.f32.mrf.mxu0
  %1106 = vdwg.mxu0
  %v1107 = vadd.f32 %v1059, %v1102
  %v1108 = vxor.u32 %v1107, 2147483648
  %v1109 = vmul.f32 %v1108, 1.442695
  %v1110 = vpow.pop %v1109
  %v1111 = vadd.f32 %v1110, 1.0
  %v1112 = vrcp.pop %v1111
  %v1113 = vmul.f32 1.0, %v1112
  %v1114 = vtanh.pop %v1107
  %v1115 = vmul.f32 %v1113, %v965
  %1117 = vrot.lane.b32.xlu0 %v1114, 96
  %v1118 = vpop.permute.xlu0 %1117
  %v1120 = vmul.f32 %v1113, %v1118
  %1122 = vrot.lane.b32.xlu0 %v1120, 16
  %v1123 = vpop.permute.xlu0 %1122
  %v1125 = vadd.f32 %v1115, %v1123
  %v1126 = vtanh.pop %v1125
  %1128 = vrot.lane.b32.xlu0 %v1126, 32
  %v1129 = vpop.permute.xlu0 %1128
  %v1131 = vmul.f32 %v1113, %v1129
  %1133 = vrot.lane.b32.xlu0 %v1131, 80
  %v1134 = vpop.permute.xlu0 %1133
  %s1136 = scalar_lea.vmem [#allocation4], 40
  %1137 = vst.msk [vmem:[%s1136] sm:$0xff] %vm265, %v1134
  %s1138 = scalar_lea.vmem [#allocation3], 16
  %v1139 = vld [vmem:[%s1138] sm:$0xff]
  %v1140 = vpack.c.bf16 %v1051, %v1051
  %1142 = vrot.lane.b32.xlu0 %v1140, 80
  %v1143 = vpop.permute.xlu0 %1142
  %v1145 = vsel %vm265, %v1143, 0
  %1147 = vmatprep.subr.bf16.mxu0 0
  %1148 = vmatpush1.bf16.msra.mxu0 0
  %1149 = vmatprep.subr.bf16.mxu0 0
  %1150 = vmatpush1.bf16.msra.mxu0 0
  %1151 = vmatprep.subr.bf16.mxu0 0
  %1152 = vmatpush1.bf16.msra.mxu0 0
  %1153 = vmatprep.subr.bf16.mxu0 0
  %1154 = vmatpush1.bf16.msra.mxu0 0
  %1155 = vmatprep.subr.bf16.mxu0 0
  %1156 = vmatpush1.bf16.msra.mxu0 0
  %1157 = vmatprep.subr.bf16.mxu0 0
  %1158 = vmatpush1.bf16.msra.mxu0 0
  %1159 = vmatprep.subr.bf16.mxu0 0
  %1160 = vmatpush1.bf16.msra.mxu0 0
  %1161 = vmatprep.subr.bf16.mxu0 0
  %1162 = vmatpush1.bf16.msra.mxu0 %v345
  %1163 = vmatprep.subr.bf16.mxu0 0
  %1164 = vmatpush2.bf16.msra.mxu0 0
  %1165 = vmatprep.subr.bf16.mxu0 0
  %1166 = vmatpush2.bf16.msra.mxu0 0
  %1167 = vmatprep.subr.bf16.mxu0 0
  %1168 = vmatpush2.bf16.msra.mxu0 0
  %1169 = vmatprep.subr.bf16.mxu0 0
  %1170 = vmatpush2.bf16.msra.mxu0 0
  %1171 = vmatprep.subr.bf16.mxu0 0
  %1172 = vmatpush2.bf16.msra.mxu0 0
  %1173 = vmatprep.subr.bf16.mxu0 0
  %1174 = vmatpush2.bf16.msra.mxu0 0
  %1175 = vmatprep.subr.bf16.mxu0 0
  %1176 = vmatpush2.bf16.msra.mxu0 0
  %1177 = vmatprep.subr.bf16.mxu0 0
  %1178 = vmatpush2.bf16.msra.mxu0 0
  %1179 = vmatprep.mubr.bf16.mxu0 0
  %1180 = vmatmul.mubr.bf16.gmra.mxu0 %v1145
  %v1181 = vpop.f32.mrf.mxu0
  %v1182 = vadd.f32 0.0, %v1181
  %v1183 = vpop.f32.mrf.mxu0
  %v1184 = vpop.f32.mrf.mxu0
  %v1185 = vpop.f32.mrf.mxu0
  %1186 = vdwg.mxu0
  %v1187 = vadd.f32 %v1139, %v1182
  %v1188 = vxor.u32 %v1187, 2147483648
  %v1189 = vmul.f32 %v1188, 1.442695
  %v1190 = vpow.pop %v1189
  %v1191 = vadd.f32 %v1190, 1.0
  %v1192 = vrcp.pop %v1191
  %v1193 = vmul.f32 1.0, %v1192
  %v1194 = vtanh.pop %v1187
  %v1195 = vmul.f32 %v1193, %v1045
  %1197 = vrot.lane.b32.xlu0 %v1194, 96
  %v1198 = vpop.permute.xlu0 %1197
  %v1200 = vmul.f32 %v1193, %v1198
  %1202 = vrot.lane.b32.xlu0 %v1200, 16
  %v1203 = vpop.permute.xlu0 %1202
  %v1205 = vadd.f32 %v1195, %v1203
  %v1206 = vtanh.pop %v1205
  %1208 = vrot.lane.b32.xlu0 %v1206, 32
  %v1209 = vpop.permute.xlu0 %1208
  %v1211 = vmul.f32 %v1193, %v1209
  %1213 = vrot.lane.b32.xlu0 %v1211, 80
  %v1214 = vpop.permute.xlu0 %1213
  %s1216 = scalar_lea.vmem [#allocation5], 16
  %1217 = vst.msk [vmem:[%s1216] sm:$0xff] %vm265, %v1214
  %s1218 = scalar_lea.vmem [#allocation2], 48
  %v1219 = vld [vmem:[%s1218] sm:$0xff]
  %v1220 = vpack.c.bf16 %v1131, %v1131
  %1222 = vrot.lane.b32.xlu0 %v1220, 80
  %v1223 = vpop.permute.xlu0 %1222
  %v1225 = vsel %vm265, %v1223, 0
  %1227 = vmatprep.subr.bf16.mxu0 0
  %1228 = vmatpush1.bf16.msra.mxu0 0
  %1229 = vmatprep.subr.bf16.mxu0 0
  %1230 = vmatpush1.bf16.msra.mxu0 0
  %1231 = vmatprep.subr.bf16.mxu0 0
  %1232 = vmatpush1.bf16.msra.mxu0 0
  %1233 = vmatprep.subr.bf16.mxu0 0
  %1234 = vmatpush1.bf16.msra.mxu0 0
  %1235 = vmatprep.subr.bf16.mxu0 0
  %1236 = vmatpush1.bf16.msra.mxu0 0
  %1237 = vmatprep.subr.bf16.mxu0 0
  %1238 = vmatpush1.bf16.msra.mxu0 0
  %1239 = vmatprep.subr.bf16.mxu0 0
  %1240 = vmatpush1.bf16.msra.mxu0 0
  %1241 = vmatprep.subr.bf16.mxu0 0
  %1242 = vmatpush1.bf16.msra.mxu0 %v263
  %1243 = vmatprep.subr.bf16.mxu0 0
  %1244 = vmatpush2.bf16.msra.mxu0 0
  %1245 = vmatprep.subr.bf16.mxu0 0
  %1246 = vmatpush2.bf16.msra.mxu0 0
  %1247 = vmatprep.subr.bf16.mxu0 0
  %1248 = vmatpush2.bf16.msra.mxu0 0
  %1249 = vmatprep.subr.bf16.mxu0 0
  %1250 = vmatpush2.bf16.msra.mxu0 0
  %1251 = vmatprep.subr.bf16.mxu0 0
  %1252 = vmatpush2.bf16.msra.mxu0 0
  %1253 = vmatprep.subr.bf16.mxu0 0
  %1254 = vmatpush2.bf16.msra.mxu0 0
  %1255 = vmatprep.subr.bf16.mxu0 0
  %1256 = vmatpush2.bf16.msra.mxu0 0
  %1257 = vmatprep.subr.bf16.mxu0 0
  %1258 = vmatpush2.bf16.msra.mxu0 0
  %1259 = vmatprep.mubr.bf16.mxu0 0
  %1260 = vmatmul.mubr.bf16.gmra.mxu0 %v1225
  %v1261 = vpop.f32.mrf.mxu0
  %v1262 = vadd.f32 0.0, %v1261
  %v1263 = vpop.f32.mrf.mxu0
  %v1264 = vpop.f32.mrf.mxu0
  %v1265 = vpop.f32.mrf.mxu0
  %1266 = vdwg.mxu0
  %v1267 = vadd.f32 %v1219, %v1262
  %v1268 = vxor.u32 %v1267, 2147483648
  %v1269 = vmul.f32 %v1268, 1.442695
  %v1270 = vpow.pop %v1269
  %v1271 = vadd.f32 %v1270, 1.0
  %v1272 = vrcp.pop %v1271
  %v1273 = vmul.f32 1.0, %v1272
  %v1274 = vtanh.pop %v1267
  %v1275 = vmul.f32 %v1273, %v1125
  %1277 = vrot.lane.b32.xlu0 %v1274, 96
  %v1278 = vpop.permute.xlu0 %1277
  %v1280 = vmul.f32 %v1273, %v1278
  %1282 = vrot.lane.b32.xlu0 %v1280, 16
  %v1283 = vpop.permute.xlu0 %1282
  %v1285 = vadd.f32 %v1275, %v1283
  %v1286 = vtanh.pop %v1285
  %1288 = vrot.lane.b32.xlu0 %v1286, 32
  %v1289 = vpop.permute.xlu0 %1288
  %v1291 = vmul.f32 %v1273, %v1289
  %1293 = vrot.lane.b32.xlu0 %v1291, 80
  %v1294 = vpop.permute.xlu0 %1293
  %s1296 = scalar_lea.vmem [#allocation4], 48
  %1297 = vst.msk [vmem:[%s1296] sm:$0xff] %vm265, %v1294
  %s1298 = scalar_lea.vmem [#allocation3], 8
  %v1299 = vld [vmem:[%s1298] sm:$0xff]
  %v1300 = vpack.c.bf16 %v1211, %v1211
  %1302 = vrot.lane.b32.xlu0 %v1300, 80
  %v1303 = vpop.permute.xlu0 %1302
  %v1305 = vsel %vm265, %v1303, 0
  %1307 = vmatprep.subr.bf16.mxu0 0
  %1308 = vmatpush1.bf16.msra.mxu0 0
  %1309 = vmatprep.subr.bf16.mxu0 0
  %1310 = vmatpush1.bf16.msra.mxu0 0
  %1311 = vmatprep.subr.bf16.mxu0 0
  %1312 = vmatpush1.bf16.msra.mxu0 0
  %1313 = vmatprep.subr.bf16.mxu0 0
  %1314 = vmatpush1.bf16.msra.mxu0 0
  %1315 = vmatprep.subr.bf16.mxu0 0
  %1316 = vmatpush1.bf16.msra.mxu0 0
  %1317 = vmatprep.subr.bf16.mxu0 0
  %1318 = vmatpush1.bf16.msra.mxu0 0
  %1319 = vmatprep.subr.bf16.mxu0 0
  %1320 = vmatpush1.bf16.msra.mxu0 0
  %1321 = vmatprep.subr.bf16.mxu0 0
  %1322 = vmatpush1.bf16.msra.mxu0 %v345
  %1323 = vmatprep.subr.bf16.mxu0 0
  %1324 = vmatpush2.bf16.msra.mxu0 0
  %1325 = vmatprep.subr.bf16.mxu0 0
  %1326 = vmatpush2.bf16.msra.mxu0 0
  %1327 = vmatprep.subr.bf16.mxu0 0
  %1328 = vmatpush2.bf16.msra.mxu0 0
  %1329 = vmatprep.subr.bf16.mxu0 0
  %1330 = vmatpush2.bf16.msra.mxu0 0
  %1331 = vmatprep.subr.bf16.mxu0 0
  %1332 = vmatpush2.bf16.msra.mxu0 0
  %1333 = vmatprep.subr.bf16.mxu0 0
  %1334 = vmatpush2.bf16.msra.mxu0 0
  %1335 = vmatprep.subr.bf16.mxu0 0
  %1336 = vmatpush2.bf16.msra.mxu0 0
  %1337 = vmatprep.subr.bf16.mxu0 0
  %1338 = vmatpush2.bf16.msra.mxu0 0
  %1339 = vmatprep.mubr.bf16.mxu0 0
  %1340 = vmatmul.mubr.bf16.gmra.mxu0 %v1305
  %v1341 = vpop.f32.mrf.mxu0
  %v1342 = vadd.f32 0.0, %v1341
  %v1343 = vpop.f32.mrf.mxu0
  %v1344 = vpop.f32.mrf.mxu0
  %v1345 = vpop.f32.mrf.mxu0
  %1346 = vdwg.mxu0
  %v1347 = vadd.f32 %v1299, %v1342
  %v1348 = vxor.u32 %v1347, 2147483648
  %v1349 = vmul.f32 %v1348, 1.442695
  %v1350 = vpow.pop %v1349
  %v1351 = vadd.f32 %v1350, 1.0
  %v1352 = vrcp.pop %v1351
  %v1353 = vmul.f32 1.0, %v1352
  %v1354 = vtanh.pop %v1347
  %v1355 = vmul.f32 %v1353, %v1205
  %1357 = vrot.lane.b32.xlu0 %v1354, 96
  %v1358 = vpop.permute.xlu0 %1357
  %v1360 = vmul.f32 %v1353, %v1358
  %1362 = vrot.lane.b32.xlu0 %v1360, 16
  %v1363 = vpop.permute.xlu0 %1362
  %v1365 = vadd.f32 %v1355, %v1363
  %v1366 = vtanh.pop %v1365
  %1368 = vrot.lane.b32.xlu0 %v1366, 32
  %v1369 = vpop.permute.xlu0 %1368
  %v1371 = vmul.f32 %v1353, %v1369
  %1373 = vrot.lane.b32.xlu0 %v1371, 80
  %v1374 = vpop.permute.xlu0 %1373
  %s1376 = scalar_lea.vmem [#allocation5], 8
  %1377 = vst.msk [vmem:[%s1376] sm:$0xff] %vm265, %v1374
  %s1378 = scalar_lea.vmem [#allocation2], 56
  %v1379 = vld [vmem:[%s1378] sm:$0xff]
  %v1380 = vpack.c.bf16 %v1291, %v1291
  %1382 = vrot.lane.b32.xlu0 %v1380, 80
  %v1383 = vpop.permute.xlu0 %1382
  %v1385 = vsel %vm265, %v1383, 0
  %1387 = vmatprep.subr.bf16.mxu0 0
  %1388 = vmatpush1.bf16.msra.mxu0 0
  %1389 = vmatprep.subr.bf16.mxu0 0
  %1390 = vmatpush1.bf16.msra.mxu0 0
  %1391 = vmatprep.subr.bf16.mxu0 0
  %1392 = vmatpush1.bf16.msra.mxu0 0
  %1393 = vmatprep.subr.bf16.mxu0 0
  %1394 = vmatpush1.bf16.msra.mxu0 0
  %1395 = vmatprep.subr.bf16.mxu0 0
  %1396 = vmatpush1.bf16.msra.mxu0 0
  %1397 = vmatprep.subr.bf16.mxu0 0
  %1398 = vmatpush1.bf16.msra.mxu0 0
  %1399 = vmatprep.subr.bf16.mxu0 0
  %1400 = vmatpush1.bf16.msra.mxu0 0
  %1401 = vmatprep.subr.bf16.mxu0 0
  %1402 = vmatpush1.bf16.msra.mxu0 %v263
  %1403 = vmatprep.subr.bf16.mxu0 0
  %1404 = vmatpush2.bf16.msra.mxu0 0
  %1405 = vmatprep.subr.bf16.mxu0 0
  %1406 = vmatpush2.bf16.msra.mxu0 0
  %1407 = vmatprep.subr.bf16.mxu0 0
  %1408 = vmatpush2.bf16.msra.mxu0 0
  %1409 = vmatprep.subr.bf16.mxu0 0
  %1410 = vmatpush2.bf16.msra.mxu0 0
  %1411 = vmatprep.subr.bf16.mxu0 0
  %1412 = vmatpush2.bf16.msra.mxu0 0
  %1413 = vmatprep.subr.bf16.mxu0 0
  %1414 = vmatpush2.bf16.msra.mxu0 0
  %1415 = vmatprep.subr.bf16.mxu0 0
  %1416 = vmatpush2.bf16.msra.mxu0 0
  %1417 = vmatprep.subr.bf16.mxu0 0
  %1418 = vmatpush2.bf16.msra.mxu0 0
  %1419 = vmatprep.mubr.bf16.mxu0 0
  %1420 = vmatmul.mubr.bf16.gmra.mxu0 %v1385
  %v1421 = vpop.f32.mrf.mxu0
  %v1422 = vadd.f32 0.0, %v1421
  %v1423 = vpop.f32.mrf.mxu0
  %v1424 = vpop.f32.mrf.mxu0
  %v1425 = vpop.f32.mrf.mxu0
  %1426 = vdwg.mxu0
  %v1427 = vadd.f32 %v1379, %v1422
  %v1428 = vxor.u32 %v1427, 2147483648
  %v1429 = vmul.f32 %v1428, 1.442695
  %v1430 = vpow.pop %v1429
  %v1431 = vadd.f32 %v1430, 1.0
  %v1432 = vrcp.pop %v1431
  %v1433 = vmul.f32 1.0, %v1432
  %v1434 = vtanh.pop %v1427
  %v1435 = vmul.f32 %v1433, %v1285
  %1437 = vrot.lane.b32.xlu0 %v1434, 96
  %v1438 = vpop.permute.xlu0 %1437
  %v1440 = vmul.f32 %v1433, %v1438
  %1442 = vrot.lane.b32.xlu0 %v1440, 16
  %v1443 = vpop.permute.xlu0 %1442
  %v1445 = vadd.f32 %v1435, %v1443
  %v1446 = vtanh.pop %v1445
  %1448 = vrot.lane.b32.xlu0 %v1446, 32
  %v1449 = vpop.permute.xlu0 %1448
  %v1451 = vmul.f32 %v1433, %v1449
  %1453 = vrot.lane.b32.xlu0 %v1451, 80
  %v1454 = vpop.permute.xlu0 %1453
  %s1456 = scalar_lea.vmem [#allocation4], 56
  %1457 = vst.msk [vmem:[%s1456] sm:$0xff] %vm265, %v1454
  %v1458 = vld [vmem:[#allocation3] sm:$0xff]
  %v1459 = vpack.c.bf16 %v1371, %v1371
  %1461 = vrot.lane.b32.xlu0 %v1459, 80
  %v1462 = vpop.permute.xlu0 %1461
  %v1464 = vsel %vm265, %v1462, 0
  %1466 = vmatprep.subr.bf16.mxu0 0
  %1467 = vmatpush1.bf16.msra.mxu0 0
  %1468 = vmatprep.subr.bf16.mxu0 0
  %1469 = vmatpush1.bf16.msra.mxu0 0
  %1470 = vmatprep.subr.bf16.mxu0 0
  %1471 = vmatpush1.bf16.msra.mxu0 0
  %1472 = vmatprep.subr.bf16.mxu0 0
  %1473 = vmatpush1.bf16.msra.mxu0 0
  %1474 = vmatprep.subr.bf16.mxu0 0
  %1475 = vmatpush1.bf16.msra.mxu0 0
  %1476 = vmatprep.subr.bf16.mxu0 0
  %1477 = vmatpush1.bf16.msra.mxu0 0
  %1478 = vmatprep.subr.bf16.mxu0 0
  %1479 = vmatpush1.bf16.msra.mxu0 0
  %1480 = vmatprep.subr.bf16.mxu0 0
  %1481 = vmatpush1.bf16.msra.mxu0 %v345
  %1482 = vmatprep.subr.bf16.mxu0 0
  %1483 = vmatpush2.bf16.msra.mxu0 0
  %1484 = vmatprep.subr.bf16.mxu0 0
  %1485 = vmatpush2.bf16.msra.mxu0 0
  %1486 = vmatprep.subr.bf16.mxu0 0
  %1487 = vmatpush2.bf16.msra.mxu0 0
  %1488 = vmatprep.subr.bf16.mxu0 0
  %1489 = vmatpush2.bf16.msra.mxu0 0
  %1490 = vmatprep.subr.bf16.mxu0 0
  %1491 = vmatpush2.bf16.msra.mxu0 0
  %1492 = vmatprep.subr.bf16.mxu0 0
  %1493 = vmatpush2.bf16.msra.mxu0 0
  %1494 = vmatprep.subr.bf16.mxu0 0
  %1495 = vmatpush2.bf16.msra.mxu0 0
  %1496 = vmatprep.subr.bf16.mxu0 0
  %1497 = vmatpush2.bf16.msra.mxu0 0
  %1498 = vmatprep.mubr.bf16.mxu0 0
  %1499 = vmatmul.mubr.bf16.gmra.mxu0 %v1464
  %v1500 = vpop.f32.mrf.mxu0
  %v1501 = vadd.f32 0.0, %v1500
  %v1502 = vpop.f32.mrf.mxu0
  %v1503 = vpop.f32.mrf.mxu0
  %v1504 = vpop.f32.mrf.mxu0
  %1505 = vdwg.mxu0
  %v1506 = vadd.f32 %v1458, %v1501
  %v1507 = vxor.u32 %v1506, 2147483648
  %v1508 = vmul.f32 %v1507, 1.442695
  %v1509 = vpow.pop %v1508
  %v1510 = vadd.f32 %v1509, 1.0
  %v1511 = vrcp.pop %v1510
  %v1512 = vmul.f32 1.0, %v1511
  %v1513 = vtanh.pop %v1506
  %v1514 = vmul.f32 %v1512, %v1365
  %1516 = vrot.lane.b32.xlu0 %v1513, 96
  %v1517 = vpop.permute.xlu0 %1516
  %v1519 = vmul.f32 %v1512, %v1517
  %1521 = vrot.lane.b32.xlu0 %v1519, 16
  %v1522 = vpop.permute.xlu0 %1521
  %v1524 = vadd.f32 %v1514, %v1522
  %v1525 = vtanh.pop %v1524
  %1527 = vrot.lane.b32.xlu0 %v1525, 32
  %v1528 = vpop.permute.xlu0 %1527
  %v1530 = vmul.f32 %v1512, %v1528
  %1532 = vrot.lane.b32.xlu0 %v1530, 80
  %v1533 = vpop.permute.xlu0 %1532
  %1535 = vst.msk [vmem:[#allocation5] sm:$0xff] %vm265, %v1533
  %v1536 = vld [vmem:[%s7] sm:$0xf]
  %v1537 = vld [vmem:[%s7 + $0x4] sm:$0xf]
  %v1538 = vld [vmem:[%s7 + $0x8] sm:$0xf]
  %v1539 = vld [vmem:[%s7 + $0xc] sm:$0xf]
  %v1540 = vld [vmem:[%s8] sm:$0xf]
  %v1541 = vld [vmem:[%s8 + $0x4] sm:$0xf]
  %v1542 = vld [vmem:[%s9] sm:$0x1]
  %v1543 = vld [vmem:[#allocation4] sm:$0xff]
  %v1544 = vpack.c.bf16 %v1543, %v1543
  %v1545 = vld [vmem:[#allocation5] sm:$0xff]
  %v1546 = vpack.c.bf16 %v1545, %v1545
  %v1549 = vunpack.c.l.b16 %v1538
  %v1550 = vunpack.c.l.b16 %v1539
  %v1551 = vpack.c.b16 %v1550, %v1549
  %v1554 = vsel %vm265, %v1546, 0
  %1556 = vmatprep.subr.bf16.mxu0 0
  %1557 = vmatpush1.bf16.msra.mxu0 0
  %1558 = vmatprep.subr.bf16.mxu0 0
  %1559 = vmatpush1.bf16.msra.mxu0 0
  %1560 = vmatprep.subr.bf16.mxu0 0
  %1561 = vmatpush1.bf16.msra.mxu0 0
  %1562 = vmatprep.subr.bf16.mxu0 0
  %1563 = vmatpush1.bf16.msra.mxu0 0
  %1564 = vmatprep.subr.bf16.mxu0 0
  %1565 = vmatpush1.bf16.msra.mxu0 0
  %1566 = vmatprep.subr.bf16.mxu0 0
  %1567 = vmatpush1.bf16.msra.mxu0 0
  %1568 = vmatprep.subr.bf16.mxu0 0
  %1569 = vmatpush1.bf16.msra.mxu0 0
  %1570 = vmatprep.subr.bf16.mxu0 0
  %1571 = vmatpush1.bf16.msra.mxu0 %v1551
  %1572 = vmatprep.subr.bf16.mxu0 0
  %1573 = vmatpush2.bf16.msra.mxu0 0
  %1574 = vmatprep.subr.bf16.mxu0 0
  %1575 = vmatpush2.bf16.msra.mxu0 0
  %1576 = vmatprep.subr.bf16.mxu0 0
  %1577 = vmatpush2.bf16.msra.mxu0 0
  %1578 = vmatprep.subr.bf16.mxu0 0
  %1579 = vmatpush2.bf16.msra.mxu0 0
  %1580 = vmatprep.subr.bf16.mxu0 0
  %1581 = vmatpush2.bf16.msra.mxu0 0
  %1582 = vmatprep.subr.bf16.mxu0 0
  %1583 = vmatpush2.bf16.msra.mxu0 0
  %1584 = vmatprep.subr.bf16.mxu0 0
  %1585 = vmatpush2.bf16.msra.mxu0 0
  %1586 = vmatprep.subr.bf16.mxu0 0
  %1587 = vmatpush2.bf16.msra.mxu0 0
  %1588 = vmatprep.mubr.bf16.mxu0 0
  %1589 = vmatmul.mubr.bf16.gmra.mxu0 %v1554
  %v1590 = vpop.f32.mrf.mxu0
  %v1591 = vadd.f32 0.0, %v1590
  %v1592 = vpop.f32.mrf.mxu0
  %v1593 = vpop.f32.mrf.mxu0
  %v1594 = vpop.f32.mrf.mxu0
  %1595 = vdwg.mxu0
  %v1598 = vunpack.c.l.b16 %v1536
  %v1599 = vunpack.c.l.b16 %v1537
  %v1600 = vpack.c.b16 %v1599, %v1598
  %v1603 = vsel %vm265, %v1544, 0
  %1605 = vmatprep.subr.bf16.mxu0 0
  %1606 = vmatpush1.bf16.msra.mxu0 0
  %1607 = vmatprep.subr.bf16.mxu0 0
  %1608 = vmatpush1.bf16.msra.mxu0 0
  %1609 = vmatprep.subr.bf16.mxu0 0
  %1610 = vmatpush1.bf16.msra.mxu0 0
  %1611 = vmatprep.subr.bf16.mxu0 0
  %1612 = vmatpush1.bf16.msra.mxu0 0
  %1613 = vmatprep.subr.bf16.mxu0 0
  %1614 = vmatpush1.bf16.msra.mxu0 0
  %1615 = vmatprep.subr.bf16.mxu0 0
  %1616 = vmatpush1.bf16.msra.mxu0 0
  %1617 = vmatprep.subr.bf16.mxu0 0
  %1618 = vmatpush1.bf16.msra.mxu0 0
  %1619 = vmatprep.subr.bf16.mxu0 0
  %1620 = vmatpush1.bf16.msra.mxu0 %v1600
  %1621 = vmatprep.subr.bf16.mxu0 0
  %1622 = vmatpush2.bf16.msra.mxu0 0
  %1623 = vmatprep.subr.bf16.mxu0 0
  %1624 = vmatpush2.bf16.msra.mxu0 0
  %1625 = vmatprep.subr.bf16.mxu0 0
  %1626 = vmatpush2.bf16.msra.mxu0 0
  %1627 = vmatprep.subr.bf16.mxu0 0
  %1628 = vmatpush2.bf16.msra.mxu0 0
  %1629 = vmatprep.subr.bf16.mxu0 0
  %1630 = vmatpush2.bf16.msra.mxu0 0
  %1631 = vmatprep.subr.bf16.mxu0 0
  %1632 = vmatpush2.bf16.msra.mxu0 0
  %1633 = vmatprep.subr.bf16.mxu0 0
  %1634 = vmatpush2.bf16.msra.mxu0 0
  %1635 = vmatprep.subr.bf16.mxu0 0
  %1636 = vmatpush2.bf16.msra.mxu0 0
  %1637 = vmatprep.mubr.bf16.mxu0 0
  %1638 = vmatmul.mubr.bf16.gmra.mxu0 %v1603
  %v1639 = vpop.f32.mrf.mxu0
  %v1640 = vadd.f32 %v1591, %v1639
  %v1641 = vpop.f32.mrf.mxu0
  %v1642 = vpop.f32.mrf.mxu0
  %v1643 = vpop.f32.mrf.mxu0
  %1644 = vdwg.mxu0
  %v1646 = vlaneseq
  %v1647 = vshrl.u32 %v1646, 7
  %v1648 = vsub.s32 0, %v1647
  %v1649 = vrot.slane %v1542, %v1648
  %v1651 = vadd.f32 %v1640, %v1649
  %v1654 = vunpack.c.l.b16 %v1540
  %v1655 = vunpack.c.l.b16 %v1541
  %v1656 = vpack.c.b16 %v1655, %v1654
  %1658 = vmatprep.subr.bf16.mxu0 0
  %1659 = vmatpush1.bf16.msra.mxu0 0
  %1660 = vmatprep.subr.bf16.mxu0 0
  %1661 = vmatpush1.bf16.msra.mxu0 0
  %1662 = vmatprep.subr.bf16.mxu0 0
  %1663 = vmatpush1.bf16.msra.mxu0 0
  %1664 = vmatprep.subr.bf16.mxu0 0
  %1665 = vmatpush1.bf16.msra.mxu0 0
  %1666 = vmatprep.subr.bf16.mxu0 0
  %1667 = vmatpush1.bf16.msra.mxu0 0
  %1668 = vmatprep.subr.bf16.mxu0 0
  %1669 = vmatpush1.bf16.msra.mxu0 0
  %1670 = vmatprep.subr.bf16.mxu0 0
  %1671 = vmatpush1.bf16.msra.mxu0 0
  %1672 = vmatprep.subr.bf16.mxu0 0
  %1673 = vmatpush1.bf16.msra.mxu0 %v1656
  %1674 = vmatprep.subr.bf16.mxu0 0
  %1675 = vmatpush2.bf16.msra.mxu0 0
  %1676 = vmatprep.subr.bf16.mxu0 0
  %1677 = vmatpush2.bf16.msra.mxu0 0
  %1678 = vmatprep.subr.bf16.mxu0 0
  %1679 = vmatpush2.bf16.msra.mxu0 0
  %1680 = vmatprep.subr.bf16.mxu0 0
  %1681 = vmatpush2.bf16.msra.mxu0 0
  %1682 = vmatprep.subr.bf16.mxu0 0
  %1683 = vmatpush2.bf16.msra.mxu0 0
  %1684 = vmatprep.subr.bf16.mxu0 0
  %1685 = vmatpush2.bf16.msra.mxu0 0
  %1686 = vmatprep.subr.bf16.mxu0 0
  %1687 = vmatpush2.bf16.msra.mxu0 0
  %1688 = vmatprep.subr.bf16.mxu0 0
  %1689 = vmatpush2.bf16.msra.mxu0 0
  %1690 = vmatprep.mubr.bf16.mxu0 0
  %1691 = vmatmul.mubr.bf16.gmra.mxu0 %v267
  %v1692 = vpop.f32.mrf.mxu0
  %v1693 = vadd.f32 0.0, %v1692
  %v1694 = vpop.f32.mrf.mxu0
  %v1695 = vpop.f32.mrf.mxu0
  %v1696 = vpop.f32.mrf.mxu0
  %1697 = vdwg.mxu0
  %v1698 = vadd.f32 %v1651, %v1693
  %v1699 = vxor.u32 %v1698, 2147483648
  %v1700 = vmul.f32 %v1699, 1.442695
  %v1701 = vpow.pop %v1700
  %v1702 = vadd.f32 %v1701, 1.0
  %v1703 = vrcp.pop %v1702
  %v1704 = vmul.f32 1.0, %v1703
  %v1705 = vtanh.pop %v1698
  %v1706 = vmul.f32 %v1704, 0.0
  %1708 = vrot.lane.b32.xlu0 %v1705, 96
  %v1709 = vpop.permute.xlu0 %1708
  %v1711 = vmul.f32 %v1704, %v1709
  %1713 = vrot.lane.b32.xlu0 %v1711, 16
  %v1714 = vpop.permute.xlu0 %1713
  %v1716 = vadd.f32 %v1706, %v1714
  %v1717 = vtanh.pop %v1716
  %1719 = vrot.lane.b32.xlu0 %v1717, 32
  %v1720 = vpop.permute.xlu0 %1719
  %v1722 = vmul.f32 %v1704, %v1720
  %1724 = vrot.lane.b32.xlu0 %v1722, 80
  %v1725 = vpop.permute.xlu0 %1724
  %1727 = vst.msk [vmem:[%s10] sm:$0xff] %vm265, %v1725
  %v1728 = vld [vmem:[%s496] sm:$0xff]
  %v1729 = vpack.c.bf16 %v1728, %v1728
  %v1730 = vld [vmem:[%s1376] sm:$0xff]
  %v1731 = vpack.c.bf16 %v1730, %v1730
  %v1733 = vsel %vm265, %v1731, 0
  %1735 = vmatprep.subr.bf16.mxu0 0
  %1736 = vmatpush1.bf16.msra.mxu0 0
  %1737 = vmatprep.subr.bf16.mxu0 0
  %1738 = vmatpush1.bf16.msra.mxu0 0
  %1739 = vmatprep.subr.bf16.mxu0 0
  %1740 = vmatpush1.bf16.msra.mxu0 0
  %1741 = vmatprep.subr.bf16.mxu0 0
  %1742 = vmatpush1.bf16.msra.mxu0 0
  %1743 = vmatprep.subr.bf16.mxu0 0
  %1744 = vmatpush1.bf16.msra.mxu0 0
  %1745 = vmatprep.subr.bf16.mxu0 0
  %1746 = vmatpush1.bf16.msra.mxu0 0
  %1747 = vmatprep.subr.bf16.mxu0 0
  %1748 = vmatpush1.bf16.msra.mxu0 0
  %1749 = vmatprep.subr.bf16.mxu0 0
  %1750 = vmatpush1.bf16.msra.mxu0 %v1551
  %1751 = vmatprep.subr.bf16.mxu0 0
  %1752 = vmatpush2.bf16.msra.mxu0 0
  %1753 = vmatprep.subr.bf16.mxu0 0
  %1754 = vmatpush2.bf16.msra.mxu0 0
  %1755 = vmatprep.subr.bf16.mxu0 0
  %1756 = vmatpush2.bf16.msra.mxu0 0
  %1757 = vmatprep.subr.bf16.mxu0 0
  %1758 = vmatpush2.bf16.msra.mxu0 0
  %1759 = vmatprep.subr.bf16.mxu0 0
  %1760 = vmatpush2.bf16.msra.mxu0 0
  %1761 = vmatprep.subr.bf16.mxu0 0
  %1762 = vmatpush2.bf16.msra.mxu0 0
  %1763 = vmatprep.subr.bf16.mxu0 0
  %1764 = vmatpush2.bf16.msra.mxu0 0
  %1765 = vmatprep.subr.bf16.mxu0 0
  %1766 = vmatpush2.bf16.msra.mxu0 0
  %1767 = vmatprep.mubr.bf16.mxu0 0
  %1768 = vmatmul.mubr.bf16.gmra.mxu0 %v1733
  %v1769 = vpop.f32.mrf.mxu0
  %v1770 = vadd.f32 0.0, %v1769
  %v1771 = vpop.f32.mrf.mxu0
  %v1772 = vpop.f32.mrf.mxu0
  %v1773 = vpop.f32.mrf.mxu0
  %1774 = vdwg.mxu0
  %v1776 = vsel %vm265, %v1729, 0
  %1778 = vmatprep.subr.bf16.mxu0 0
  %1779 = vmatpush1.bf16.msra.mxu0 0
  %1780 = vmatprep.subr.bf16.mxu0 0
  %1781 = vmatpush1.bf16.msra.mxu0 0
  %1782 = vmatprep.subr.bf16.mxu0 0
  %1783 = vmatpush1.bf16.msra.mxu0 0
  %1784 = vmatprep.subr.bf16.mxu0 0
  %1785 = vmatpush1.bf16.msra.mxu0 0
  %1786 = vmatprep.subr.bf16.mxu0 0
  %1787 = vmatpush1.bf16.msra.mxu0 0
  %1788 = vmatprep.subr.bf16.mxu0 0
  %1789 = vmatpush1.bf16.msra.mxu0 0
  %1790 = vmatprep.subr.bf16.mxu0 0
  %1791 = vmatpush1.bf16.msra.mxu0 0
  %1792 = vmatprep.subr.bf16.mxu0 0
  %1793 = vmatpush1.bf16.msra.mxu0 %v1600
  %1794 = vmatprep.subr.bf16.mxu0 0
  %1795 = vmatpush2.bf16.msra.mxu0 0
  %1796 = vmatprep.subr.bf16.mxu0 0
  %1797 = vmatpush2.bf16.msra.mxu0 0
  %1798 = vmatprep.subr.bf16.mxu0 0
  %1799 = vmatpush2.bf16.msra.mxu0 0
  %1800 = vmatprep.subr.bf16.mxu0 0
  %1801 = vmatpush2.bf16.msra.mxu0 0
  %1802 = vmatprep.subr.bf16.mxu0 0
  %1803 = vmatpush2.bf16.msra.mxu0 0
  %1804 = vmatprep.subr.bf16.mxu0 0
  %1805 = vmatpush2.bf16.msra.mxu0 0
  %1806 = vmatprep.subr.bf16.mxu0 0
  %1807 = vmatpush2.bf16.msra.mxu0 0
  %1808 = vmatprep.subr.bf16.mxu0 0
  %1809 = vmatpush2.bf16.msra.mxu0 0
  %1810 = vmatprep.mubr.bf16.mxu0 0
  %1811 = vmatmul.mubr.bf16.gmra.mxu0 %v1776
  %v1812 = vpop.f32.mrf.mxu0
  %v1813 = vadd.f32 %v1770, %v1812
  %v1814 = vpop.f32.mrf.mxu0
  %v1815 = vpop.f32.mrf.mxu0
  %v1816 = vpop.f32.mrf.mxu0
  %1817 = vdwg.mxu0
  %v1818 = vadd.f32 %v1813, %v1649
  %v1819 = vpack.c.bf16 %v1722, %v1722
  %1821 = vrot.lane.b32.xlu0 %v1819, 80
  %v1822 = vpop.permute.xlu0 %1821
  %v1824 = vsel %vm265, %v1822, 0
  %1826 = vmatprep.subr.bf16.mxu0 0
  %1827 = vmatpush1.bf16.msra.mxu0 0
  %1828 = vmatprep.subr.bf16.mxu0 0
  %1829 = vmatpush1.bf16.msra.mxu0 0
  %1830 = vmatprep.subr.bf16.mxu0 0
  %1831 = vmatpush1.bf16.msra.mxu0 0
  %1832 = vmatprep.subr.bf16.mxu0 0
  %1833 = vmatpush1.bf16.msra.mxu0 0
  %1834 = vmatprep.subr.bf16.mxu0 0
  %1835 = vmatpush1.bf16.msra.mxu0 0
  %1836 = vmatprep.subr.bf16.mxu0 0
  %1837 = vmatpush1.bf16.msra.mxu0 0
  %1838 = vmatprep.subr.bf16.mxu0 0
  %1839 = vmatpush1.bf16.msra.mxu0 0
  %1840 = vmatprep.subr.bf16.mxu0 0
  %1841 = vmatpush1.bf16.msra.mxu0 %v1656
  %1842 = vmatprep.subr.bf16.mxu0 0
  %1843 = vmatpush2.bf16.msra.mxu0 0
  %1844 = vmatprep.subr.bf16.mxu0 0
  %1845 = vmatpush2.bf16.msra.mxu0 0
  %1846 = vmatprep.subr.bf16.mxu0 0
  %1847 = vmatpush2.bf16.msra.mxu0 0
  %1848 = vmatprep.subr.bf16.mxu0 0
  %1849 = vmatpush2.bf16.msra.mxu0 0
  %1850 = vmatprep.subr.bf16.mxu0 0
  %1851 = vmatpush2.bf16.msra.mxu0 0
  %1852 = vmatprep.subr.bf16.mxu0 0
  %1853 = vmatpush2.bf16.msra.mxu0 0
  %1854 = vmatprep.subr.bf16.mxu0 0
  %1855 = vmatpush2.bf16.msra.mxu0 0
  %1856 = vmatprep.subr.bf16.mxu0 0
  %1857 = vmatpush2.bf16.msra.mxu0 0
  %1858 = vmatprep.mubr.bf16.mxu0 0
  %1859 = vmatmul.mubr.bf16.gmra.mxu0 %v1824
  %v1860 = vpop.f32.mrf.mxu0
  %v1861 = vadd.f32 0.0, %v1860
  %v1862 = vpop.f32.mrf.mxu0
  %v1863 = vpop.f32.mrf.mxu0
  %v1864 = vpop.f32.mrf.mxu0
  %1865 = vdwg.mxu0
  %v1866 = vadd.f32 %v1818, %v1861
  %v1867 = vxor.u32 %v1866, 2147483648
  %v1868 = vmul.f32 %v1867, 1.442695
  %v1869 = vpow.pop %v1868
  %v1870 = vadd.f32 %v1869, 1.0
  %v1871 = vrcp.pop %v1870
  %v1872 = vmul.f32 1.0, %v1871
  %v1873 = vtanh.pop %v1866
  %v1874 = vmul.f32 %v1872, %v1716
  %1876 = vrot.lane.b32.xlu0 %v1873, 96
  %v1877 = vpop.permute.xlu0 %1876
  %v1879 = vmul.f32 %v1872, %v1877
  %1881 = vrot.lane.b32.xlu0 %v1879, 16
  %v1882 = vpop.permute.xlu0 %1881
  %v1884 = vadd.f32 %v1874, %v1882
  %v1885 = vtanh.pop %v1884
  %1887 = vrot.lane.b32.xlu0 %v1885, 32
  %v1888 = vpop.permute.xlu0 %1887
  %v1890 = vmul.f32 %v1872, %v1888
  %1892 = vrot.lane.b32.xlu0 %v1890, 80
  %v1893 = vpop.permute.xlu0 %1892
  %s1895 = scalar_lea.vmem %s10, 8
  %1896 = vst.msk [vmem:[%s1895] sm:$0xff] %vm265, %v1893
  %v1897 = vld [vmem:[%s656] sm:$0xff]
  %v1898 = vpack.c.bf16 %v1897, %v1897
  %v1899 = vld [vmem:[%s1216] sm:$0xff]
  %v1900 = vpack.c.bf16 %v1899, %v1899
  %v1902 = vsel %vm265, %v1900, 0
  %1904 = vmatprep.subr.bf16.mxu0 0
  %1905 = vmatpush1.bf16.msra.mxu0 0
  %1906 = vmatprep.subr.bf16.mxu0 0
  %1907 = vmatpush1.bf16.msra.mxu0 0
  %1908 = vmatprep.subr.bf16.mxu0 0
  %1909 = vmatpush1.bf16.msra.mxu0 0
  %1910 = vmatprep.subr.bf16.mxu0 0
  %1911 = vmatpush1.bf16.msra.mxu0 0
  %1912 = vmatprep.subr.bf16.mxu0 0
  %1913 = vmatpush1.bf16.msra.mxu0 0
  %1914 = vmatprep.subr.bf16.mxu0 0
  %1915 = vmatpush1.bf16.msra.mxu0 0
  %1916 = vmatprep.subr.bf16.mxu0 0
  %1917 = vmatpush1.bf16.msra.mxu0 0
  %1918 = vmatprep.subr.bf16.mxu0 0
  %1919 = vmatpush1.bf16.msra.mxu0 %v1551
  %1920 = vmatprep.subr.bf16.mxu0 0
  %1921 = vmatpush2.bf16.msra.mxu0 0
  %1922 = vmatprep.subr.bf16.mxu0 0
  %1923 = vmatpush2.bf16.msra.mxu0 0
  %1924 = vmatprep.subr.bf16.mxu0 0
  %1925 = vmatpush2.bf16.msra.mxu0 0
  %1926 = vmatprep.subr.bf16.mxu0 0
  %1927 = vmatpush2.bf16.msra.mxu0 0
  %1928 = vmatprep.subr.bf16.mxu0 0
  %1929 = vmatpush2.bf16.msra.mxu0 0
  %1930 = vmatprep.subr.bf16.mxu0 0
  %1931 = vmatpush2.bf16.msra.mxu0 0
  %1932 = vmatprep.subr.bf16.mxu0 0
  %1933 = vmatpush2.bf16.msra.mxu0 0
  %1934 = vmatprep.subr.bf16.mxu0 0
  %1935 = vmatpush2.bf16.msra.mxu0 0
  %1936 = vmatprep.mubr.bf16.mxu0 0
  %1937 = vmatmul.mubr.bf16.gmra.mxu0 %v1902
  %v1938 = vpop.f32.mrf.mxu0
  %v1939 = vadd.f32 0.0, %v1938
  %v1940 = vpop.f32.mrf.mxu0
  %v1941 = vpop.f32.mrf.mxu0
  %v1942 = vpop.f32.mrf.mxu0
  %1943 = vdwg.mxu0
  %v1945 = vsel %vm265, %v1898, 0
  %1947 = vmatprep.subr.bf16.mxu0 0
  %1948 = vmatpush1.bf16.msra.mxu0 0
  %1949 = vmatprep.subr.bf16.mxu0 0
  %1950 = vmatpush1.bf16.msra.mxu0 0
  %1951 = vmatprep.subr.bf16.mxu0 0
  %1952 = vmatpush1.bf16.msra.mxu0 0
  %1953 = vmatprep.subr.bf16.mxu0 0
  %1954 = vmatpush1.bf16.msra.mxu0 0
  %1955 = vmatprep.subr.bf16.mxu0 0
  %1956 = vmatpush1.bf16.msra.mxu0 0
  %1957 = vmatprep.subr.bf16.mxu0 0
  %1958 = vmatpush1.bf16.msra.mxu0 0
  %1959 = vmatprep.subr.bf16.mxu0 0
  %1960 = vmatpush1.bf16.msra.mxu0 0
  %1961 = vmatprep.subr.bf16.mxu0 0
  %1962 = vmatpush1.bf16.msra.mxu0 %v1600
  %1963 = vmatprep.subr.bf16.mxu0 0
  %1964 = vmatpush2.bf16.msra.mxu0 0
  %1965 = vmatprep.subr.bf16.mxu0 0
  %1966 = vmatpush2.bf16.msra.mxu0 0
  %1967 = vmatprep.subr.bf16.mxu0 0
  %1968 = vmatpush2.bf16.msra.mxu0 0
  %1969 = vmatprep.subr.bf16.mxu0 0
  %1970 = vmatpush2.bf16.msra.mxu0 0
  %1971 = vmatprep.subr.bf16.mxu0 0
  %1972 = vmatpush2.bf16.msra.mxu0 0
  %1973 = vmatprep.subr.bf16.mxu0 0
  %1974 = vmatpush2.bf16.msra.mxu0 0
  %1975 = vmatprep.subr.bf16.mxu0 0
  %1976 = vmatpush2.bf16.msra.mxu0 0
  %1977 = vmatprep.subr.bf16.mxu0 0
  %1978 = vmatpush2.bf16.msra.mxu0 0
  %1979 = vmatprep.mubr.bf16.mxu0 0
  %1980 = vmatmul.mubr.bf16.gmra.mxu0 %v1945
  %v1981 = vpop.f32.mrf.mxu0
  %v1982 = vadd.f32 %v1939, %v1981
  %v1983 = vpop.f32.mrf.mxu0
  %v1984 = vpop.f32.mrf.mxu0
  %v1985 = vpop.f32.mrf.mxu0
  %1986 = vdwg.mxu0
  %v1987 = vadd.f32 %v1982, %v1649
  %v1988 = vpack.c.bf16 %v1890, %v1890
  %1990 = vrot.lane.b32.xlu0 %v1988, 80
  %v1991 = vpop.permute.xlu0 %1990
  %v1993 = vsel %vm265, %v1991, 0
  %1995 = vmatprep.subr.bf16.mxu0 0
  %1996 = vmatpush1.bf16.msra.mxu0 0
  %1997 = vmatprep.subr.bf16.mxu0 0
  %1998 = vmatpush1.bf16.msra.mxu0 0
  %1999 = vmatprep.subr.bf16.mxu0 0
  %2000 = vmatpush1.bf16.msra.mxu0 0
  %2001 = vmatprep.subr.bf16.mxu0 0
  %2002 = vmatpush1.bf16.msra.mxu0 0
  %2003 = vmatprep.subr.bf16.mxu0 0
  %2004 = vmatpush1.bf16.msra.mxu0 0
  %2005 = vmatprep.subr.bf16.mxu0 0
  %2006 = vmatpush1.bf16.msra.mxu0 0
  %2007 = vmatprep.subr.bf16.mxu0 0
  %2008 = vmatpush1.bf16.msra.mxu0 0
  %2009 = vmatprep.subr.bf16.mxu0 0
  %2010 = vmatpush1.bf16.msra.mxu0 %v1656
  %2011 = vmatprep.subr.bf16.mxu0 0
  %2012 = vmatpush2.bf16.msra.mxu0 0
  %2013 = vmatprep.subr.bf16.mxu0 0
  %2014 = vmatpush2.bf16.msra.mxu0 0
  %2015 = vmatprep.subr.bf16.mxu0 0
  %2016 = vmatpush2.bf16.msra.mxu0 0
  %2017 = vmatprep.subr.bf16.mxu0 0
  %2018 = vmatpush2.bf16.msra.mxu0 0
  %2019 = vmatprep.subr.bf16.mxu0 0
  %2020 = vmatpush2.bf16.msra.mxu0 0
  %2021 = vmatprep.subr.bf16.mxu0 0
  %2022 = vmatpush2.bf16.msra.mxu0 0
  %2023 = vmatprep.subr.bf16.mxu0 0
  %2024 = vmatpush2.bf16.msra.mxu0 0
  %2025 = vmatprep.subr.bf16.mxu0 0
  %2026 = vmatpush2.bf16.msra.mxu0 0
  %2027 = vmatprep.mubr.bf16.mxu0 0
  %2028 = vmatmul.mubr.bf16.gmra.mxu0 %v1993
  %v2029 = vpop.f32.mrf.mxu0
  %v2030 = vadd.f32 0.0, %v2029
  %v2031 = vpop.f32.mrf.mxu0
  %v2032 = vpop.f32.mrf.mxu0
  %v2033 = vpop.f32.mrf.mxu0
  %2034 = vdwg.mxu0
  %v2035 = vadd.f32 %v1987, %v2030
  %v2036 = vxor.u32 %v2035, 2147483648
  %v2037 = vmul.f32 %v2036, 1.442695
  %v2038 = vpow.pop %v2037
  %v2039 = vadd.f32 %v2038, 1.0
  %v2040 = vrcp.pop %v2039
  %v2041 = vmul.f32 1.0, %v2040
  %v2042 = vtanh.pop %v2035
  %v2043 = vmul.f32 %v2041, %v1884
  %2045 = vrot.lane.b32.xlu0 %v2042, 96
  %v2046 = vpop.permute.xlu0 %2045
  %v2048 = vmul.f32 %v2041, %v2046
  %2050 = vrot.lane.b32.xlu0 %v2048, 16
  %v2051 = vpop.permute.xlu0 %2050
  %v2053 = vadd.f32 %v2043, %v2051
  %v2054 = vtanh.pop %v2053
  %2056 = vrot.lane.b32.xlu0 %v2054, 32
  %v2057 = vpop.permute.xlu0 %2056
  %v2059 = vmul.f32 %v2041, %v2057
  %2061 = vrot.lane.b32.xlu0 %v2059, 80
  %v2062 = vpop.permute.xlu0 %2061
  %s2064 = scalar_lea.vmem %s10, 16
  %2065 = vst.msk [vmem:[%s2064] sm:$0xff] %vm265, %v2062
  %v2066 = vld [vmem:[%s816] sm:$0xff]
  %v2067 = vpack.c.bf16 %v2066, %v2066
  %v2068 = vld [vmem:[%s1056] sm:$0xff]
  %v2069 = vpack.c.bf16 %v2068, %v2068
  %v2071 = vsel %vm265, %v2069, 0
  %2073 = vmatprep.subr.bf16.mxu0 0
  %2074 = vmatpush1.bf16.msra.mxu0 0
  %2075 = vmatprep.subr.bf16.mxu0 0
  %2076 = vmatpush1.bf16.msra.mxu0 0
  %2077 = vmatprep.subr.bf16.mxu0 0
  %2078 = vmatpush1.bf16.msra.mxu0 0
  %2079 = vmatprep.subr.bf16.mxu0 0
  %2080 = vmatpush1.bf16.msra.mxu0 0
  %2081 = vmatprep.subr.bf16.mxu0 0
  %2082 = vmatpush1.bf16.msra.mxu0 0
  %2083 = vmatprep.subr.bf16.mxu0 0
  %2084 = vmatpush1.bf16.msra.mxu0 0
  %2085 = vmatprep.subr.bf16.mxu0 0
  %2086 = vmatpush1.bf16.msra.mxu0 0
  %2087 = vmatprep.subr.bf16.mxu0 0
  %2088 = vmatpush1.bf16.msra.mxu0 %v1551
  %2089 = vmatprep.subr.bf16.mxu0 0
  %2090 = vmatpush2.bf16.msra.mxu0 0
  %2091 = vmatprep.subr.bf16.mxu0 0
  %2092 = vmatpush2.bf16.msra.mxu0 0
  %2093 = vmatprep.subr.bf16.mxu0 0
  %2094 = vmatpush2.bf16.msra.mxu0 0
  %2095 = vmatprep.subr.bf16.mxu0 0
  %2096 = vmatpush2.bf16.msra.mxu0 0
  %2097 = vmatprep.subr.bf16.mxu0 0
  %2098 = vmatpush2.bf16.msra.mxu0 0
  %2099 = vmatprep.subr.bf16.mxu0 0
  %2100 = vmatpush2.bf16.msra.mxu0 0
  %2101 = vmatprep.subr.bf16.mxu0 0
  %2102 = vmatpush2.bf16.msra.mxu0 0
  %2103 = vmatprep.subr.bf16.mxu0 0
  %2104 = vmatpush2.bf16.msra.mxu0 0
  %2105 = vmatprep.mubr.bf16.mxu0 0
  %2106 = vmatmul.mubr.bf16.gmra.mxu0 %v2071
  %v2107 = vpop.f32.mrf.mxu0
  %v2108 = vadd.f32 0.0, %v2107
  %v2109 = vpop.f32.mrf.mxu0
  %v2110 = vpop.f32.mrf.mxu0
  %v2111 = vpop.f32.mrf.mxu0
  %2112 = vdwg.mxu0
  %v2114 = vsel %vm265, %v2067, 0
  %2116 = vmatprep.subr.bf16.mxu0 0
  %2117 = vmatpush1.bf16.msra.mxu0 0
  %2118 = vmatprep.subr.bf16.mxu0 0
  %2119 = vmatpush1.bf16.msra.mxu0 0
  %2120 = vmatprep.subr.bf16.mxu0 0
  %2121 = vmatpush1.bf16.msra.mxu0 0
  %2122 = vmatprep.subr.bf16.mxu0 0
  %2123 = vmatpush1.bf16.msra.mxu0 0
  %2124 = vmatprep.subr.bf16.mxu0 0
  %2125 = vmatpush1.bf16.msra.mxu0 0
  %2126 = vmatprep.subr.bf16.mxu0 0
  %2127 = vmatpush1.bf16.msra.mxu0 0
  %2128 = vmatprep.subr.bf16.mxu0 0
  %2129 = vmatpush1.bf16.msra.mxu0 0
  %2130 = vmatprep.subr.bf16.mxu0 0
  %2131 = vmatpush1.bf16.msra.mxu0 %v1600
  %2132 = vmatprep.subr.bf16.mxu0 0
  %2133 = vmatpush2.bf16.msra.mxu0 0
  %2134 = vmatprep.subr.bf16.mxu0 0
  %2135 = vmatpush2.bf16.msra.mxu0 0
  %2136 = vmatprep.subr.bf16.mxu0 0
  %2137 = vmatpush2.bf16.msra.mxu0 0
  %2138 = vmatprep.subr.bf16.mxu0 0
  %2139 = vmatpush2.bf16.msra.mxu0 0
  %2140 = vmatprep.subr.bf16.mxu0 0
  %2141 = vmatpush2.bf16.msra.mxu0 0
  %2142 = vmatprep.subr.bf16.mxu0 0
  %2143 = vmatpush2.bf16.msra.mxu0 0
  %2144 = vmatprep.subr.bf16.mxu0 0
  %2145 = vmatpush2.bf16.msra.mxu0 0
  %2146 = vmatprep.subr.bf16.mxu0 0
  %2147 = vmatpush2.bf16.msra.mxu0 0
  %2148 = vmatprep.mubr.bf16.mxu0 0
  %2149 = vmatmul.mubr.bf16.gmra.mxu0 %v2114
  %v2150 = vpop.f32.mrf.mxu0
  %v2151 = vadd.f32 %v2108, %v2150
  %v2152 = vpop.f32.mrf.mxu0
  %v2153 = vpop.f32.mrf.mxu0
  %v2154 = vpop.f32.mrf.mxu0
  %2155 = vdwg.mxu0
  %v2156 = vadd.f32 %v2151, %v1649
  %v2157 = vpack.c.bf16 %v2059, %v2059
  %2159 = vrot.lane.b32.xlu0 %v2157, 80
  %v2160 = vpop.permute.xlu0 %2159
  %v2162 = vsel %vm265, %v2160, 0
  %2164 = vmatprep.subr.bf16.mxu0 0
  %2165 = vmatpush1.bf16.msra.mxu0 0
  %2166 = vmatprep.subr.bf16.mxu0 0
  %2167 = vmatpush1.bf16.msra.mxu0 0
  %2168 = vmatprep.subr.bf16.mxu0 0
  %2169 = vmatpush1.bf16.msra.mxu0 0
  %2170 = vmatprep.subr.bf16.mxu0 0
  %2171 = vmatpush1.bf16.msra.mxu0 0
  %2172 = vmatprep.subr.bf16.mxu0 0
  %2173 = vmatpush1.bf16.msra.mxu0 0
  %2174 = vmatprep.subr.bf16.mxu0 0
  %2175 = vmatpush1.bf16.msra.mxu0 0
  %2176 = vmatprep.subr.bf16.mxu0 0
  %2177 = vmatpush1.bf16.msra.mxu0 0
  %2178 = vmatprep.subr.bf16.mxu0 0
  %2179 = vmatpush1.bf16.msra.mxu0 %v1656
  %2180 = vmatprep.subr.bf16.mxu0 0
  %2181 = vmatpush2.bf16.msra.mxu0 0
  %2182 = vmatprep.subr.bf16.mxu0 0
  %2183 = vmatpush2.bf16.msra.mxu0 0
  %2184 = vmatprep.subr.bf16.mxu0 0
  %2185 = vmatpush2.bf16.msra.mxu0 0
  %2186 = vmatprep.subr.bf16.mxu0 0
  %2187 = vmatpush2.bf16.msra.mxu0 0
  %2188 = vmatprep.subr.bf16.mxu0 0
  %2189 = vmatpush2.bf16.msra.mxu0 0
  %2190 = vmatprep.subr.bf16.mxu0 0
  %2191 = vmatpush2.bf16.msra.mxu0 0
  %2192 = vmatprep.subr.bf16.mxu0 0
  %2193 = vmatpush2.bf16.msra.mxu0 0
  %2194 = vmatprep.subr.bf16.mxu0 0
  %2195 = vmatpush2.bf16.msra.mxu0 0
  %2196 = vmatprep.mubr.bf16.mxu0 0
  %2197 = vmatmul.mubr.bf16.gmra.mxu0 %v2162
  %v2198 = vpop.f32.mrf.mxu0
  %v2199 = vadd.f32 0.0, %v2198
  %v2200 = vpop.f32.mrf.mxu0
  %v2201 = vpop.f32.mrf.mxu0
  %v2202 = vpop.f32.mrf.mxu0
  %2203 = vdwg.mxu0
  %v2204 = vadd.f32 %v2156, %v2199
  %v2205 = vxor.u32 %v2204, 2147483648
  %v2206 = vmul.f32 %v2205, 1.442695
  %v2207 = vpow.pop %v2206
  %v2208 = vadd.f32 %v2207, 1.0
  %v2209 = vrcp.pop %v2208
  %v2210 = vmul.f32 1.0, %v2209
  %v2211 = vtanh.pop %v2204
  %v2212 = vmul.f32 %v2210, %v2053
  %2214 = vrot.lane.b32.xlu0 %v2211, 96
  %v2215 = vpop.permute.xlu0 %2214
  %v2217 = vmul.f32 %v2210, %v2215
  %2219 = vrot.lane.b32.xlu0 %v2217, 16
  %v2220 = vpop.permute.xlu0 %2219
  %v2222 = vadd.f32 %v2212, %v2220
  %v2223 = vtanh.pop %v2222
  %2225 = vrot.lane.b32.xlu0 %v2223, 32
  %v2226 = vpop.permute.xlu0 %2225
  %v2228 = vmul.f32 %v2210, %v2226
  %2230 = vrot.lane.b32.xlu0 %v2228, 80
  %v2231 = vpop.permute.xlu0 %2230
  %s2233 = scalar_lea.vmem %s10, 24
  %2234 = vst.msk [vmem:[%s2233] sm:$0xff] %vm265, %v2231
  %v2235 = vld [vmem:[%s976] sm:$0xff]
  %v2236 = vpack.c.bf16 %v2235, %v2235
  %v2237 = vld [vmem:[%s896] sm:$0xff]
  %v2238 = vpack.c.bf16 %v2237, %v2237
  %v2240 = vsel %vm265, %v2238, 0
  %2242 = vmatprep.subr.bf16.mxu0 0
  %2243 = vmatpush1.bf16.msra.mxu0 0
  %2244 = vmatprep.subr.bf16.mxu0 0
  %2245 = vmatpush1.bf16.msra.mxu0 0
  %2246 = vmatprep.subr.bf16.mxu0 0
  %2247 = vmatpush1.bf16.msra.mxu0 0
  %2248 = vmatprep.subr.bf16.mxu0 0
  %2249 = vmatpush1.bf16.msra.mxu0 0
  %2250 = vmatprep.subr.bf16.mxu0 0
  %2251 = vmatpush1.bf16.msra.mxu0 0
  %2252 = vmatprep.subr.bf16.mxu0 0
  %2253 = vmatpush1.bf16.msra.mxu0 0
  %2254 = vmatprep.subr.bf16.mxu0 0
  %2255 = vmatpush1.bf16.msra.mxu0 0
  %2256 = vmatprep.subr.bf16.mxu0 0
  %2257 = vmatpush1.bf16.msra.mxu0 %v1551
  %2258 = vmatprep.subr.bf16.mxu0 0
  %2259 = vmatpush2.bf16.msra.mxu0 0
  %2260 = vmatprep.subr.bf16.mxu0 0
  %2261 = vmatpush2.bf16.msra.mxu0 0
  %2262 = vmatprep.subr.bf16.mxu0 0
  %2263 = vmatpush2.bf16.msra.mxu0 0
  %2264 = vmatprep.subr.bf16.mxu0 0
  %2265 = vmatpush2.bf16.msra.mxu0 0
  %2266 = vmatprep.subr.bf16.mxu0 0
  %2267 = vmatpush2.bf16.msra.mxu0 0
  %2268 = vmatprep.subr.bf16.mxu0 0
  %2269 = vmatpush2.bf16.msra.mxu0 0
  %2270 = vmatprep.subr.bf16.mxu0 0
  %2271 = vmatpush2.bf16.msra.mxu0 0
  %2272 = vmatprep.subr.bf16.mxu0 0
  %2273 = vmatpush2.bf16.msra.mxu0 0
  %2274 = vmatprep.mubr.bf16.mxu0 0
  %2275 = vmatmul.mubr.bf16.gmra.mxu0 %v2240
  %v2276 = vpop.f32.mrf.mxu0
  %v2277 = vadd.f32 0.0, %v2276
  %v2278 = vpop.f32.mrf.mxu0
  %v2279 = vpop.f32.mrf.mxu0
  %v2280 = vpop.f32.mrf.mxu0
  %2281 = vdwg.mxu0
  %v2283 = vsel %vm265, %v2236, 0
  %2285 = vmatprep.subr.bf16.mxu0 0
  %2286 = vmatpush1.bf16.msra.mxu0 0
  %2287 = vmatprep.subr.bf16.mxu0 0
  %2288 = vmatpush1.bf16.msra.mxu0 0
  %2289 = vmatprep.subr.bf16.mxu0 0
  %2290 = vmatpush1.bf16.msra.mxu0 0
  %2291 = vmatprep.subr.bf16.mxu0 0
  %2292 = vmatpush1.bf16.msra.mxu0 0
  %2293 = vmatprep.subr.bf16.mxu0 0
  %2294 = vmatpush1.bf16.msra.mxu0 0
  %2295 = vmatprep.subr.bf16.mxu0 0
  %2296 = vmatpush1.bf16.msra.mxu0 0
  %2297 = vmatprep.subr.bf16.mxu0 0
  %2298 = vmatpush1.bf16.msra.mxu0 0
  %2299 = vmatprep.subr.bf16.mxu0 0
  %2300 = vmatpush1.bf16.msra.mxu0 %v1600
  %2301 = vmatprep.subr.bf16.mxu0 0
  %2302 = vmatpush2.bf16.msra.mxu0 0
  %2303 = vmatprep.subr.bf16.mxu0 0
  %2304 = vmatpush2.bf16.msra.mxu0 0
  %2305 = vmatprep.subr.bf16.mxu0 0
  %2306 = vmatpush2.bf16.msra.mxu0 0
  %2307 = vmatprep.subr.bf16.mxu0 0
  %2308 = vmatpush2.bf16.msra.mxu0 0
  %2309 = vmatprep.subr.bf16.mxu0 0
  %2310 = vmatpush2.bf16.msra.mxu0 0
  %2311 = vmatprep.subr.bf16.mxu0 0
  %2312 = vmatpush2.bf16.msra.mxu0 0
  %2313 = vmatprep.subr.bf16.mxu0 0
  %2314 = vmatpush2.bf16.msra.mxu0 0
  %2315 = vmatprep.subr.bf16.mxu0 0
  %2316 = vmatpush2.bf16.msra.mxu0 0
  %2317 = vmatprep.mubr.bf16.mxu0 0
  %2318 = vmatmul.mubr.bf16.gmra.mxu0 %v2283
  %v2319 = vpop.f32.mrf.mxu0
  %v2320 = vadd.f32 %v2277, %v2319
  %v2321 = vpop.f32.mrf.mxu0
  %v2322 = vpop.f32.mrf.mxu0
  %v2323 = vpop.f32.mrf.mxu0
  %2324 = vdwg.mxu0
  %v2325 = vadd.f32 %v2320, %v1649
  %v2326 = vpack.c.bf16 %v2228, %v2228
  %2328 = vrot.lane.b32.xlu0 %v2326, 80
  %v2329 = vpop.permute.xlu0 %2328
  %v2331 = vsel %vm265, %v2329, 0
  %2333 = vmatprep.subr.bf16.mxu0 0
  %2334 = vmatpush1.bf16.msra.mxu0 0
  %2335 = vmatprep.subr.bf16.mxu0 0
  %2336 = vmatpush1.bf16.msra.mxu0 0
  %2337 = vmatprep.subr.bf16.mxu0 0
  %2338 = vmatpush1.bf16.msra.mxu0 0
  %2339 = vmatprep.subr.bf16.mxu0 0
  %2340 = vmatpush1.bf16.msra.mxu0 0
  %2341 = vmatprep.subr.bf16.mxu0 0
  %2342 = vmatpush1.bf16.msra.mxu0 0
  %2343 = vmatprep.subr.bf16.mxu0 0
  %2344 = vmatpush1.bf16.msra.mxu0 0
  %2345 = vmatprep.subr.bf16.mxu0 0
  %2346 = vmatpush1.bf16.msra.mxu0 0
  %2347 = vmatprep.subr.bf16.mxu0 0
  %2348 = vmatpush1.bf16.msra.mxu0 %v1656
  %2349 = vmatprep.subr.bf16.mxu0 0
  %2350 = vmatpush2.bf16.msra.mxu0 0
  %2351 = vmatprep.subr.bf16.mxu0 0
  %2352 = vmatpush2.bf16.msra.mxu0 0
  %2353 = vmatprep.subr.bf16.mxu0 0
  %2354 = vmatpush2.bf16.msra.mxu0 0
  %2355 = vmatprep.subr.bf16.mxu0 0
  %2356 = vmatpush2.bf16.msra.mxu0 0
  %2357 = vmatprep.subr.bf16.mxu0 0
  %2358 = vmatpush2.bf16.msra.mxu0 0
  %2359 = vmatprep.subr.bf16.mxu0 0
  %2360 = vmatpush2.bf16.msra.mxu0 0
  %2361 = vmatprep.subr.bf16.mxu0 0
  %2362 = vmatpush2.bf16.msra.mxu0 0
  %2363 = vmatprep.subr.bf16.mxu0 0
  %2364 = vmatpush2.bf16.msra.mxu0 0
  %2365 = vmatprep.mubr.bf16.mxu0 0
  %2366 = vmatmul.mubr.bf16.gmra.mxu0 %v2331
  %v2367 = vpop.f32.mrf.mxu0
  %v2368 = vadd.f32 0.0, %v2367
  %v2369 = vpop.f32.mrf.mxu0
  %v2370 = vpop.f32.mrf.mxu0
  %v2371 = vpop.f32.mrf.mxu0
  %2372 = vdwg.mxu0
  %v2373 = vadd.f32 %v2325, %v2368
  %v2374 = vxor.u32 %v2373, 2147483648
  %v2375 = vmul.f32 %v2374, 1.442695
  %v2376 = vpow.pop %v2375
  %v2377 = vadd.f32 %v2376, 1.0
  %v2378 = vrcp.pop %v2377
  %v2379 = vmul.f32 1.0, %v2378
  %v2380 = vtanh.pop %v2373
  %v2381 = vmul.f32 %v2379, %v2222
  %2383 = vrot.lane.b32.xlu0 %v2380, 96
  %v2384 = vpop.permute.xlu0 %2383
  %v2386 = vmul.f32 %v2379, %v2384
  %2388 = vrot.lane.b32.xlu0 %v2386, 16
  %v2389 = vpop.permute.xlu0 %2388
  %v2391 = vadd.f32 %v2381, %v2389
  %v2392 = vtanh.pop %v2391
  %2394 = vrot.lane.b32.xlu0 %v2392, 32
  %v2395 = vpop.permute.xlu0 %2394
  %v2397 = vmul.f32 %v2379, %v2395
  %2399 = vrot.lane.b32.xlu0 %v2397, 80
  %v2400 = vpop.permute.xlu0 %2399
  %s2402 = scalar_lea.vmem %s10, 32
  %2403 = vst.msk [vmem:[%s2402] sm:$0xff] %vm265, %v2400
  %v2404 = vld [vmem:[%s1136] sm:$0xff]
  %v2405 = vpack.c.bf16 %v2404, %v2404
  %v2406 = vld [vmem:[%s736] sm:$0xff]
  %v2407 = vpack.c.bf16 %v2406, %v2406
  %v2409 = vsel %vm265, %v2407, 0
  %2411 = vmatprep.subr.bf16.mxu0 0
  %2412 = vmatpush1.bf16.msra.mxu0 0
  %2413 = vmatprep.subr.bf16.mxu0 0
  %2414 = vmatpush1.bf16.msra.mxu0 0
  %2415 = vmatprep.subr.bf16.mxu0 0
  %2416 = vmatpush1.bf16.msra.mxu0 0
  %2417 = vmatprep.subr.bf16.mxu0 0
  %2418 = vmatpush1.bf16.msra.mxu0 0
  %2419 = vmatprep.subr.bf16.mxu0 0
  %2420 = vmatpush1.bf16.msra.mxu0 0
  %2421 = vmatprep.subr.bf16.mxu0 0
  %2422 = vmatpush1.bf16.msra.mxu0 0
  %2423 = vmatprep.subr.bf16.mxu0 0
  %2424 = vmatpush1.bf16.msra.mxu0 0
  %2425 = vmatprep.subr.bf16.mxu0 0
  %2426 = vmatpush1.bf16.msra.mxu0 %v1551
  %2427 = vmatprep.subr.bf16.mxu0 0
  %2428 = vmatpush2.bf16.msra.mxu0 0
  %2429 = vmatprep.subr.bf16.mxu0 0
  %2430 = vmatpush2.bf16.msra.mxu0 0
  %2431 = vmatprep.subr.bf16.mxu0 0
  %2432 = vmatpush2.bf16.msra.mxu0 0
  %2433 = vmatprep.subr.bf16.mxu0 0
  %2434 = vmatpush2.bf16.msra.mxu0 0
  %2435 = vmatprep.subr.bf16.mxu0 0
  %2436 = vmatpush2.bf16.msra.mxu0 0
  %2437 = vmatprep.subr.bf16.mxu0 0
  %2438 = vmatpush2.bf16.msra.mxu0 0
  %2439 = vmatprep.subr.bf16.mxu0 0
  %2440 = vmatpush2.bf16.msra.mxu0 0
  %2441 = vmatprep.subr.bf16.mxu0 0
  %2442 = vmatpush2.bf16.msra.mxu0 0
  %2443 = vmatprep.mubr.bf16.mxu0 0
  %2444 = vmatmul.mubr.bf16.gmra.mxu0 %v2409
  %v2445 = vpop.f32.mrf.mxu0
  %v2446 = vadd.f32 0.0, %v2445
  %v2447 = vpop.f32.mrf.mxu0
  %v2448 = vpop.f32.mrf.mxu0
  %v2449 = vpop.f32.mrf.mxu0
  %2450 = vdwg.mxu0
  %v2452 = vsel %vm265, %v2405, 0
  %2454 = vmatprep.subr.bf16.mxu0 0
  %2455 = vmatpush1.bf16.msra.mxu0 0
  %2456 = vmatprep.subr.bf16.mxu0 0
  %2457 = vmatpush1.bf16.msra.mxu0 0
  %2458 = vmatprep.subr.bf16.mxu0 0
  %2459 = vmatpush1.bf16.msra.mxu0 0
  %2460 = vmatprep.subr.bf16.mxu0 0
  %2461 = vmatpush1.bf16.msra.mxu0 0
  %2462 = vmatprep.subr.bf16.mxu0 0
  %2463 = vmatpush1.bf16.msra.mxu0 0
  %2464 = vmatprep.subr.bf16.mxu0 0
  %2465 = vmatpush1.bf16.msra.mxu0 0
  %2466 = vmatprep.subr.bf16.mxu0 0
  %2467 = vmatpush1.bf16.msra.mxu0 0
  %2468 = vmatprep.subr.bf16.mxu0 0
  %2469 = vmatpush1.bf16.msra.mxu0 %v1600
  %2470 = vmatprep.subr.bf16.mxu0 0
  %2471 = vmatpush2.bf16.msra.mxu0 0
  %2472 = vmatprep.subr.bf16.mxu0 0
  %2473 = vmatpush2.bf16.msra.mxu0 0
  %2474 = vmatprep.subr.bf16.mxu0 0
  %2475 = vmatpush2.bf16.msra.mxu0 0
  %2476 = vmatprep.subr.bf16.mxu0 0
  %2477 = vmatpush2.bf16.msra.mxu0 0
  %2478 = vmatprep.subr.bf16.mxu0 0
  %2479 = vmatpush2.bf16.msra.mxu0 0
  %2480 = vmatprep.subr.bf16.mxu0 0
  %2481 = vmatpush2.bf16.msra.mxu0 0
  %2482 = vmatprep.subr.bf16.mxu0 0
  %2483 = vmatpush2.bf16.msra.mxu0 0
  %2484 = vmatprep.subr.bf16.mxu0 0
  %2485 = vmatpush2.bf16.msra.mxu0 0
  %2486 = vmatprep.mubr.bf16.mxu0 0
  %2487 = vmatmul.mubr.bf16.gmra.mxu0 %v2452
  %v2488 = vpop.f32.mrf.mxu0
  %v2489 = vadd.f32 %v2446, %v2488
  %v2490 = vpop.f32.mrf.mxu0
  %v2491 = vpop.f32.mrf.mxu0
  %v2492 = vpop.f32.mrf.mxu0
  %2493 = vdwg.mxu0
  %v2494 = vadd.f32 %v2489, %v1649
  %v2495 = vpack.c.bf16 %v2397, %v2397
  %2497 = vrot.lane.b32.xlu0 %v2495, 80
  %v2498 = vpop.permute.xlu0 %2497
  %v2500 = vsel %vm265, %v2498, 0
  %2502 = vmatprep.subr.bf16.mxu0 0
  %2503 = vmatpush1.bf16.msra.mxu0 0
  %2504 = vmatprep.subr.bf16.mxu0 0
  %2505 = vmatpush1.bf16.msra.mxu0 0
  %2506 = vmatprep.subr.bf16.mxu0 0
  %2507 = vmatpush1.bf16.msra.mxu0 0
  %2508 = vmatprep.subr.bf16.mxu0 0
  %2509 = vmatpush1.bf16.msra.mxu0 0
  %2510 = vmatprep.subr.bf16.mxu0 0
  %2511 = vmatpush1.bf16.msra.mxu0 0
  %2512 = vmatprep.subr.bf16.mxu0 0
  %2513 = vmatpush1.bf16.msra.mxu0 0
  %2514 = vmatprep.subr.bf16.mxu0 0
  %2515 = vmatpush1.bf16.msra.mxu0 0
  %2516 = vmatprep.subr.bf16.mxu0 0
  %2517 = vmatpush1.bf16.msra.mxu0 %v1656
  %2518 = vmatprep.subr.bf16.mxu0 0
  %2519 = vmatpush2.bf16.msra.mxu0 0
  %2520 = vmatprep.subr.bf16.mxu0 0
  %2521 = vmatpush2.bf16.msra.mxu0 0
  %2522 = vmatprep.subr.bf16.mxu0 0
  %2523 = vmatpush2.bf16.msra.mxu0 0
  %2524 = vmatprep.subr.bf16.mxu0 0
  %2525 = vmatpush2.bf16.msra.mxu0 0
  %2526 = vmatprep.subr.bf16.mxu0 0
  %2527 = vmatpush2.bf16.msra.mxu0 0
  %2528 = vmatprep.subr.bf16.mxu0 0
  %2529 = vmatpush2.bf16.msra.mxu0 0
  %2530 = vmatprep.subr.bf16.mxu0 0
  %2531 = vmatpush2.bf16.msra.mxu0 0
  %2532 = vmatprep.subr.bf16.mxu0 0
  %2533 = vmatpush2.bf16.msra.mxu0 0
  %2534 = vmatprep.mubr.bf16.mxu0 0
  %2535 = vmatmul.mubr.bf16.gmra.mxu0 %v2500
  %v2536 = vpop.f32.mrf.mxu0
  %v2537 = vadd.f32 0.0, %v2536
  %v2538 = vpop.f32.mrf.mxu0
  %v2539 = vpop.f32.mrf.mxu0
  %v2540 = vpop.f32.mrf.mxu0
  %2541 = vdwg.mxu0
  %v2542 = vadd.f32 %v2494, %v2537
  %v2543 = vxor.u32 %v2542, 2147483648
  %v2544 = vmul.f32 %v2543, 1.442695
  %v2545 = vpow.pop %v2544
  %v2546 = vadd.f32 %v2545, 1.0
  %v2547 = vrcp.pop %v2546
  %v2548 = vmul.f32 1.0, %v2547
  %v2549 = vtanh.pop %v2542
  %v2550 = vmul.f32 %v2548, %v2391
  %2552 = vrot.lane.b32.xlu0 %v2549, 96
  %v2553 = vpop.permute.xlu0 %2552
  %v2555 = vmul.f32 %v2548, %v2553
  %2557 = vrot.lane.b32.xlu0 %v2555, 16
  %v2558 = vpop.permute.xlu0 %2557
  %v2560 = vadd.f32 %v2550, %v2558
  %v2561 = vtanh.pop %v2560
  %2563 = vrot.lane.b32.xlu0 %v2561, 32
  %v2564 = vpop.permute.xlu0 %2563
  %v2566 = vmul.f32 %v2548, %v2564
  %2568 = vrot.lane.b32.xlu0 %v2566, 80
  %v2569 = vpop.permute.xlu0 %2568
  %s2571 = scalar_lea.vmem %s10, 40
  %2572 = vst.msk [vmem:[%s2571] sm:$0xff] %vm265, %v2569
  %v2573 = vld [vmem:[%s1296] sm:$0xff]
  %v2574 = vpack.c.bf16 %v2573, %v2573
  %v2575 = vld [vmem:[%s576] sm:$0xff]
  %v2576 = vpack.c.bf16 %v2575, %v2575
  %v2578 = vsel %vm265, %v2576, 0
  %2580 = vmatprep.subr.bf16.mxu0 0
  %2581 = vmatpush1.bf16.msra.mxu0 0
  %2582 = vmatprep.subr.bf16.mxu0 0
  %2583 = vmatpush1.bf16.msra.mxu0 0
  %2584 = vmatprep.subr.bf16.mxu0 0
  %2585 = vmatpush1.bf16.msra.mxu0 0
  %2586 = vmatprep.subr.bf16.mxu0 0
  %2587 = vmatpush1.bf16.msra.mxu0 0
  %2588 = vmatprep.subr.bf16.mxu0 0
  %2589 = vmatpush1.bf16.msra.mxu0 0
  %2590 = vmatprep.subr.bf16.mxu0 0
  %2591 = vmatpush1.bf16.msra.mxu0 0
  %2592 = vmatprep.subr.bf16.mxu0 0
  %2593 = vmatpush1.bf16.msra.mxu0 0
  %2594 = vmatprep.subr.bf16.mxu0 0
  %2595 = vmatpush1.bf16.msra.mxu0 %v1551
  %2596 = vmatprep.subr.bf16.mxu0 0
  %2597 = vmatpush2.bf16.msra.mxu0 0
  %2598 = vmatprep.subr.bf16.mxu0 0
  %2599 = vmatpush2.bf16.msra.mxu0 0
  %2600 = vmatprep.subr.bf16.mxu0 0
  %2601 = vmatpush2.bf16.msra.mxu0 0
  %2602 = vmatprep.subr.bf16.mxu0 0
  %2603 = vmatpush2.bf16.msra.mxu0 0
  %2604 = vmatprep.subr.bf16.mxu0 0
  %2605 = vmatpush2.bf16.msra.mxu0 0
  %2606 = vmatprep.subr.bf16.mxu0 0
  %2607 = vmatpush2.bf16.msra.mxu0 0
  %2608 = vmatprep.subr.bf16.mxu0 0
  %2609 = vmatpush2.bf16.msra.mxu0 0
  %2610 = vmatprep.subr.bf16.mxu0 0
  %2611 = vmatpush2.bf16.msra.mxu0 0
  %2612 = vmatprep.mubr.bf16.mxu0 0
  %2613 = vmatmul.mubr.bf16.gmra.mxu0 %v2578
  %v2614 = vpop.f32.mrf.mxu0
  %v2615 = vadd.f32 0.0, %v2614
  %v2616 = vpop.f32.mrf.mxu0
  %v2617 = vpop.f32.mrf.mxu0
  %v2618 = vpop.f32.mrf.mxu0
  %2619 = vdwg.mxu0
  %v2621 = vsel %vm265, %v2574, 0
  %2623 = vmatprep.subr.bf16.mxu0 0
  %2624 = vmatpush1.bf16.msra.mxu0 0
  %2625 = vmatprep.subr.bf16.mxu0 0
  %2626 = vmatpush1.bf16.msra.mxu0 0
  %2627 = vmatprep.subr.bf16.mxu0 0
  %2628 = vmatpush1.bf16.msra.mxu0 0
  %2629 = vmatprep.subr.bf16.mxu0 0
  %2630 = vmatpush1.bf16.msra.mxu0 0
  %2631 = vmatprep.subr.bf16.mxu0 0
  %2632 = vmatpush1.bf16.msra.mxu0 0
  %2633 = vmatprep.subr.bf16.mxu0 0
  %2634 = vmatpush1.bf16.msra.mxu0 0
  %2635 = vmatprep.subr.bf16.mxu0 0
  %2636 = vmatpush1.bf16.msra.mxu0 0
  %2637 = vmatprep.subr.bf16.mxu0 0
  %2638 = vmatpush1.bf16.msra.mxu0 %v1600
  %2639 = vmatprep.subr.bf16.mxu0 0
  %2640 = vmatpush2.bf16.msra.mxu0 0
  %2641 = vmatprep.subr.bf16.mxu0 0
  %2642 = vmatpush2.bf16.msra.mxu0 0
  %2643 = vmatprep.subr.bf16.mxu0 0
  %2644 = vmatpush2.bf16.msra.mxu0 0
  %2645 = vmatprep.subr.bf16.mxu0 0
  %2646 = vmatpush2.bf16.msra.mxu0 0
  %2647 = vmatprep.subr.bf16.mxu0 0
  %2648 = vmatpush2.bf16.msra.mxu0 0
  %2649 = vmatprep.subr.bf16.mxu0 0
  %2650 = vmatpush2.bf16.msra.mxu0 0
  %2651 = vmatprep.subr.bf16.mxu0 0
  %2652 = vmatpush2.bf16.msra.mxu0 0
  %2653 = vmatprep.subr.bf16.mxu0 0
  %2654 = vmatpush2.bf16.msra.mxu0 0
  %2655 = vmatprep.mubr.bf16.mxu0 0
  %2656 = vmatmul.mubr.bf16.gmra.mxu0 %v2621
  %v2657 = vpop.f32.mrf.mxu0
  %v2658 = vadd.f32 %v2615, %v2657
  %v2659 = vpop.f32.mrf.mxu0
  %v2660 = vpop.f32.mrf.mxu0
  %v2661 = vpop.f32.mrf.mxu0
  %2662 = vdwg.mxu0
  %v2663 = vadd.f32 %v2658, %v1649
  %v2664 = vpack.c.bf16 %v2566, %v2566
  %2666 = vrot.lane.b32.xlu0 %v2664, 80
  %v2667 = vpop.permute.xlu0 %2666
  %v2669 = vsel %vm265, %v2667, 0
  %2671 = vmatprep.subr.bf16.mxu0 0
  %2672 = vmatpush1.bf16.msra.mxu0 0
  %2673 = vmatprep.subr.bf16.mxu0 0
  %2674 = vmatpush1.bf16.msra.mxu0 0
  %2675 = vmatprep.subr.bf16.mxu0 0
  %2676 = vmatpush1.bf16.msra.mxu0 0
  %2677 = vmatprep.subr.bf16.mxu0 0
  %2678 = vmatpush1.bf16.msra.mxu0 0
  %2679 = vmatprep.subr.bf16.mxu0 0
  %2680 = vmatpush1.bf16.msra.mxu0 0
  %2681 = vmatprep.subr.bf16.mxu0 0
  %2682 = vmatpush1.bf16.msra.mxu0 0
  %2683 = vmatprep.subr.bf16.mxu0 0
  %2684 = vmatpush1.bf16.msra.mxu0 0
  %2685 = vmatprep.subr.bf16.mxu0 0
  %2686 = vmatpush1.bf16.msra.mxu0 %v1656
  %2687 = vmatprep.subr.bf16.mxu0 0
  %2688 = vmatpush2.bf16.msra.mxu0 0
  %2689 = vmatprep.subr.bf16.mxu0 0
  %2690 = vmatpush2.bf16.msra.mxu0 0
  %2691 = vmatprep.subr.bf16.mxu0 0
  %2692 = vmatpush2.bf16.msra.mxu0 0
  %2693 = vmatprep.subr.bf16.mxu0 0
  %2694 = vmatpush2.bf16.msra.mxu0 0
  %2695 = vmatprep.subr.bf16.mxu0 0
  %2696 = vmatpush2.bf16.msra.mxu0 0
  %2697 = vmatprep.subr.bf16.mxu0 0
  %2698 = vmatpush2.bf16.msra.mxu0 0
  %2699 = vmatprep.subr.bf16.mxu0 0
  %2700 = vmatpush2.bf16.msra.mxu0 0
  %2701 = vmatprep.subr.bf16.mxu0 0
  %2702 = vmatpush2.bf16.msra.mxu0 0
  %2703 = vmatprep.mubr.bf16.mxu0 0
  %2704 = vmatmul.mubr.bf16.gmra.mxu0 %v2669
  %v2705 = vpop.f32.mrf.mxu0
  %v2706 = vadd.f32 0.0, %v2705
  %v2707 = vpop.f32.mrf.mxu0
  %v2708 = vpop.f32.mrf.mxu0
  %v2709 = vpop.f32.mrf.mxu0
  %2710 = vdwg.mxu0
  %v2711 = vadd.f32 %v2663, %v2706
  %v2712 = vxor.u32 %v2711, 2147483648
  %v2713 = vmul.f32 %v2712, 1.442695
  %v2714 = vpow.pop %v2713
  %v2715 = vadd.f32 %v2714, 1.0
  %v2716 = vrcp.pop %v2715
  %v2717 = vmul.f32 1.0, %v2716
  %v2718 = vtanh.pop %v2711
  %v2719 = vmul.f32 %v2717, %v2560
  %2721 = vrot.lane.b32.xlu0 %v2718, 96
  %v2722 = vpop.permute.xlu0 %2721
  %v2724 = vmul.f32 %v2717, %v2722
  %2726 = vrot.lane.b32.xlu0 %v2724, 16
  %v2727 = vpop.permute.xlu0 %2726
  %v2729 = vadd.f32 %v2719, %v2727
  %v2730 = vtanh.pop %v2729
  %2732 = vrot.lane.b32.xlu0 %v2730, 32
  %v2733 = vpop.permute.xlu0 %2732
  %v2735 = vmul.f32 %v2717, %v2733
  %2737 = vrot.lane.b32.xlu0 %v2735, 80
  %v2738 = vpop.permute.xlu0 %2737
  %s2740 = scalar_lea.vmem %s10, 48
  %2741 = vst.msk [vmem:[%s2740] sm:$0xff] %vm265, %v2738
  %v2742 = vld [vmem:[%s1456] sm:$0xff]
  %v2743 = vpack.c.bf16 %v2742, %v2742
  %v2744 = vld [vmem:[%s416] sm:$0xff]
  %v2745 = vpack.c.bf16 %v2744, %v2744
  %v2747 = vsel %vm265, %v2745, 0
  %2749 = vmatprep.subr.bf16.mxu0 0
  %2750 = vmatpush1.bf16.msra.mxu0 0
  %2751 = vmatprep.subr.bf16.mxu0 0
  %2752 = vmatpush1.bf16.msra.mxu0 0
  %2753 = vmatprep.subr.bf16.mxu0 0
  %2754 = vmatpush1.bf16.msra.mxu0 0
  %2755 = vmatprep.subr.bf16.mxu0 0
  %2756 = vmatpush1.bf16.msra.mxu0 0
  %2757 = vmatprep.subr.bf16.mxu0 0
  %2758 = vmatpush1.bf16.msra.mxu0 0
  %2759 = vmatprep.subr.bf16.mxu0 0
  %2760 = vmatpush1.bf16.msra.mxu0 0
  %2761 = vmatprep.subr.bf16.mxu0 0
  %2762 = vmatpush1.bf16.msra.mxu0 0
  %2763 = vmatprep.subr.bf16.mxu0 0
  %2764 = vmatpush1.bf16.msra.mxu0 %v1551
  %2765 = vmatprep.subr.bf16.mxu0 0
  %2766 = vmatpush2.bf16.msra.mxu0 0
  %2767 = vmatprep.subr.bf16.mxu0 0
  %2768 = vmatpush2.bf16.msra.mxu0 0
  %2769 = vmatprep.subr.bf16.mxu0 0
  %2770 = vmatpush2.bf16.msra.mxu0 0
  %2771 = vmatprep.subr.bf16.mxu0 0
  %2772 = vmatpush2.bf16.msra.mxu0 0
  %2773 = vmatprep.subr.bf16.mxu0 0
  %2774 = vmatpush2.bf16.msra.mxu0 0
  %2775 = vmatprep.subr.bf16.mxu0 0
  %2776 = vmatpush2.bf16.msra.mxu0 0
  %2777 = vmatprep.subr.bf16.mxu0 0
  %2778 = vmatpush2.bf16.msra.mxu0 0
  %2779 = vmatprep.subr.bf16.mxu0 0
  %2780 = vmatpush2.bf16.msra.mxu0 0
  %2781 = vmatprep.mubr.bf16.mxu0 0
  %2782 = vmatmul.mubr.bf16.gmra.mxu0 %v2747
  %v2783 = vpop.f32.mrf.mxu0
  %v2784 = vadd.f32 0.0, %v2783
  %v2785 = vpop.f32.mrf.mxu0
  %v2786 = vpop.f32.mrf.mxu0
  %v2787 = vpop.f32.mrf.mxu0
  %2788 = vdwg.mxu0
  %v2790 = vsel %vm265, %v2743, 0
  %2792 = vmatprep.subr.bf16.mxu0 0
  %2793 = vmatpush1.bf16.msra.mxu0 0
  %2794 = vmatprep.subr.bf16.mxu0 0
  %2795 = vmatpush1.bf16.msra.mxu0 0
  %2796 = vmatprep.subr.bf16.mxu0 0
  %2797 = vmatpush1.bf16.msra.mxu0 0
  %2798 = vmatprep.subr.bf16.mxu0 0
  %2799 = vmatpush1.bf16.msra.mxu0 0
  %2800 = vmatprep.subr.bf16.mxu0 0
  %2801 = vmatpush1.bf16.msra.mxu0 0
  %2802 = vmatprep.subr.bf16.mxu0 0
  %2803 = vmatpush1.bf16.msra.mxu0 0
  %2804 = vmatprep.subr.bf16.mxu0 0
  %2805 = vmatpush1.bf16.msra.mxu0 0
  %2806 = vmatprep.subr.bf16.mxu0 0
  %2807 = vmatpush1.bf16.msra.mxu0 %v1600
  %2808 = vmatprep.subr.bf16.mxu0 0
  %2809 = vmatpush2.bf16.msra.mxu0 0
  %2810 = vmatprep.subr.bf16.mxu0 0
  %2811 = vmatpush2.bf16.msra.mxu0 0
  %2812 = vmatprep.subr.bf16.mxu0 0
  %2813 = vmatpush2.bf16.msra.mxu0 0
  %2814 = vmatprep.subr.bf16.mxu0 0
  %2815 = vmatpush2.bf16.msra.mxu0 0
  %2816 = vmatprep.subr.bf16.mxu0 0
  %2817 = vmatpush2.bf16.msra.mxu0 0
  %2818 = vmatprep.subr.bf16.mxu0 0
  %2819 = vmatpush2.bf16.msra.mxu0 0
  %2820 = vmatprep.subr.bf16.mxu0 0
  %2821 = vmatpush2.bf16.msra.mxu0 0
  %2822 = vmatprep.subr.bf16.mxu0 0
  %2823 = vmatpush2.bf16.msra.mxu0 0
  %2824 = vmatprep.mubr.bf16.mxu0 0
  %2825 = vmatmul.mubr.bf16.gmra.mxu0 %v2790
  %v2826 = vpop.f32.mrf.mxu0
  %v2827 = vadd.f32 %v2784, %v2826
  %v2828 = vpop.f32.mrf.mxu0
  %v2829 = vpop.f32.mrf.mxu0
  %v2830 = vpop.f32.mrf.mxu0
  %2831 = vdwg.mxu0
  %v2832 = vadd.f32 %v2827, %v1649
  %v2833 = vpack.c.bf16 %v2735, %v2735
  %2835 = vrot.lane.b32.xlu0 %v2833, 80
  %v2836 = vpop.permute.xlu0 %2835
  %v2838 = vsel %vm265, %v2836, 0
  %2840 = vmatprep.subr.bf16.mxu0 0
  %2841 = vmatpush1.bf16.msra.mxu0 0
  %2842 = vmatprep.subr.bf16.mxu0 0
  %2843 = vmatpush1.bf16.msra.mxu0 0
  %2844 = vmatprep.subr.bf16.mxu0 0
  %2845 = vmatpush1.bf16.msra.mxu0 0
  %2846 = vmatprep.subr.bf16.mxu0 0
  %2847 = vmatpush1.bf16.msra.mxu0 0
  %2848 = vmatprep.subr.bf16.mxu0 0
  %2849 = vmatpush1.bf16.msra.mxu0 0
  %2850 = vmatprep.subr.bf16.mxu0 0
  %2851 = vmatpush1.bf16.msra.mxu0 0
  %2852 = vmatprep.subr.bf16.mxu0 0
  %2853 = vmatpush1.bf16.msra.mxu0 0
  %2854 = vmatprep.subr.bf16.mxu0 0
  %2855 = vmatpush1.bf16.msra.mxu0 %v1656
  %2856 = vmatprep.subr.bf16.mxu0 0
  %2857 = vmatpush2.bf16.msra.mxu0 0
  %2858 = vmatprep.subr.bf16.mxu0 0
  %2859 = vmatpush2.bf16.msra.mxu0 0
  %2860 = vmatprep.subr.bf16.mxu0 0
  %2861 = vmatpush2.bf16.msra.mxu0 0
  %2862 = vmatprep.subr.bf16.mxu0 0
  %2863 = vmatpush2.bf16.msra.mxu0 0
  %2864 = vmatprep.subr.bf16.mxu0 0
  %2865 = vmatpush2.bf16.msra.mxu0 0
  %2866 = vmatprep.subr.bf16.mxu0 0
  %2867 = vmatpush2.bf16.msra.mxu0 0
  %2868 = vmatprep.subr.bf16.mxu0 0
  %2869 = vmatpush2.bf16.msra.mxu0 0
  %2870 = vmatprep.subr.bf16.mxu0 0
  %2871 = vmatpush2.bf16.msra.mxu0 0
  %2872 = vmatprep.mubr.bf16.mxu0 0
  %2873 = vmatmul.mubr.bf16.gmra.mxu0 %v2838
  %v2874 = vpop.f32.mrf.mxu0
  %v2875 = vadd.f32 0.0, %v2874
  %v2876 = vpop.f32.mrf.mxu0
  %v2877 = vpop.f32.mrf.mxu0
  %v2878 = vpop.f32.mrf.mxu0
  %2879 = vdwg.mxu0
  %v2880 = vadd.f32 %v2832, %v2875
  %v2881 = vxor.u32 %v2880, 2147483648
  %v2882 = vmul.f32 %v2881, 1.442695
  %v2883 = vpow.pop %v2882
  %v2884 = vadd.f32 %v2883, 1.0
  %v2885 = vrcp.pop %v2884
  %v2886 = vmul.f32 1.0, %v2885
  %v2887 = vtanh.pop %v2880
  %v2888 = vmul.f32 %v2886, %v2729
  %2890 = vrot.lane.b32.xlu0 %v2887, 96
  %v2891 = vpop.permute.xlu0 %2890
  %v2893 = vmul.f32 %v2886, %v2891
  %2895 = vrot.lane.b32.xlu0 %v2893, 16
  %v2896 = vpop.permute.xlu0 %2895
  %v2898 = vadd.f32 %v2888, %v2896
  %v2899 = vtanh.pop %v2898
  %2901 = vrot.lane.b32.xlu0 %v2899, 32
  %v2902 = vpop.permute.xlu0 %2901
  %v2904 = vmul.f32 %v2886, %v2902
  %2906 = vrot.lane.b32.xlu0 %v2904, 80
  %v2907 = vpop.permute.xlu0 %2906
  %s2909 = scalar_lea.vmem %s10, 56
  %2910 = vst.msk [vmem:[%s2909] sm:$0xff] %vm265, %v2907
  // Predicated region
  $region42: #{_lambda_.3} parent=0 // pred_check
    _
  $region43: #{_lambda_.3} parent=0 // pred_check_branch
    %2912 = sbr.rel (0) target = $region45
  $region44: #{_lambda_.3} parent=0 // pred_region
    _
  $region45: #{_lambda_.3} parent=0 // pred_fallthru
    _
  // Predicated region
  $region46: #{_lambda_.3} parent=0 // pred_check
    _
  $region47: #{_lambda_.3} parent=0 // pred_check_branch
    %2914 = sbr.rel (0) target = $region49
  $region48: #{_lambda_.3} parent=0 // pred_region
    _
  $region49: #{_lambda_.3} parent=0 // pred_fallthru
    _

</llo_original>
